<compile_context>
chip_gen: v6e
topology: v6e:2x2x1
jax: 0.10.0
libtpu: 0.0.40
codegen_flags: <defaults>
</compile_context>

<pallas_src>
import functools

import jax
import jax.numpy as jnp
from jax.experimental import pallas as pl
from jax.experimental.pallas import tpu as pltpu


# ----------------------------------------------------------------------------
# In-kernel helpers
# ----------------------------------------------------------------------------
def _layernorm(x, gamma, beta, eps=1e-6):
    # x: (rows, D) f32 ; gamma/beta: (1, D) f32
    mu = jnp.mean(x, axis=-1, keepdims=True)
    xc = x - mu
    var = jnp.mean(xc * xc, axis=-1, keepdims=True)
    return xc * jax.lax.rsqrt(var + eps) * gamma + beta


# ----------------------------------------------------------------------------
# Kernel 1: patch embedding + [cls] token + positional embedding (fused)
# ----------------------------------------------------------------------------
def _patch_embed_kernel(p_ref, w_ref, b_ref, cls_ref, pos_ref, o_ref):
    # p: (1, P, PD) bf16, w: (PD, D) bf16, b/cls: (1, D) f32, pos: (S, D) f32
    P = p_ref.shape[1]
    emb = jnp.dot(p_ref[0], w_ref[...],
                  preferred_element_type=jnp.float32) + b_ref[...]        # (P, D)
    o_ref[0, pl.ds(0, 1), :] = (cls_ref[...] +
                                pos_ref[pl.ds(0, 1), :]).astype(o_ref.dtype)
    o_ref[0, pl.ds(1, P), :] = (emb +
                                pos_ref[pl.ds(1, P), :]).astype(o_ref.dtype)


def patch_embed(patches, params):
    N, P, PD = patches.shape
    S, D = params["pos"].shape
    return pl.pallas_call(
        _patch_embed_kernel,
        out_shape=jax.ShapeDtypeStruct((N, S, D), jnp.bfloat16),
        grid=(N,),
        in_specs=[
            pl.BlockSpec((1, P, PD), lambda n: (n, 0, 0)),
            pl.BlockSpec((PD, D), lambda n: (0, 0)),
            pl.BlockSpec((1, D), lambda n: (0, 0)),
            pl.BlockSpec((1, D), lambda n: (0, 0)),
            pl.BlockSpec((S, D), lambda n: (0, 0)),
        ],
        out_specs=pl.BlockSpec((1, S, D), lambda n: (n, 0, 0)),
        compiler_params=pltpu.CompilerParams(dimension_semantics=("parallel",)),
    )(patches, params["patch_w"], params["patch_b"], params["cls"], params["pos"])


# ----------------------------------------------------------------------------
# Kernel 2: one full transformer encoder block (fused, residuals included)
# ----------------------------------------------------------------------------
def _encoder_block_kernel(x_ref, ln1g_ref, ln1b_ref, wqkv_ref, bqkv_ref,
                          wo_ref, bo_ref, ln2g_ref, ln2b_ref,
                          w1_ref, b1_ref, w2_ref, b2_ref, o_ref, *, num_heads):
    x = x_ref[0].astype(jnp.float32)                                      # (S, D)
    S, D = x.shape
    hd = D // num_heads
    scale = 1.0 / float(hd) ** 0.5

    # ---- attention sub-block ----
    h = _layernorm(x, ln1g_ref[...], ln1b_ref[...])
    qkv = jnp.dot(h.astype(jnp.bfloat16), wqkv_ref[...],
                  preferred_element_type=jnp.float32) + bqkv_ref[...]     # (S, 3D)

    ctx_heads = []
    for i in range(num_heads):
        q = qkv[:, i * hd:(i + 1) * hd]                                   # (S, hd)
        k = qkv[:, D + i * hd:D + (i + 1) * hd]
        v = qkv[:, 2 * D + i * hd:2 * D + (i + 1) * hd]
        s = jax.lax.dot_general(q, k, (((1,), (1,)), ((), ())),
                                preferred_element_type=jnp.float32) * scale
        s = s - jnp.max(s, axis=-1, keepdims=True)
        p = jnp.exp(s)
        p = p * pl.reciprocal(jnp.sum(p, axis=-1, keepdims=True), approx=True)
        ctx_heads.append(jnp.dot(p, v, preferred_element_type=jnp.float32))
    ctx = jnp.concatenate(ctx_heads, axis=-1)                             # (S, D)

    attn_out = jnp.dot(ctx.astype(jnp.bfloat16), wo_ref[...],
                       preferred_element_type=jnp.float32) + bo_ref[...]
    x = x + attn_out                                                      # residual

    # ---- MLP sub-block ----
    h2 = _layernorm(x, ln2g_ref[...], ln2b_ref[...])
    m = jnp.dot(h2.astype(jnp.bfloat16), w1_ref[...],
                preferred_element_type=jnp.float32) + b1_ref[...]
    m = jax.nn.gelu(m, approximate=True)
    m = jnp.dot(m.astype(jnp.bfloat16), w2_ref[...],
                preferred_element_type=jnp.float32) + b2_ref[...]
    x = x + m                                                             # residual

    o_ref[0] = x.astype(o_ref.dtype)


def encoder_block(tokens, p, *, num_heads):
    N, S, D = tokens.shape
    MLP = p["w1"].shape[1]
    return pl.pallas_call(
        functools.partial(_encoder_block_kernel, num_heads=num_heads),
        out_shape=jax.ShapeDtypeStruct((N, S, D), tokens.dtype),
        grid=(N,),
        in_specs=[
            pl.BlockSpec((1, S, D), lambda n: (n, 0, 0)),
            pl.BlockSpec((1, D), lambda n: (0, 0)),
            pl.BlockSpec((1, D), lambda n: (0, 0)),
            pl.BlockSpec((D, 3 * D), lambda n: (0, 0)),
            pl.BlockSpec((1, 3 * D), lambda n: (0, 0)),
            pl.BlockSpec((D, D), lambda n: (0, 0)),
            pl.BlockSpec((1, D), lambda n: (0, 0)),
            pl.BlockSpec((1, D), lambda n: (0, 0)),
            pl.BlockSpec((1, D), lambda n: (0, 0)),
            pl.BlockSpec((D, MLP), lambda n: (0, 0)),
            pl.BlockSpec((1, MLP), lambda n: (0, 0)),
            pl.BlockSpec((MLP, D), lambda n: (0, 0)),
            pl.BlockSpec((1, D), lambda n: (0, 0)),
        ],
        out_specs=pl.BlockSpec((1, S, D), lambda n: (n, 0, 0)),
        compiler_params=pltpu.CompilerParams(dimension_semantics=("parallel",)),
    )(tokens, p["ln1_g"], p["ln1_b"], p["wqkv"], p["bqkv"], p["wo"], p["bo"],
      p["ln2_g"], p["ln2_b"], p["w1"], p["b1"], p["w2"], p["b2"])


# ----------------------------------------------------------------------------
# Kernel 3: final LayerNorm on [cls] + classifier head (Cout-tiled grid)
# ----------------------------------------------------------------------------
def _head_kernel(x_ref, g_ref, b_ref, w_ref, bias_ref, o_ref):
    # x: (N, D) bf16, w block: (D, tile_k) bf16, bias block: (1, tile_k) f32
    x = x_ref[...].astype(jnp.float32)
    h = _layernorm(x, g_ref[...], b_ref[...])
    o_ref[...] = jnp.dot(h.astype(jnp.bfloat16), w_ref[...],
                         preferred_element_type=jnp.float32) + bias_ref[...]


def head_classifier(cls_tok, params, num_classes):
    N, D = cls_tok.shape
    KP = params["cls_w"].shape[1]                 # padded to multiple of 128
    tile_k = 512 if KP % 512 == 0 else KP
    out = pl.pallas_call(
        _head_kernel,
        out_shape=jax.ShapeDtypeStruct((N, KP), jnp.float32),
        grid=(KP // tile_k,),
        in_specs=[
            pl.BlockSpec((N, D), lambda j: (0, 0)),
            pl.BlockSpec((1, D), lambda j: (0, 0)),
            pl.BlockSpec((1, D), lambda j: (0, 0)),
            pl.BlockSpec((D, tile_k), lambda j: (0, j)),
            pl.BlockSpec((1, tile_k), lambda j: (0, j)),
        ],
        out_specs=pl.BlockSpec((N, tile_k), lambda j: (0, j)),
        compiler_params=pltpu.CompilerParams(dimension_semantics=("parallel",)),
    )(cls_tok, params["norm_g"], params["norm_b"],
      params["cls_w"], params["cls_b"])
    return out[:, :num_classes]


# ----------------------------------------------------------------------------
# Model glue
# ----------------------------------------------------------------------------
def _extract_patches(x_nchw, patch):
    # Non-overlapping patches: pure reshape/transpose, no im2col duplication.
    x = jnp.transpose(x_nchw, (0, 2, 3, 1))                       # NHWC
    N, H, W, C = x.shape
    gh, gw = H // patch, W // patch
    x = x.reshape(N, gh, patch, gw, patch, C)
    x = jnp.transpose(x, (0, 1, 3, 2, 4, 5))
    return x.reshape(N, gh * gw, patch * patch * C)               # (N, P, PD)


def vit_forward(params, x_nchw):
    cfg = params["cfg"]
    patches = _extract_patches(x_nchw.astype(jnp.float32),
                               cfg["patch"]).astype(jnp.bfloat16)
    tokens = patch_embed(patches, params)                          # (N, S, D) bf16
    for blk in params["blocks"]:
        tokens = encoder_block(tokens, blk, num_heads=cfg["heads"])
    cls_tok = tokens[:, 0, :]                                      # (N, D) bf16
    return head_classifier(cls_tok, params, cfg["num_classes"])    # (N, classes)


# ----------------------------------------------------------------------------
# Deterministic synthetic parameters (ViT-style init)
# ----------------------------------------------------------------------------
def make_params(key, *, img_size=16, patch=4, in_chans=3, dim=128, depth=2,
                heads=4, mlp_dim=512, num_classes=1000):
    P = (img_size // patch) ** 2
    S = P + 1
    PD = patch * patch * in_chans
    KP = ((num_classes + 127) // 128) * 128       # lane-dense padded classifier
    keys = iter(jax.random.split(key, 8 + 8 * depth))

    def w_init(k, shape, std):
        return (jax.random.normal(k, shape, jnp.float32) * std).astype(jnp.bfloat16)

    params = {
        "cfg": dict(patch=patch, heads=heads, num_classes=num_classes),
        "patch_w": w_init(next(keys), (PD, dim), (2.0 / PD) ** 0.5),
        "patch_b": jnp.zeros((1, dim), jnp.float32),
        "cls": jax.random.normal(next(keys), (1, dim), jnp.float32) * 0.02,
        "pos": jax.random.normal(next(keys), (S, dim), jnp.float32) * 0.02,
        "norm_g": jnp.ones((1, dim), jnp.float32),
        "norm_b": jnp.zeros((1, dim), jnp.float32),
    }
    blocks = []
    for _ in range(depth):
        blocks.append({
            "ln1_g": jnp.ones((1, dim), jnp.float32),
            "ln1_b": jnp.zeros((1, dim), jnp.float32),
            "wqkv": w_init(next(keys), (dim, 3 * dim), 0.02),
            "bqkv": jnp.zeros((1, 3 * dim), jnp.float32),
            "wo": w_init(next(keys), (dim, dim), 0.02),
            "bo": jnp.zeros((1, dim), jnp.float32),
            "ln2_g": jnp.ones((1, dim), jnp.float32),
            "ln2_b": jnp.zeros((1, dim), jnp.float32),
            "w1": w_init(next(keys), (dim, mlp_dim), 0.02),
            "b1": jnp.zeros((1, mlp_dim), jnp.float32),
            "w2": w_init(next(keys), (mlp_dim, dim), 0.02),
            "b2": jnp.zeros((1, dim), jnp.float32),
        })
    params["blocks"] = blocks

    cw = jax.random.normal(next(keys), (dim, num_classes), jnp.float32) * 0.02
    cls_w = jnp.zeros((dim, KP), jnp.float32).at[:, :num_classes].set(cw)
    params["cls_w"] = cls_w.astype(jnp.bfloat16)
    params["cls_b"] = jnp.zeros((1, KP), jnp.float32)
    return params


# ----------------------------------------------------------------------------
if __name__ == "__main__":
    key = jax.random.PRNGKey(0)
    pkey, xkey = jax.random.split(key)
    params = make_params(pkey, img_size=16, patch=4, in_chans=3, dim=128,
                         depth=2, heads=4, mlp_dim=512, num_classes=1000)

    # Small image batch consistent with a ViT wrapper: NCHW, 3 channels.
    x = jax.random.normal(xkey, (2, 3, 16, 16), jnp.float32)

    fwd = jax.jit(lambda inp: vit_forward(params, inp))
    logits = jax.block_until_ready(fwd(x))

    assert logits.shape == (2, 1000), logits.shape
    assert logits.dtype == jnp.float32
    assert bool(jnp.all(jnp.isfinite(logits)))
    print("KERNEL_OK")
</pallas_src>

<mosaic_0001>
module attributes {stable_mosaic.version = 11 : i64} {
  func.func @_patch_embed_kernel(%arg0: i32, %arg1: memref<1x16x48xbf16, #tpu.memory_space<vmem>>, %arg2: memref<48x128xbf16, #tpu.memory_space<vmem>>, %arg3: memref<1x128xf32, #tpu.memory_space<vmem>>, %arg4: memref<1x128xf32, #tpu.memory_space<vmem>>, %arg5: memref<17x128xf32, #tpu.memory_space<vmem>>, %arg6: memref<1x17x128xbf16, #tpu.memory_space<vmem>>) attributes {dimension_semantics = [#tpu.dimension_semantics<parallel>], iteration_bounds = array<i64: 2>, scalar_prefetch = 0 : i64, scratch_operands = 0 : i64, tpu.core_type = #tpu.core_type<tc>, window_params = [{transform_indices = @transform_0, window_bounds = array<i64: 1, 16, 48>}, {pipeline_mode = #tpu.pipeline_mode<synchronous>, transform_indices = @transform_1, window_bounds = array<i64: 48, 128>}, {pipeline_mode = #tpu.pipeline_mode<synchronous>, transform_indices = @transform_2, window_bounds = array<i64: 1, 128>}, {pipeline_mode = #tpu.pipeline_mode<synchronous>, transform_indices = @transform_3, window_bounds = array<i64: 1, 128>}, {pipeline_mode = #tpu.pipeline_mode<synchronous>, transform_indices = @transform_4, window_bounds = array<i64: 17, 128>}, {transform_indices = @transform_5, window_bounds = array<i64: 1, 17, 128>}]} {
    %c0 = arith.constant 0 : index
    %c0_0 = arith.constant 0 : index
    %c0_1 = arith.constant 0 : index
    %0 = vector.load %arg1[%c0, %c0_0, %c0_1] : memref<1x16x48xbf16, #tpu.memory_space<vmem>>, vector<1x16x48xbf16>
    %1 = vector.shape_cast %0 : vector<1x16x48xbf16> to vector<16x48xbf16>
    %c0_2 = arith.constant 0 : index
    %c0_3 = arith.constant 0 : index
    %2 = vector.load %arg2[%c0_2, %c0_3] : memref<48x128xbf16, #tpu.memory_space<vmem>>, vector<48x128xbf16>
    %cst = arith.constant dense<0.000000e+00> : vector<16x128xf32>
    %3 = tpu.matmul %1, %2, %cst {dimension_numbers = #tpu.dot_dimension_numbers<[1], [0], [0], [1], [0, 0, 1, 1], [], []>} : vector<16x48xbf16>, vector<48x128xbf16>, vector<16x128xf32> -> vector<16x128xf32>
    %c0_4 = arith.constant 0 : index
    %c0_5 = arith.constant 0 : index
    %4 = vector.load %arg3[%c0_4, %c0_5] : memref<1x128xf32, #tpu.memory_space<vmem>>, vector<1x128xf32>
    %5 = vector.broadcast %4 : vector<1x128xf32> to vector<16x128xf32>
    %6 = arith.addf %3, %5 : vector<16x128xf32>
    %c0_6 = arith.constant 0 : index
    %c0_7 = arith.constant 0 : index
    %7 = vector.load %arg4[%c0_6, %c0_7] : memref<1x128xf32, #tpu.memory_space<vmem>>, vector<1x128xf32>
    %c0_8 = arith.constant 0 : index
    %c0_9 = arith.constant 0 : index
    %8 = vector.load %arg5[%c0_8, %c0_9] : memref<17x128xf32, #tpu.memory_space<vmem>>, vector<1x128xf32>
    %9 = arith.addf %7, %8 : vector<1x128xf32>
    %10 = arith.truncf %9 : vector<1x128xf32> to vector<1x128xbf16>
    %c0_10 = arith.constant 0 : index
    %c0_11 = arith.constant 0 : index
    %c0_12 = arith.constant 0 : index
    %11 = vector.load %arg6[%c0_10, %c0_11, %c0_12] : memref<1x17x128xbf16, #tpu.memory_space<vmem>>, vector<1x1x128xbf16>
    %12 = vector.shape_cast %11 : vector<1x1x128xbf16> to vector<1x128xbf16>
    %13 = vector.shape_cast %10 : vector<1x128xbf16> to vector<1x1x128xbf16>
    tpu.vector_store %arg6[%c0_10, %c0_11, %c0_12], %13 {strides = array<i32>} : memref<1x17x128xbf16, #tpu.memory_space<vmem>>, vector<1x1x128xbf16>,
    %c1 = arith.constant 1 : index
    %c0_13 = arith.constant 0 : index
    %14 = vector.load %arg5[%c1, %c0_13] : memref<17x128xf32, #tpu.memory_space<vmem>>, vector<16x128xf32>
    %15 = arith.addf %6, %14 : vector<16x128xf32>
    %16 = arith.truncf %15 : vector<16x128xf32> to vector<16x128xbf16>
    %c0_14 = arith.constant 0 : index
    %c1_15 = arith.constant 1 : index
    %c0_16 = arith.constant 0 : index
    %17 = vector.load %arg6[%c0_14, %c1_15, %c0_16] : memref<1x17x128xbf16, #tpu.memory_space<vmem>>, vector<1x16x128xbf16>
    %18 = vector.shape_cast %17 : vector<1x16x128xbf16> to vector<16x128xbf16>
    %19 = vector.shape_cast %16 : vector<16x128xbf16> to vector<1x16x128xbf16>
    tpu.vector_store %arg6[%c0_14, %c1_15, %c0_16], %19 {strides = array<i32>} : memref<1x17x128xbf16, #tpu.memory_space<vmem>>, vector<1x16x128xbf16>,
    return
  }
  func.func @transform_0(%arg0: i32) -> (i32, i32, i32) {
    %c0_i32 = arith.constant 0 : i32
    %c0_i32_0 = arith.constant 0 : i32
    %c0_i32_1 = arith.constant 0 : i32
    return %arg0, %c0_i32, %c0_i32_0 : i32, i32, i32
  }
  func.func @transform_1(%arg0: i32) -> (i32, i32) {
    %c0_i32 = arith.constant 0 : i32
    %c0_i32_0 = arith.constant 0 : i32
    %c0_i32_1 = arith.constant 0 : i32
    return %c0_i32, %c0_i32_0 : i32, i32
  }
  func.func @transform_2(%arg0: i32) -> (i32, i32) {
    %c0_i32 = arith.constant 0 : i32
    %c0_i32_0 = arith.constant 0 : i32
    %c0_i32_1 = arith.constant 0 : i32
    return %c0_i32, %c0_i32_0 : i32, i32
  }
  func.func @transform_3(%arg0: i32) -> (i32, i32) {
    %c0_i32 = arith.constant 0 : i32
    %c0_i32_0 = arith.constant 0 : i32
    %c0_i32_1 = arith.constant 0 : i32
    return %c0_i32, %c0_i32_0 : i32, i32
  }
  func.func @transform_4(%arg0: i32) -> (i32, i32) {
    %c0_i32 = arith.constant 0 : i32
    %c0_i32_0 = arith.constant 0 : i32
    %c0_i32_1 = arith.constant 0 : i32
    return %c0_i32, %c0_i32_0 : i32, i32
  }
  func.func @transform_5(%arg0: i32) -> (i32, i32, i32) {
    %c0_i32 = arith.constant 0 : i32
    %c0_i32_0 = arith.constant 0 : i32
    %c0_i32_1 = arith.constant 0 : i32
    return %arg0, %c0_i32, %c0_i32_0 : i32, i32, i32
  }
}

module attributes {stable_mosaic.version = 11 : i64} {
  func.func @_encoder_block_kernel(%arg0: i32, %arg1: memref<1x17x128xbf16, #tpu.memory_space<vmem>>, %arg2: memref<1x128xf32, #tpu.memory_space<vmem>>, %arg3: memref<1x128xf32, #tpu.memory_space<vmem>>, %arg4: memref<128x384xbf16, #tpu.memory_space<vmem>>, %arg5: memref<1x384xf32, #tpu.memory_space<vmem>>, %arg6: memref<128x128xbf16, #tpu.memory_space<vmem>>, %arg7: memref<1x128xf32, #tpu.memory_space<vmem>>, %arg8: memref<1x128xf32, #tpu.memory_space<vmem>>, %arg9: memref<1x128xf32, #tpu.memory_space<vmem>>, %arg10: memref<128x512xbf16, #tpu.memory_space<vmem>>, %arg11: memref<1x512xf32, #tpu.memory_space<vmem>>, %arg12: memref<512x128xbf16, #tpu.memory_space<vmem>>, %arg13: memref<1x128xf32, #tpu.memory_space<vmem>>, %arg14: memref<1x17x128xbf16, #tpu.memory_space<vmem>>) attributes {dimension_semantics = [#tpu.dimension_semantics<parallel>], iteration_bounds = array<i64: 2>, scalar_prefetch = 0 : i64, scratch_operands = 0 : i64, tpu.core_type = #tpu.core_type<tc>, window_params = [{transform_indices = @transform_0, window_bounds = array<i64: 1, 17, 128>}, {pipeline_mode = #tpu.pipeline_mode<synchronous>, transform_indices = @transform_1, window_bounds = array<i64: 1, 128>}, {pipeline_mode = #tpu.pipeline_mode<synchronous>, transform_indices = @transform_2, window_bounds = array<i64: 1, 128>}, {pipeline_mode = #tpu.pipeline_mode<synchronous>, transform_indices = @transform_3, window_bounds = array<i64: 128, 384>}, {pipeline_mode = #tpu.pipeline_mode<synchronous>, transform_indices = @transform_4, window_bounds = array<i64: 1, 384>}, {pipeline_mode = #tpu.pipeline_mode<synchronous>, transform_indices = @transform_5, window_bounds = array<i64: 128, 128>}, {pipeline_mode = #tpu.pipeline_mode<synchronous>, transform_indices = @transform_6, window_bounds = array<i64: 1, 128>}, {pipeline_mode = #tpu.pipeline_mode<synchronous>, transform_indices = @transform_7, window_bounds = array<i64: 1, 128>}, {pipeline_mode = #tpu.pipeline_mode<synchronous>, transform_indices = @transform_8, window_bounds = array<i64: 1, 128>}, {pipeline_mode = #tpu.pipeline_mode<synchronous>, transform_indices = @transform_9, window_bounds = array<i64: 128, 512>}, {pipeline_mode = #tpu.pipeline_mode<synchronous>, transform_indices = @transform_10, window_bounds = array<i64: 1, 512>}, {pipeline_mode = #tpu.pipeline_mode<synchronous>, transform_indices = @transform_11, window_bounds = array<i64: 512, 128>}, {pipeline_mode = #tpu.pipeline_mode<synchronous>, transform_indices = @transform_12, window_bounds = array<i64: 1, 128>}, {transform_indices = @transform_13, window_bounds = array<i64: 1, 17, 128>}]} {
    %c0 = arith.constant 0 : index
    %c0_0 = arith.constant 0 : index
    %c0_1 = arith.constant 0 : index
    %0 = vector.load %arg1[%c0, %c0_0, %c0_1] : memref<1x17x128xbf16, #tpu.memory_space<vmem>>, vector<1x17x128xbf16>
    %1 = vector.shape_cast %0 : vector<1x17x128xbf16> to vector<17x128xbf16>
    %2 = arith.extf %1 : vector<17x128xbf16> to vector<17x128xf32>
    %c0_2 = arith.constant 0 : index
    %c0_3 = arith.constant 0 : index
    %3 = vector.load %arg2[%c0_2, %c0_3] : memref<1x128xf32, #tpu.memory_space<vmem>>, vector<1x128xf32>
    %c0_4 = arith.constant 0 : index
    %c0_5 = arith.constant 0 : index
    %4 = vector.load %arg3[%c0_4, %c0_5] : memref<1x128xf32, #tpu.memory_space<vmem>>, vector<1x128xf32>
    %cst = arith.constant dense<0.000000e+00> : vector<17xf32>
    %5 = vector.multi_reduction <add>, %2, %cst [1] : vector<17x128xf32> to vector<17xf32>
    %6 = vector.shape_cast %5 : vector<17xf32> to vector<17x1xf32>
    %cst_6 = arith.constant 1.280000e+02 : f32
    %7 = vector.broadcast %cst_6 : f32 to vector<17x1xf32>
    %8 = arith.divf %6, %7 : vector<17x1xf32>
    %9 = vector.broadcast %8 : vector<17x1xf32> to vector<17x128xf32>
    %10 = arith.subf %2, %9 : vector<17x128xf32>
    %11 = arith.mulf %10, %10 : vector<17x128xf32>
    %cst_7 = arith.constant dense<0.000000e+00> : vector<17xf32>
    %12 = vector.multi_reduction <add>, %11, %cst_7 [1] : vector<17x128xf32> to vector<17xf32>
    %13 = vector.shape_cast %12 : vector<17xf32> to vector<17x1xf32>
    %cst_8 = arith.constant 1.280000e+02 : f32
    %14 = vector.broadcast %cst_8 : f32 to vector<17x1xf32>
    %15 = arith.divf %13, %14 : vector<17x1xf32>
    %cst_9 = arith.constant 9.99999997E-7 : f32
    %16 = vector.broadcast %cst_9 : f32 to vector<17x1xf32>
    %17 = arith.addf %15, %16 : vector<17x1xf32>
    %18 = math.rsqrt %17 : vector<17x1xf32>
    %19 = vector.broadcast %18 : vector<17x1xf32> to vector<17x128xf32>
    %20 = arith.mulf %10, %19 : vector<17x128xf32>
    %21 = vector.broadcast %3 : vector<1x128xf32> to vector<17x128xf32>
    %22 = arith.mulf %20, %21 : vector<17x128xf32>
    %23 = vector.broadcast %4 : vector<1x128xf32> to vector<17x128xf32>
    %24 = arith.addf %22, %23 : vector<17x128xf32>
    %25 = arith.truncf %24 : vector<17x128xf32> to vector<17x128xbf16>
    %c0_10 = arith.constant 0 : index
    %c0_11 = arith.constant 0 : index
    %26 = vector.load %arg4[%c0_10, %c0_11] : memref<128x384xbf16, #tpu.memory_space<vmem>>, vector<128x384xbf16>
    %cst_12 = arith.constant dense<0.000000e+00> : vector<17x384xf32>
    %27 = tpu.matmul %25, %26, %cst_12 {dimension_numbers = #tpu.dot_dimension_numbers<[1], [0], [0], [1], [0, 0, 1, 1], [], []>} : vector<17x128xbf16>, vector<128x384xbf16>, vector<17x384xf32> -> vector<17x384xf32>
    %c0_13 = arith.constant 0 : index
    %c0_14 = arith.constant 0 : index
    %28 = vector.load %arg5[%c0_13, %c0_14] : memref<1x384xf32, #tpu.memory_space<vmem>>, vector<1x384xf32>
    %29 = vector.broadcast %28 : vector<1x384xf32> to vector<17x384xf32>
    %30 = arith.addf %27, %29 : vector<17x384xf32>
    %31 = vector.extract_strided_slice %30 {offsets = [0, 0], sizes = [17, 32], strides = [1, 1]} : vector<17x384xf32> to vector<17x32xf32>
    %32 = vector.extract_strided_slice %30 {offsets = [0, 128], sizes = [17, 32], strides = [1, 1]} : vector<17x384xf32> to vector<17x32xf32>
    %33 = vector.extract_strided_slice %30 {offsets = [0, 256], sizes = [17, 32], strides = [1, 1]} : vector<17x384xf32> to vector<17x32xf32>
    %cst_15 = arith.constant dense<0.000000e+00> : vector<17x17xf32>
    %34 = tpu.matmul %31, %32, %cst_15 {dimension_numbers = #tpu.dot_dimension_numbers<[1], [1], [0], [0], [0, 0, 1, 0], [], []>} : vector<17x32xf32>, vector<17x32xf32>, vector<17x17xf32> -> vector<17x17xf32>
    %cst_16 = arith.constant 0.176776692 : f32
    %35 = vector.broadcast %cst_16 : f32 to vector<17x17xf32>
    %36 = arith.mulf %34, %35 : vector<17x17xf32>
    %cst_17 = arith.constant dense<0xFF800000> : vector<17xf32>
    %37 = vector.multi_reduction <maximumf>, %36, %cst_17 [1] : vector<17x17xf32> to vector<17xf32>
    %38 = vector.shape_cast %37 : vector<17xf32> to vector<17x1xf32>
    %39 = vector.broadcast %38 : vector<17x1xf32> to vector<17x17xf32>
    %40 = arith.subf %36, %39 : vector<17x17xf32>
    %41 = math.exp %40 : vector<17x17xf32>
    %cst_18 = arith.constant dense<0.000000e+00> : vector<17xf32>
    %42 = vector.multi_reduction <add>, %41, %cst_18 [1] : vector<17x17xf32> to vector<17xf32>
    %43 = vector.shape_cast %42 : vector<17xf32> to vector<17x1xf32>
    %44 = tpu.reciprocal %43 {approx = true} : vector<17x1xf32> -> vector<17x1xf32>
    %45 = vector.broadcast %44 : vector<17x1xf32> to vector<17x17xf32>
    %46 = arith.mulf %41, %45 : vector<17x17xf32>
    %cst_19 = arith.constant dense<0.000000e+00> : vector<17x32xf32>
    %47 = tpu.matmul %46, %33, %cst_19 {dimension_numbers = #tpu.dot_dimension_numbers<[1], [0], [0], [1], [0, 0, 1, 1], [], []>} : vector<17x17xf32>, vector<17x32xf32>, vector<17x32xf32> -> vector<17x32xf32>
    %48 = vector.extract_strided_slice %30 {offsets = [0, 32], sizes = [17, 32], strides = [1, 1]} : vector<17x384xf32> to vector<17x32xf32>
    %49 = vector.extract_strided_slice %30 {offsets = [0, 160], sizes = [17, 32], strides = [1, 1]} : vector<17x384xf32> to vector<17x32xf32>
    %50 = vector.extract_strided_slice %30 {offsets = [0, 288], sizes = [17, 32], strides = [1, 1]} : vector<17x384xf32> to vector<17x32xf32>
    %cst_20 = arith.constant dense<0.000000e+00> : vector<17x17xf32>
    %51 = tpu.matmul %48, %49, %cst_20 {dimension_numbers = #tpu.dot_dimension_numbers<[1], [1], [0], [0], [0, 0, 1, 0], [], []>} : vector<17x32xf32>, vector<17x32xf32>, vector<17x17xf32> -> vector<17x17xf32>
    %cst_21 = arith.constant 0.176776692 : f32
    %52 = vector.broadcast %cst_21 : f32 to vector<17x17xf32>
    %53 = arith.mulf %51, %52 : vector<17x17xf32>
    %cst_22 = arith.constant dense<0xFF800000> : vector<17xf32>
    %54 = vector.multi_reduction <maximumf>, %53, %cst_22 [1] : vector<17x17xf32> to vector<17xf32>
    %55 = vector.shape_cast %54 : vector<17xf32> to vector<17x1xf32>
    %56 = vector.broadcast %55 : vector<17x1xf32> to vector<17x17xf32>
    %57 = arith.subf %53, %56 : vector<17x17xf32>
    %58 = math.exp %57 : vector<17x17xf32>
    %cst_23 = arith.constant dense<0.000000e+00> : vector<17xf32>
    %59 = vector.multi_reduction <add>, %58, %cst_23 [1] : vector<17x17xf32> to vector<17xf32>
    %60 = vector.shape_cast %59 : vector<17xf32> to vector<17x1xf32>
    %61 = tpu.reciprocal %60 {approx = true} : vector<17x1xf32> -> vector<17x1xf32>
    %62 = vector.broadcast %61 : vector<17x1xf32> to vector<17x17xf32>
    %63 = arith.mulf %58, %62 : vector<17x17xf32>
    %cst_24 = arith.constant dense<0.000000e+00> : vector<17x32xf32>
    %64 = tpu.matmul %63, %50, %cst_24 {dimension_numbers = #tpu.dot_dimension_numbers<[1], [0], [0], [1], [0, 0, 1, 1], [], []>} : vector<17x17xf32>, vector<17x32xf32>, vector<17x32xf32> -> vector<17x32xf32>
    %65 = vector.extract_strided_slice %30 {offsets = [0, 64], sizes = [17, 32], strides = [1, 1]} : vector<17x384xf32> to vector<17x32xf32>
    %66 = vector.extract_strided_slice %30 {offsets = [0, 192], sizes = [17, 32], strides = [1, 1]} : vector<17x384xf32> to vector<17x32xf32>
    %67 = vector.extract_strided_slice %30 {offsets = [0, 320], sizes = [17, 32], strides = [1, 1]} : vector<17x384xf32> to vector<17x32xf32>
    %cst_25 = arith.constant dense<0.000000e+00> : vector<17x17xf32>
    %68 = tpu.matmul %65, %66, %cst_25 {dimension_numbers = #tpu.dot_dimension_numbers<[1], [1], [0], [0], [0, 0, 1, 0], [], []>} : vector<17x32xf32>, vector<17x32xf32>, vector<17x17xf32> -> vector<17x17xf32>
    %cst_26 = arith.constant 0.176776692 : f32
    %69 = vector.broadcast %cst_26 : f32 to vector<17x17xf32>
    %70 = arith.mulf %68, %69 : vector<17x17xf32>
    %cst_27 = arith.constant dense<0xFF800000> : vector<17xf32>
    %71 = vector.multi_reduction <maximumf>, %70, %cst_27 [1] : vector<17x17xf32> to vector<17xf32>
    %72 = vector.shape_cast %71 : vector<17xf32> to vector<17x1xf32>
    %73 = vector.broadcast %72 : vector<17x1xf32> to vector<17x17xf32>
    %74 = arith.subf %70, %73 : vector<17x17xf32>
    %75 = math.exp %74 : vector<17x17xf32>
    %cst_28 = arith.constant dense<0.000000e+00> : vector<17xf32>
    %76 = vector.multi_reduction <add>, %75, %cst_28 [1] : vector<17x17xf32> to vector<17xf32>
    %77 = vector.shape_cast %76 : vector<17xf32> to vector<17x1xf32>
    %78 = tpu.reciprocal %77 {approx = true} : vector<17x1xf32> -> vector<17x1xf32>
    %79 = vector.broadcast %78 : vector<17x1xf32> to vector<17x17xf32>
    %80 = arith.mulf %75, %79 : vector<17x17xf32>
    %cst_29 = arith.constant dense<0.000000e+00> : vector<17x32xf32>
    %81 = tpu.matmul %80, %67, %cst_29 {dimension_numbers = #tpu.dot_dimension_numbers<[1], [0], [0], [1], [0, 0, 1, 1], [], []>} : vector<17x17xf32>, vector<17x32xf32>, vector<17x32xf32> -> vector<17x32xf32>
    %82 = vector.extract_strided_slice %30 {offsets = [0, 96], sizes = [17, 32], strides = [1, 1]} : vector<17x384xf32> to vector<17x32xf32>
    %83 = vector.extract_strided_slice %30 {offsets = [0, 224], sizes = [17, 32], strides = [1, 1]} : vector<17x384xf32> to vector<17x32xf32>
    %84 = vector.extract_strided_slice %30 {offsets = [0, 352], sizes = [17, 32], strides = [1, 1]} : vector<17x384xf32> to vector<17x32xf32>
    %cst_30 = arith.constant dense<0.000000e+00> : vector<17x17xf32>
    %85 = tpu.matmul %82, %83, %cst_30 {dimension_numbers = #tpu.dot_dimension_numbers<[1], [1], [0], [0], [0, 0, 1, 0], [], []>} : vector<17x32xf32>, vector<17x32xf32>, vector<17x17xf32> -> vector<17x17xf32>
    %cst_31 = arith.constant 0.176776692 : f32
    %86 = vector.broadcast %cst_31 : f32 to vector<17x17xf32>
    %87 = arith.mulf %85, %86 : vector<17x17xf32>
    %cst_32 = arith.constant dense<0xFF800000> : vector<17xf32>
    %88 = vector.multi_reduction <maximumf>, %87, %cst_32 [1] : vector<17x17xf32> to vector<17xf32>
    %89 = vector.shape_cast %88 : vector<17xf32> to vector<17x1xf32>
    %90 = vector.broadcast %89 : vector<17x1xf32> to vector<17x17xf32>
    %91 = arith.subf %87, %90 : vector<17x17xf32>
    %92 = math.exp %91 : vector<17x17xf32>
    %cst_33 = arith.constant dense<0.000000e+00> : vector<17xf32>
    %93 = vector.multi_reduction <add>, %92, %cst_33 [1] : vector<17x17xf32> to vector<17xf32>
    %94 = vector.shape_cast %93 : vector<17xf32> to vector<17x1xf32>
    %95 = tpu.reciprocal %94 {approx = true} : vector<17x1xf32> -> vector<17x1xf32>
    %96 = vector.broadcast %95 : vector<17x1xf32> to vector<17x17xf32>
    %97 = arith.mulf %92, %96 : vector<17x17xf32>
    %cst_34 = arith.constant dense<0.000000e+00> : vector<17x32xf32>
    %98 = tpu.matmul %97, %84, %cst_34 {dimension_numbers = #tpu.dot_dimension_numbers<[1], [0], [0], [1], [0, 0, 1, 1], [], []>} : vector<17x17xf32>, vector<17x32xf32>, vector<17x32xf32> -> vector<17x32xf32>
    %99 = tpu.concatenate %47, %64, %81, %98 in 1 : vector<17x32xf32>, vector<17x32xf32>, vector<17x32xf32>, vector<17x32xf32> -> vector<17x128xf32>
    %100 = arith.truncf %99 : vector<17x128xf32> to vector<17x128xbf16>
    %c0_35 = arith.constant 0 : index
    %c0_36 = arith.constant 0 : index
    %101 = vector.load %arg6[%c0_35, %c0_36] : memref<128x128xbf16, #tpu.memory_space<vmem>>, vector<128x128xbf16>
    %cst_37 = arith.constant dense<0.000000e+00> : vector<17x128xf32>
    %102 = tpu.matmul %100, %101, %cst_37 {dimension_numbers = #tpu.dot_dimension_numbers<[1], [0], [0], [1], [0, 0, 1, 1], [], []>} : vector<17x128xbf16>, vector<128x128xbf16>, vector<17x128xf32> -> vector<17x128xf32>
    %c0_38 = arith.constant 0 : index
    %c0_39 = arith.constant 0 : index
    %103 = vector.load %arg7[%c0_38, %c0_39] : memref<1x128xf32, #tpu.memory_space<vmem>>, vector<1x128xf32>
    %104 = vector.broadcast %103 : vector<1x128xf32> to vector<17x128xf32>
    %105 = arith.addf %102, %104 : vector<17x128xf32>
    %106 = arith.addf %2, %105 : vector<17x128xf32>
    %c0_40 = arith.constant 0 : index
    %c0_41 = arith.constant 0 : index
    %107 = vector.load %arg8[%c0_40, %c0_41] : memref<1x128xf32, #tpu.memory_space<vmem>>, vector<1x128xf32>
    %c0_42 = arith.constant 0 : index
    %c0_43 = arith.constant 0 : index
    %108 = vector.load %arg9[%c0_42, %c0_43] : memref<1x128xf32, #tpu.memory_space<vmem>>, vector<1x128xf32>
    %cst_44 = arith.constant dense<0.000000e+00> : vector<17xf32>
    %109 = vector.multi_reduction <add>, %106, %cst_44 [1] : vector<17x128xf32> to vector<17xf32>
    %110 = vector.shape_cast %109 : vector<17xf32> to vector<17x1xf32>
    %cst_45 = arith.constant 1.280000e+02 : f32
    %111 = vector.broadcast %cst_45 : f32 to vector<17x1xf32>
    %112 = arith.divf %110, %111 : vector<17x1xf32>
    %113 = vector.broadcast %112 : vector<17x1xf32> to vector<17x128xf32>
    %114 = arith.subf %106, %113 : vector<17x128xf32>
    %115 = arith.mulf %114, %114 : vector<17x128xf32>
    %cst_46 = arith.constant dense<0.000000e+00> : vector<17xf32>
    %116 = vector.multi_reduction <add>, %115, %cst_46 [1] : vector<17x128xf32> to vector<17xf32>
    %117 = vector.shape_cast %116 : vector<17xf32> to vector<17x1xf32>
    %cst_47 = arith.constant 1.280000e+02 : f32
    %118 = vector.broadcast %cst_47 : f32 to vector<17x1xf32>
    %119 = arith.divf %117, %118 : vector<17x1xf32>
    %cst_48 = arith.constant 9.99999997E-7 : f32
    %120 = vector.broadcast %cst_48 : f32 to vector<17x1xf32>
    %121 = arith.addf %119, %120 : vector<17x1xf32>
    %122 = math.rsqrt %121 : vector<17x1xf32>
    %123 = vector.broadcast %122 : vector<17x1xf32> to vector<17x128xf32>
    %124 = arith.mulf %114, %123 : vector<17x128xf32>
    %125 = vector.broadcast %107 : vector<1x128xf32> to vector<17x128xf32>
    %126 = arith.mulf %124, %125 : vector<17x128xf32>
    %127 = vector.broadcast %108 : vector<1x128xf32> to vector<17x128xf32>
    %128 = arith.addf %126, %127 : vector<17x128xf32>
    %129 = arith.truncf %128 : vector<17x128xf32> to vector<17x128xbf16>
    %c0_49 = arith.constant 0 : index
    %c0_50 = arith.constant 0 : index
    %130 = vector.load %arg10[%c0_49, %c0_50] : memref<128x512xbf16, #tpu.memory_space<vmem>>, vector<128x512xbf16>
    %cst_51 = arith.constant dense<0.000000e+00> : vector<17x512xf32>
    %131 = tpu.matmul %129, %130, %cst_51 {dimension_numbers = #tpu.dot_dimension_numbers<[1], [0], [0], [1], [0, 0, 1, 1], [], []>} : vector<17x128xbf16>, vector<128x512xbf16>, vector<17x512xf32> -> vector<17x512xf32>
    %c0_52 = arith.constant 0 : index
    %c0_53 = arith.constant 0 : index
    %132 = vector.load %arg11[%c0_52, %c0_53] : memref<1x512xf32, #tpu.memory_space<vmem>>, vector<1x512xf32>
    %133 = vector.broadcast %132 : vector<1x512xf32> to vector<17x512xf32>
    %134 = arith.addf %131, %133 : vector<17x512xf32>
    %135 = arith.mulf %134, %134 : vector<17x512xf32>
    %136 = arith.mulf %134, %135 : vector<17x512xf32>
    %cst_54 = arith.constant 4.471500e-02 : f32
    %137 = vector.broadcast %cst_54 : f32 to vector<17x512xf32>
    %138 = arith.mulf %137, %136 : vector<17x512xf32>
    %139 = arith.addf %134, %138 : vector<17x512xf32>
    %cst_55 = arith.constant 0.797884583 : f32
    %140 = vector.broadcast %cst_55 : f32 to vector<17x512xf32>
    %141 = arith.mulf %140, %139 : vector<17x512xf32>
    %142 = math.tanh %141 : vector<17x512xf32>
    %cst_56 = arith.constant 1.000000e+00 : f32
    %143 = vector.broadcast %cst_56 : f32 to vector<17x512xf32>
    %144 = arith.addf %143, %142 : vector<17x512xf32>
    %cst_57 = arith.constant 5.000000e-01 : f32
    %145 = vector.broadcast %cst_57 : f32 to vector<17x512xf32>
    %146 = arith.mulf %145, %144 : vector<17x512xf32>
    %147 = arith.mulf %134, %146 : vector<17x512xf32>
    %148 = arith.truncf %147 : vector<17x512xf32> to vector<17x512xbf16>
    %c0_58 = arith.constant 0 : index
    %c0_59 = arith.constant 0 : index
    %149 = vector.load %arg12[%c0_58, %c0_59] : memref<512x128xbf16, #tpu.memory_space<vmem>>, vector<512x128xbf16>
    %cst_60 = arith.constant dense<0.000000e+00> : vector<17x128xf32>
    %150 = tpu.matmul %148, %149, %cst_60 {dimension_numbers = #tpu.dot_dimension_numbers<[1], [0], [0], [1], [0, 0, 1, 1], [], []>} : vector<17x512xbf16>, vector<512x128xbf16>, vector<17x128xf32> -> vector<17x128xf32>
    %c0_61 = arith.constant 0 : index
    %c0_62 = arith.constant 0 : index
    %151 = vector.load %arg13[%c0_61, %c0_62] : memref<1x128xf32, #tpu.memory_space<vmem>>, vector<1x128xf32>
    %152 = vector.broadcast %151 : vector<1x128xf32> to vector<17x128xf32>
    %153 = arith.addf %150, %152 : vector<17x128xf32>
    %154 = arith.addf %106, %153 : vector<17x128xf32>
    %155 = arith.truncf %154 : vector<17x128xf32> to vector<17x128xbf16>
    %c0_63 = arith.constant 0 : index
    %c0_64 = arith.constant 0 : index
    %c0_65 = arith.constant 0 : index
    %156 = vector.load %arg14[%c0_63, %c0_64, %c0_65] : memref<1x17x128xbf16, #tpu.memory_space<vmem>>, vector<1x17x128xbf16>
    %157 = vector.shape_cast %156 : vector<1x17x128xbf16> to vector<17x128xbf16>
    %158 = vector.shape_cast %155 : vector<17x128xbf16> to vector<1x17x128xbf16>
    tpu.vector_store %arg14[%c0_63, %c0_64, %c0_65], %158 {strides = array<i32>} : memref<1x17x128xbf16, #tpu.memory_space<vmem>>, vector<1x17x128xbf16>,
    return
  }
  func.func @transform_0(%arg0: i32) -> (i32, i32, i32) {
    %c0_i32 = arith.constant 0 : i32
    %c0_i32_0 = arith.constant 0 : i32
    %c0_i32_1 = arith.constant 0 : i32
    return %arg0, %c0_i32, %c0_i32_0 : i32, i32, i32
  }
  func.func @transform_1(%arg0: i32) -> (i32, i32) {
    %c0_i32 = arith.constant 0 : i32
    %c0_i32_0 = arith.constant 0 : i32
    %c0_i32_1 = arith.constant 0 : i32
    return %c0_i32, %c0_i32_0 : i32, i32
  }
  func.func @transform_2(%arg0: i32) -> (i32, i32) {
    %c0_i32 = arith.constant 0 : i32
    %c0_i32_0 = arith.constant 0 : i32
    %c0_i32_1 = arith.constant 0 : i32
    return %c0_i32, %c0_i32_0 : i32, i32
  }
  func.func @transform_3(%arg0: i32) -> (i32, i32) {
    %c0_i32 = arith.constant 0 : i32
    %c0_i32_0 = arith.constant 0 : i32
    %c0_i32_1 = arith.constant 0 : i32
    return %c0_i32, %c0_i32_0 : i32, i32
  }
  func.func @transform_4(%arg0: i32) -> (i32, i32) {
    %c0_i32 = arith.constant 0 : i32
    %c0_i32_0 = arith.constant 0 : i32
    %c0_i32_1 = arith.constant 0 : i32
    return %c0_i32, %c0_i32_0 : i32, i32
  }
  func.func @transform_5(%arg0: i32) -> (i32, i32) {
    %c0_i32 = arith.constant 0 : i32
    %c0_i32_0 = arith.constant 0 : i32
    %c0_i32_1 = arith.constant 0 : i32
    return %c0_i32, %c0_i32_0 : i32, i32
  }
  func.func @transform_6(%arg0: i32) -> (i32, i32) {
    %c0_i32 = arith.constant 0 : i32
    %c0_i32_0 = arith.constant 0 : i32
    %c0_i32_1 = arith.constant 0 : i32
    return %c0_i32, %c0_i32_0 : i32, i32
  }
  func.func @transform_7(%arg0: i32) -> (i32, i32) {
    %c0_i32 = arith.constant 0 : i32
    %c0_i32_0 = arith.constant 0 : i32
    %c0_i32_1 = arith.constant 0 : i32
    return %c0_i32, %c0_i32_0 : i32, i32
  }
  func.func @transform_8(%arg0: i32) -> (i32, i32) {
    %c0_i32 = arith.constant 0 : i32
    %c0_i32_0 = arith.constant 0 : i32
    %c0_i32_1 = arith.constant 0 : i32
    return %c0_i32, %c0_i32_0 : i32, i32
  }
  func.func @transform_9(%arg0: i32) -> (i32, i32) {
    %c0_i32 = arith.constant 0 : i32
    %c0_i32_0 = arith.constant 0 : i32
    %c0_i32_1 = arith.constant 0 : i32
    return %c0_i32, %c0_i32_0 : i32, i32
  }
  func.func @transform_10(%arg0: i32) -> (i32, i32) {
    %c0_i32 = arith.constant 0 : i32
    %c0_i32_0 = arith.constant 0 : i32
    %c0_i32_1 = arith.constant 0 : i32
    return %c0_i32, %c0_i32_0 : i32, i32
  }
  func.func @transform_11(%arg0: i32) -> (i32, i32) {
    %c0_i32 = arith.constant 0 : i32
    %c0_i32_0 = arith.constant 0 : i32
    %c0_i32_1 = arith.constant 0 : i32
    return %c0_i32, %c0_i32_0 : i32, i32
  }
  func.func @transform_12(%arg0: i32) -> (i32, i32) {
    %c0_i32 = arith.constant 0 : i32
    %c0_i32_0 = arith.constant 0 : i32
    %c0_i32_1 = arith.constant 0 : i32
    return %c0_i32, %c0_i32_0 : i32, i32
  }
  func.func @transform_13(%arg0: i32) -> (i32, i32, i32) {
    %c0_i32 = arith.constant 0 : i32
    %c0_i32_0 = arith.constant 0 : i32
    %c0_i32_1 = arith.constant 0 : i32
    return %arg0, %c0_i32, %c0_i32_0 : i32, i32, i32
  }
}

module attributes {stable_mosaic.version = 11 : i64} {
  func.func @_head_kernel(%arg0: i32, %arg1: memref<2x128xbf16, #tpu.memory_space<vmem>>, %arg2: memref<1x128xf32, #tpu.memory_space<vmem>>, %arg3: memref<1x128xf32, #tpu.memory_space<vmem>>, %arg4: memref<128x512xbf16, #tpu.memory_space<vmem>>, %arg5: memref<1x512xf32, #tpu.memory_space<vmem>>, %arg6: memref<2x512xf32, #tpu.memory_space<vmem>>) attributes {dimension_semantics = [#tpu.dimension_semantics<parallel>], iteration_bounds = array<i64: 2>, scalar_prefetch = 0 : i64, scratch_operands = 0 : i64, tpu.core_type = #tpu.core_type<tc>, window_params = [{pipeline_mode = #tpu.pipeline_mode<synchronous>, transform_indices = @transform_0, window_bounds = array<i64: 2, 128>}, {pipeline_mode = #tpu.pipeline_mode<synchronous>, transform_indices = @transform_1, window_bounds = array<i64: 1, 128>}, {pipeline_mode = #tpu.pipeline_mode<synchronous>, transform_indices = @transform_2, window_bounds = array<i64: 1, 128>}, {transform_indices = @transform_3, window_bounds = array<i64: 128, 512>}, {transform_indices = @transform_4, window_bounds = array<i64: 1, 512>}, {transform_indices = @transform_5, window_bounds = array<i64: 2, 512>}]} {
    %c0 = arith.constant 0 : index
    %c0_0 = arith.constant 0 : index
    %0 = vector.load %arg1[%c0, %c0_0] : memref<2x128xbf16, #tpu.memory_space<vmem>>, vector<2x128xbf16>
    %1 = arith.extf %0 : vector<2x128xbf16> to vector<2x128xf32>
    %c0_1 = arith.constant 0 : index
    %c0_2 = arith.constant 0 : index
    %2 = vector.load %arg2[%c0_1, %c0_2] : memref<1x128xf32, #tpu.memory_space<vmem>>, vector<1x128xf32>
    %c0_3 = arith.constant 0 : index
    %c0_4 = arith.constant 0 : index
    %3 = vector.load %arg3[%c0_3, %c0_4] : memref<1x128xf32, #tpu.memory_space<vmem>>, vector<1x128xf32>
    %cst = arith.constant dense<0.000000e+00> : vector<2xf32>
    %4 = vector.multi_reduction <add>, %1, %cst [1] : vector<2x128xf32> to vector<2xf32>
    %5 = vector.shape_cast %4 : vector<2xf32> to vector<2x1xf32>
    %cst_5 = arith.constant 1.280000e+02 : f32
    %6 = vector.broadcast %cst_5 : f32 to vector<2x1xf32>
    %7 = arith.divf %5, %6 : vector<2x1xf32>
    %8 = vector.broadcast %7 : vector<2x1xf32> to vector<2x128xf32>
    %9 = arith.subf %1, %8 : vector<2x128xf32>
    %10 = arith.mulf %9, %9 : vector<2x128xf32>
    %cst_6 = arith.constant dense<0.000000e+00> : vector<2xf32>
    %11 = vector.multi_reduction <add>, %10, %cst_6 [1] : vector<2x128xf32> to vector<2xf32>
    %12 = vector.shape_cast %11 : vector<2xf32> to vector<2x1xf32>
    %cst_7 = arith.constant 1.280000e+02 : f32
    %13 = vector.broadcast %cst_7 : f32 to vector<2x1xf32>
    %14 = arith.divf %12, %13 : vector<2x1xf32>
    %cst_8 = arith.constant 9.99999997E-7 : f32
    %15 = vector.broadcast %cst_8 : f32 to vector<2x1xf32>
    %16 = arith.addf %14, %15 : vector<2x1xf32>
    %17 = math.rsqrt %16 : vector<2x1xf32>
    %18 = vector.broadcast %17 : vector<2x1xf32> to vector<2x128xf32>
    %19 = arith.mulf %9, %18 : vector<2x128xf32>
    %20 = vector.broadcast %2 : vector<1x128xf32> to vector<2x128xf32>
    %21 = arith.mulf %19, %20 : vector<2x128xf32>
    %22 = vector.broadcast %3 : vector<1x128xf32> to vector<2x128xf32>
    %23 = arith.addf %21, %22 : vector<2x128xf32>
    %24 = arith.truncf %23 : vector<2x128xf32> to vector<2x128xbf16>
    %c0_9 = arith.constant 0 : index
    %c0_10 = arith.constant 0 : index
    %25 = vector.load %arg4[%c0_9, %c0_10] : memref<128x512xbf16, #tpu.memory_space<vmem>>, vector<128x512xbf16>
    %cst_11 = arith.constant dense<0.000000e+00> : vector<2x512xf32>
    %26 = tpu.matmul %24, %25, %cst_11 {dimension_numbers = #tpu.dot_dimension_numbers<[1], [0], [0], [1], [0, 0, 1, 1], [], []>} : vector<2x128xbf16>, vector<128x512xbf16>, vector<2x512xf32> -> vector<2x512xf32>
    %c0_12 = arith.constant 0 : index
    %c0_13 = arith.constant 0 : index
    %27 = vector.load %arg5[%c0_12, %c0_13] : memref<1x512xf32, #tpu.memory_space<vmem>>, vector<1x512xf32>
    %28 = vector.broadcast %27 : vector<1x512xf32> to vector<2x512xf32>
    %29 = arith.addf %26, %28 : vector<2x512xf32>
    %c0_14 = arith.constant 0 : index
    %c0_15 = arith.constant 0 : index
    %30 = vector.load %arg6[%c0_14, %c0_15] : memref<2x512xf32, #tpu.memory_space<vmem>>, vector<2x512xf32>
    tpu.vector_store %arg6[%c0_14, %c0_15], %29 {strides = array<i32>} : memref<2x512xf32, #tpu.memory_space<vmem>>, vector<2x512xf32>,
    return
  }
  func.func @transform_0(%arg0: i32) -> (i32, i32) {
    %c0_i32 = arith.constant 0 : i32
    %c0_i32_0 = arith.constant 0 : i32
    %c0_i32_1 = arith.constant 0 : i32
    return %c0_i32, %c0_i32_0 : i32, i32
  }
  func.func @transform_1(%arg0: i32) -> (i32, i32) {
    %c0_i32 = arith.constant 0 : i32
    %c0_i32_0 = arith.constant 0 : i32
    %c0_i32_1 = arith.constant 0 : i32
    return %c0_i32, %c0_i32_0 : i32, i32
  }
  func.func @transform_2(%arg0: i32) -> (i32, i32) {
    %c0_i32 = arith.constant 0 : i32
    %c0_i32_0 = arith.constant 0 : i32
    %c0_i32_1 = arith.constant 0 : i32
    return %c0_i32, %c0_i32_0 : i32, i32
  }
  func.func @transform_3(%arg0: i32) -> (i32, i32) {
    %c0_i32 = arith.constant 0 : i32
    %c0_i32_0 = arith.constant 0 : i32
    return %c0_i32, %arg0 : i32, i32
  }
  func.func @transform_4(%arg0: i32) -> (i32, i32) {
    %c0_i32 = arith.constant 0 : i32
    %c0_i32_0 = arith.constant 0 : i32
    return %c0_i32, %arg0 : i32, i32
  }
  func.func @transform_5(%arg0: i32) -> (i32, i32) {
    %c0_i32 = arith.constant 0 : i32
    %c0_i32_0 = arith.constant 0 : i32
    return %c0_i32, %arg0 : i32, i32
  }
}

</mosaic_0001>

<llo_original>
// kernel: _lambda_.4
$region0: #{_lambda_.4}
  #allocation0 [shape = 'u32[]', space=smem, size = 0x4, offset = 0x4, fixed_abs, tag = 'smem constant byte address 0x4 - core index']
  #allocation1 [shape = 'u32[144,128]{1,0:T(1,128)}', space=vmem, size = 0x12000, scoped, tag = 'internal scratch']
  %s0 = inlined_call_operand.vmem [shape: bf16[2,16,48], index: 0, kind: input, shape index: {}]
  %s1 = inlined_call_operand.vmem [shape: bf16[48,128], index: 1, kind: input, shape index: {}]
  %s2 = inlined_call_operand.vmem [shape: f32[1,128], index: 2, kind: input, shape index: {}]
  %s3 = inlined_call_operand.vmem [shape: f32[1,128], index: 3, kind: input, shape index: {}]
  %s4 = inlined_call_operand.vmem [shape: f32[17,128], index: 4, kind: input, shape index: {}]
  %s5 = inlined_call_operand.vmem [shape: bf16[2,17,128], index: 5, kind: output, shape index: {}]
  %s6 = sld [smem:[#allocation0]]
  $region53: #{_lambda_.4} parent=0
    _
  %s8 = ssub.s32 1, %s6
  %s9 = scalar_select 0, %s8, %s6
  loop: start=0, step=1, limit=4
  $region2: #{_lambda_.4} parent=0 // loop_pre_header
    _
  $region3: #{_lambda_.4} parent=0 // loop_header
    %s11 = sphi 0, %s15
    %p12 = scmp.ge.s32.totalorder %s11, 4
    %s21 = sphi 0, %s23
    %s24 = sphi 0, %s21
    %s25 = sphi 0, %s24
    %s41 = sphi 0, %s25
    %s45 = sphi 0, %s45
    %s47 = sphi 0, %s45
    %s48 = sphi 0, %s47
    %s62 = sphi 0, %s48
    %s66 = sphi 0, %s66
    %s68 = sphi 0, %s66
    %s69 = sphi 0, %s68
    %s83 = sphi 0, %s69
    %s87 = sphi 0, %s87
    %s89 = sphi 0, %s87
    %s90 = sphi 0, %s89
    %s104 = sphi 0, %s90
    %s108 = sphi 0, %s108
    %s110 = sphi 0, %s108
    %s111 = sphi 0, %s110
    %s125 = sphi 0, %s111
    %s131 = sphi 0, %s133
    %s134 = sphi 0, %s131
    %s135 = sphi 0, %s134
    %s151 = sphi 0, %s135
  $region4: #{_lambda_.4} parent=0 // loop_header_branch
    %14 = sbr.rel (%p12) target = $region8
  $region5: #{_lambda_.4} parent=0 // loop_body
    %s16 = ssub.s32 %s11, 1
    %s17 = ssub.s32 %s11, 2
    %s18 = sadd.s32 %s11, 1
    %s19 = ssub.s32 %s11, %s18
    %p20 = scmp.eq.s32.totalorder %s19, 0
    %s22 = sadd.s32 %s21, 1
    %s23 = scalar_select %p20, %s21, %s22
    %p26 = pneg %p20
    %p27 = scmp.eq.s32.totalorder %s11, 1
    %p28 = por %p26, %p27
    %p29 = scmp.ne.s32.totalorder %s21, %s24
    %p30 = scmp.eq.s32.totalorder %s11, 0
    %p31 = por %p29, %p30
    %p32 = scmp.ne.s32.totalorder %s21, %s24
    %p33 = scmp.eq.s32.totalorder %s16, 1
    %p34 = por %p32, %p33
    %p35 = scmp.ne.s32.totalorder %s24, %s25
    %p36 = scmp.eq.s32.totalorder %s16, 0
    %p37 = por %p35, %p36
    %p38 = scmp.ne.s32.totalorder %s24, %s25
    %p39 = scmp.eq.s32.totalorder %s17, 1
    %p40 = por %p38, %p39
    %p42 = scmp.ne.s32.totalorder %s25, %s41
    %p43 = scmp.eq.s32.totalorder %s17, 0
    %p44 = por %p42, %p43
    %s46 = sadd.s32 %s45, 1
    %p49 = scmp.eq.s32.totalorder %s11, 1
    %p50 = scmp.ne.s32.totalorder %s45, %s47
    %p51 = scmp.eq.s32.totalorder %s11, 0
    %p52 = por %p50, %p51
    %p53 = scmp.ne.s32.totalorder %s45, %s47
    %p54 = scmp.eq.s32.totalorder %s16, 1
    %p55 = por %p53, %p54
    %p56 = scmp.ne.s32.totalorder %s47, %s48
    %p57 = scmp.eq.s32.totalorder %s16, 0
    %p58 = por %p56, %p57
    %p59 = scmp.ne.s32.totalorder %s47, %s48
    %p60 = scmp.eq.s32.totalorder %s17, 1
    %p61 = por %p59, %p60
    %p63 = scmp.ne.s32.totalorder %s48, %s62
    %p64 = scmp.eq.s32.totalorder %s17, 0
    %p65 = por %p63, %p64
    %s67 = sadd.s32 %s66, 1
    %p70 = scmp.eq.s32.totalorder %s11, 1
    %p71 = scmp.ne.s32.totalorder %s66, %s68
    %p72 = scmp.eq.s32.totalorder %s11, 0
    %p73 = por %p71, %p72
    %p74 = scmp.ne.s32.totalorder %s66, %s68
    %p75 = scmp.eq.s32.totalorder %s16, 1
    %p76 = por %p74, %p75
    %p77 = scmp.ne.s32.totalorder %s68, %s69
    %p78 = scmp.eq.s32.totalorder %s16, 0
    %p79 = por %p77, %p78
    %p80 = scmp.ne.s32.totalorder %s68, %s69
    %p81 = scmp.eq.s32.totalorder %s17, 1
    %p82 = por %p80, %p81
    %p84 = scmp.ne.s32.totalorder %s69, %s83
    %p85 = scmp.eq.s32.totalorder %s17, 0
    %p86 = por %p84, %p85
    %s88 = sadd.s32 %s87, 1
    %p91 = scmp.eq.s32.totalorder %s11, 1
    %p92 = scmp.ne.s32.totalorder %s87, %s89
    %p93 = scmp.eq.s32.totalorder %s11, 0
    %p94 = por %p92, %p93
    %p95 = scmp.ne.s32.totalorder %s87, %s89
    %p96 = scmp.eq.s32.totalorder %s16, 1
    %p97 = por %p95, %p96
    %p98 = scmp.ne.s32.totalorder %s89, %s90
    %p99 = scmp.eq.s32.totalorder %s16, 0
    %p100 = por %p98, %p99
    %p101 = scmp.ne.s32.totalorder %s89, %s90
    %p102 = scmp.eq.s32.totalorder %s17, 1
    %p103 = por %p101, %p102
    %p105 = scmp.ne.s32.totalorder %s90, %s104
    %p106 = scmp.eq.s32.totalorder %s17, 0
    %p107 = por %p105, %p106
    %s109 = sadd.s32 %s108, 1
    %p112 = scmp.eq.s32.totalorder %s11, 1
    %p113 = scmp.ne.s32.totalorder %s108, %s110
    %p114 = scmp.eq.s32.totalorder %s11, 0
    %p115 = por %p113, %p114
    %p116 = scmp.ne.s32.totalorder %s108, %s110
    %p117 = scmp.eq.s32.totalorder %s16, 1
    %p118 = por %p116, %p117
    %p119 = scmp.ne.s32.totalorder %s110, %s111
    %p120 = scmp.eq.s32.totalorder %s16, 0
    %p121 = por %p119, %p120
    %p122 = scmp.ne.s32.totalorder %s110, %s111
    %p123 = scmp.eq.s32.totalorder %s17, 1
    %p124 = por %p122, %p123
    %p126 = scmp.ne.s32.totalorder %s111, %s125
    %p127 = scmp.eq.s32.totalorder %s17, 0
    %p128 = por %p126, %p127
    %s129 = ssub.s32 %s11, %s18
    %p130 = scmp.eq.s32.totalorder %s129, 0
    %s132 = sadd.s32 %s131, 1
    %s133 = scalar_select %p130, %s131, %s132
    %p136 = pneg %p130
    %p137 = scmp.eq.s32.totalorder %s11, 1
    %p138 = por %p136, %p137
    %p139 = scmp.ne.s32.totalorder %s131, %s134
    %p140 = scmp.eq.s32.totalorder %s11, 0
    %p141 = por %p139, %p140
    %p142 = scmp.ne.s32.totalorder %s131, %s134
    %p143 = scmp.eq.s32.totalorder %s16, 1
    %p144 = por %p142, %p143
    %p145 = scmp.ne.s32.totalorder %s134, %s135
    %p146 = scmp.eq.s32.totalorder %s16, 0
    %p147 = por %p145, %p146
    %p148 = scmp.ne.s32.totalorder %s134, %s135
    %p149 = scmp.eq.s32.totalorder %s17, 1
    %p150 = por %p148, %p149
    %p152 = scmp.ne.s32.totalorder %s135, %s151
    %p153 = scmp.eq.s32.totalorder %s17, 0
    %p154 = por %p152, %p153
    %p155 = scmp.le.s32.totalorder 1, %s11
    %p156 = scmp.lt.s32.totalorder %s11, 3
    %p157 = pnand %p155, %p156
    %p158 = pneg %p157
    // Predicated region
    $region9: #{_lambda_.4} parent=5 // pred_check
      _
    $region10: #{_lambda_.4} parent=5 // pred_check_branch
      %160 = sbr.rel (%p157) target = $region12
    $region11: #{_lambda_.4} parent=5 // pred_region
      %s161 = ssub.s32 %s11, 1
      // Predicated region
      $region13: #{_lambda_.4} parent=11 // pred_check
        %p162 = pneg %p58
      $region14: #{_lambda_.4} parent=11 // pred_check_branch
        %164 = sbr.rel (%p162) target = $region16
      $region15: #{_lambda_.4} parent=11 // pred_region
        _
      $region16: #{_lambda_.4} parent=11 // pred_fallthru
        _
      // Predicated region
      $region17: #{_lambda_.4} parent=11 // pred_check
        %p165 = pneg %p79
      $region18: #{_lambda_.4} parent=11 // pred_check_branch
        %167 = sbr.rel (%p165) target = $region20
      $region19: #{_lambda_.4} parent=11 // pred_region
        _
      $region20: #{_lambda_.4} parent=11 // pred_fallthru
        _
      // Predicated region
      $region21: #{_lambda_.4} parent=11 // pred_check
        %p168 = pneg %p100
      $region22: #{_lambda_.4} parent=11 // pred_check_branch
        %170 = sbr.rel (%p168) target = $region24
      $region23: #{_lambda_.4} parent=11 // pred_region
        _
      $region24: #{_lambda_.4} parent=11 // pred_fallthru
        _
      // Predicated region
      $region25: #{_lambda_.4} parent=11 // pred_check
        %p171 = pneg %p121
      $region26: #{_lambda_.4} parent=11 // pred_check_branch
        %173 = sbr.rel (%p171) target = $region28
      $region27: #{_lambda_.4} parent=11 // pred_region
        _
      $region28: #{_lambda_.4} parent=11 // pred_fallthru
        _
    $region12: #{_lambda_.4} parent=5 // pred_fallthru
      _
    %p174 = scmp.lt.s32.totalorder %s11, 2
    // Predicated region
    $region29: #{_lambda_.4} parent=5 // pred_check
      %p175 = pneg %p174
    $region30: #{_lambda_.4} parent=5 // pred_check_branch
      %177 = sbr.rel (%p175) target = $region32
    $region31: #{_lambda_.4} parent=5 // pred_region
      // Predicated region
      $region33: #{_lambda_.4} parent=31 // pred_check
        %p178 = pneg %p31
      $region34: #{_lambda_.4} parent=31 // pred_check_branch
        %180 = sbr.rel (%p178) target = $region36
      $region35: #{_lambda_.4} parent=31 // pred_region
        %p181 = scmp.lt.s32.totalorder %s11, 1
        %s182 = scalar_select %p181, %s11, 1
        %s183 = smul.addr %s182, 2
        %s184 = smul.addr %s183, 4
        %s185 = scalar_lea.vmem %s0, %s184
      $region36: #{_lambda_.4} parent=31 // pred_fallthru
        _
    $region32: #{_lambda_.4} parent=5 // pred_fallthru
      _
    %p186 = scmp.le.s32.totalorder 1, %s11
    %p187 = scmp.lt.s32.totalorder %s11, 3
    %p188 = pnand %p186, %p187
    %p189 = pneg %p188
    // Predicated region
    $region37: #{_lambda_.4} parent=5 // pred_check
      _
    $region38: #{_lambda_.4} parent=5 // pred_check_branch
      %191 = sbr.rel (%p188) target = $region40
    $region39: #{_lambda_.4} parent=5 // pred_region
      %s192 = ssub.s32 %s11, 1
      %p193 = scmp.lt.s32.totalorder %s16, 1
      %s194 = scalar_select %p193, %s16, 1
      %s195 = smul.addr %s194, 2
      %s196 = smul.addr %s195, 4
      %s197 = scalar_lea.vmem %s0, %s196
      %p198 = pneg %p37
      %p199 = pneg %p34
      %p200 = pneg %p58
      %p201 = pneg %p55
      %p202 = pneg %p79
      %p203 = pneg %p76
      %p204 = pneg %p100
      %p205 = pneg %p97
      %p206 = pneg %p121
      %p207 = pneg %p118
      %p208 = pneg %p147
      %p209 = pneg %p144
      %p210 = scmp.lt.s32.totalorder %s16, 1
      %s211 = scalar_select %p210, %s16, 1
      %s212 = smul.addr %s211, 3
      %s213 = smul.addr %s212, 4
      %s214 = scalar_lea.vmem %s5, %s213
      %p215 = scmp.lt.s32.totalorder %s16, 1
      %s216 = scalar_select %p215, %s16, 1
      %s217 = smul.addr %s216, 2
      %s218 = smul.addr %s217, 4
      %s219 = scalar_lea.vmem %s0, %s218
      %p220 = scmp.lt.s32.totalorder %s16, 1
      %s221 = scalar_select %p220, %s16, 1
      %s222 = smul.addr %s221, 3
      %s223 = smul.addr %s222, 4
      %s224 = scalar_lea.vmem %s5, %s223
      %v226 = vld [vmem:[%s219] sm:$0xf]
      %v227 = vld [vmem:[%s219 + $0x4] sm:$0xf]
      %v228 = vld [vmem:[%s1] sm:$0xf]
      %v229 = vld [vmem:[%s1 + $0x4] sm:$0xf]
      %v230 = vld [vmem:[%s1 + $0x8] sm:$0xf]
      %v231 = vld [vmem:[%s1 + $0xc] sm:$0xf]
      %v232 = vld [vmem:[%s1 + $0x10] sm:$0xf]
      %v233 = vld [vmem:[%s1 + $0x14] sm:$0xf]
      %v234 = vld [vmem:[%s2] sm:$0x1]
      %v236 = vlaneseq
      %v237 = vshrl.u32 %v236, 7
      %v238 = vsub.s32 0, %v237
      %v239 = vrot.slane %v234, %v238
      %v243 = vunpack.c.l.b16 %v226
      %v244 = vunpack.c.l.b16 %v227
      %v245 = vpack.c.b16 %v244, %v243
      %v252 = vunpack.c.l.b16 %v228
      %v253 = vunpack.c.l.b16 %v229
      %v254 = vunpack.c.l.b16 %v230
      %v255 = vunpack.c.l.b16 %v231
      %v256 = vunpack.c.l.b16 %v232
      %v257 = vunpack.c.l.b16 %v233
      %v258 = vpack.c.b16 %v253, %v252
      %v259 = vpack.c.b16 %v255, %v254
      %v260 = vpack.c.b16 %v257, %v256
      %vm264 = vcmask 392192
      %v266 = vsel %vm264, %v245, 0
      %268 = vmatprep.subr.bf16.mxu0 0
      %269 = vmatpush1.bf16.msra.mxu0 0
      %270 = vmatprep.subr.bf16.mxu0 0
      %271 = vmatpush1.bf16.msra.mxu0 0
      %272 = vmatprep.subr.bf16.mxu0 0
      %273 = vmatpush1.bf16.msra.mxu0 0
      %274 = vmatprep.subr.bf16.mxu0 0
      %275 = vmatpush1.bf16.msra.mxu0 0
      %276 = vmatprep.subr.bf16.mxu0 0
      %277 = vmatpush1.bf16.msra.mxu0 0
      %278 = vmatprep.subr.bf16.mxu0 0
      %279 = vmatpush1.bf16.msra.mxu0 %v260
      %280 = vmatprep.subr.bf16.mxu0 0
      %281 = vmatpush1.bf16.msra.mxu0 %v259
      %282 = vmatprep.subr.bf16.mxu0 0
      %283 = vmatpush1.bf16.msra.mxu0 %v258
      %284 = vmatprep.subr.bf16.mxu0 0
      %285 = vmatpush2.bf16.msra.mxu0 0
      %286 = vmatprep.subr.bf16.mxu0 0
      %287 = vmatpush2.bf16.msra.mxu0 0
      %288 = vmatprep.subr.bf16.mxu0 0
      %289 = vmatpush2.bf16.msra.mxu0 0
      %290 = vmatprep.subr.bf16.mxu0 0
      %291 = vmatpush2.bf16.msra.mxu0 0
      %292 = vmatprep.subr.bf16.mxu0 0
      %293 = vmatpush2.bf16.msra.mxu0 0
      %294 = vmatprep.subr.bf16.mxu0 0
      %295 = vmatpush2.bf16.msra.mxu0 0
      %296 = vmatprep.subr.bf16.mxu0 0
      %297 = vmatpush2.bf16.msra.mxu0 0
      %298 = vmatprep.subr.bf16.mxu0 0
      %299 = vmatpush2.bf16.msra.mxu0 0
      %300 = vmatprep.mubr.bf16.mxu0 0
      %301 = vmatmul.mubr.bf16.gmra.mxu0 %v266
      %v302 = vpop.f32.mrf.mxu0
      %v303 = vadd.f32 %v239, %v302
      %v304 = vpop.f32.mrf.mxu0
      %v305 = vpop.f32.mrf.mxu0
      %v306 = vadd.f32 %v239, %v305
      %v307 = vpop.f32.mrf.mxu0
      %308 = vdwg.mxu0
      %v309 = vld [vmem:[%s3] sm:$0x1]
      %v310 = vld [vmem:[%s4] sm:$0x1]
      %v311 = vadd.f32 %v309, %v310
      %v312 = vpack.c.bf16 %v311, %v311
      %vm313 = vcmask 1040384
      %vm314 = vsmask.f32 256
      %vm315 = vmand %vm313, %vm314
      %v316 = vld [vmem:[%s224] sm:$0x1]
      %v317 = vsel %vm315, %v312, %v316
      %318 = vst [vmem:[%s224] sm:$0x1] %v317
      %v319 = vld [vmem:[%s4 + $0x1] sm:$0xff]
      %v320 = vld [vmem:[%s4 + $0x9] sm:$0xff]
      %v321 = vadd.f32 %v303, %v319
      %v322 = vadd.f32 %v306, %v320
      %v323 = vpack.c.bf16 %v322, %v321
      %v325 = vunpack.c.l.b16 %v323
      %v326 = vunpack.c.h.b16 %v323
      %v327 = vpack.c.b16 %v325, %v325
      %v328 = vpack.c.b16 %v326, %v326
      %vm329 = vsmask.f32 4368
      %vm330 = vmor %vm314, %vm329
      %v332 = vshrl.u32 %v327, 16
      %v334 = vrot.slane %v332, 7
      %v335 = vshll.u32 %v327, 16
      %v337 = vor.u32 %v334, %v335
      %v338 = vrot.slane %v334, 4
      %v340 = vshrl.u32 %v328, 16
      %v342 = vrot.slane %v340, 7
      %v343 = vshll.u32 %v328, 16
      %v345 = vor.u32 %v342, %v343
      %v346 = vsel %vm330, %v338, %v345
      %v347 = vrot.slane %v342, 4
      %vm351 = vcmask 1043456
      %vm352 = vsmask.f32 7938
      %vm353 = vmand %vm351, %vm352
      %v354 = vld [vmem:[%s224] sm:$0xf]
      %v355 = vsel %vm353, %v337, %v354
      %356 = vst [vmem:[%s224] sm:$0xf] %v355
      %357 = vst [vmem:[%s224 + $0x4] sm:$0xf] %v346
      %v358 = vld [vmem:[%s224 + $0x8] sm:$0x1]
      %v359 = vsel %vm315, %v347, %v358
      %360 = vst [vmem:[%s224 + $0x8] sm:$0x1] %v359
      %p361 = scmp.lt.s32.totalorder %s16, 1
      %s362 = scalar_select %p361, %s16, 1
      %s363 = smul.addr %s362, 3
      %s364 = smul.addr %s363, 4
      %s365 = scalar_lea.vmem %s5, %s364
      // Predicated region
      $region41: #{_lambda_.4} parent=39 // pred_check
        %p366 = pneg %p144
      $region42: #{_lambda_.4} parent=39 // pred_check_branch
        %368 = sbr.rel (%p366) target = $region44
      $region43: #{_lambda_.4} parent=39 // pred_region
        _
      $region44: #{_lambda_.4} parent=39 // pred_fallthru
        _
    $region40: #{_lambda_.4} parent=5 // pred_fallthru
      _
    %p369 = scmp.le.s32.totalorder 2, %s11
    // Predicated region
    $region45: #{_lambda_.4} parent=5 // pred_check
      %p370 = pneg %p369
    $region46: #{_lambda_.4} parent=5 // pred_check_branch
      %372 = sbr.rel (%p370) target = $region48
    $region47: #{_lambda_.4} parent=5 // pred_region
      %s373 = ssub.s32 %s11, 2
      // Predicated region
      $region49: #{_lambda_.4} parent=47 // pred_check
        %p374 = pneg %p150
      $region50: #{_lambda_.4} parent=47 // pred_check_branch
        %376 = sbr.rel (%p374) target = $region52
      $region51: #{_lambda_.4} parent=47 // pred_region
        %p377 = scmp.lt.s32.totalorder %s17, 1
        %s378 = scalar_select %p377, %s17, 1
        %s379 = smul.addr %s378, 3
        %s380 = smul.addr %s379, 4
        %s381 = scalar_lea.vmem %s5, %s380
      $region52: #{_lambda_.4} parent=47 // pred_fallthru
        _
    $region48: #{_lambda_.4} parent=5 // pred_fallthru
      _
  $region6: #{_lambda_.4} parent=0 // loop_footer
    %s15 = sadd.s32 1, %s11
  $region7: #{_lambda_.4} parent=0 // loop_footer_branch
    %10 = sbr.rel target = $region3
  $region8: #{_lambda_.4} parent=0 // loop_exit
    _

// kernel: _lambda_.7
$region0: #{_lambda_.7}
  #allocation0 [shape = 'u32[]', space=smem, size = 0x4, offset = 0x4, fixed_abs, tag = 'smem constant byte address 0x4 - core index']
  #allocation1 [shape = 'u32[144,128]{1,0:T(1,128)}', space=vmem, size = 0x12000, scoped, tag = 'internal scratch']
  %s0 = inlined_call_operand.vmem [shape: bf16[2,128], index: 0, kind: input, shape index: {}]
  %s1 = inlined_call_operand.vmem [shape: f32[1,128], index: 1, kind: input, shape index: {}]
  %s2 = inlined_call_operand.vmem [shape: f32[1,128], index: 2, kind: input, shape index: {}]
  %s3 = inlined_call_operand.vmem [shape: bf16[128,1024], index: 3, kind: input, shape index: {}]
  %s4 = inlined_call_operand.vmem [shape: f32[1,1024], index: 4, kind: input, shape index: {}]
  %s5 = inlined_call_operand.hbm [shape: f32[2,1024], index: 5, kind: output, shape index: {}]
  %s6 = sld [smem:[#allocation0]]
  $region76: #{_lambda_.7} parent=0
    _
  %s8 = ssub.s32 1, %s6
  %s9 = scalar_select 0, %s8, %s6
  $region1: #{_lambda_.7} parent=0
    #allocation2 [shape = 'u8[262144]{0}', space=vmem, size = 0x40000, scoped, tag = 'input window, operand 3']
    #allocation3 [shape = 'u8[8192]{0}', space=vmem, size = 0x2000, scoped, tag = 'output window, operand 0']
    #allocation4 [shape = 's32[2]{0}', space=sflag, size = 0x8, scoped, tag = 'scoped memory for _lambda_.7']
    %10 = vsyncpa [#allocation4], 0
    %s11 = scalar_lea.sflag [#allocation4], 1
    %12 = vsyncpa %s11, 0
    loop: start=0, step=1, limit=4
    $region2: #{_lambda_.7} parent=1 // loop_pre_header
      _
    $region3: #{_lambda_.7} parent=1 // loop_header
      %s14 = sphi 0, %s18
      %p15 = scmp.ge.s32.totalorder %s14, 4
      %s22 = sphi 0, %s22
      %s24 = sphi 0, %s22
      %s25 = sphi 0, %s24
      %s39 = sphi 0, %s25
      %s43 = sphi 0, %s43
      %s45 = sphi 0, %s43
      %s46 = sphi 0, %s45
      %s60 = sphi 0, %s46
      %s64 = sphi 0, %s64
      %s66 = sphi 0, %s64
      %s67 = sphi 0, %s66
      %s81 = sphi 0, %s67
      %s87 = sphi 0, %s89
      %s90 = sphi 0, %s87
      %s91 = sphi 0, %s90
      %s107 = sphi 0, %s91
      %s113 = sphi 0, %s115
      %s116 = sphi 0, %s113
      %s117 = sphi 0, %s116
      %s133 = sphi 0, %s117
      %s139 = sphi 0, %s141
      %s142 = sphi 0, %s139
      %s143 = sphi 0, %s142
      %s159 = sphi 0, %s143
    $region4: #{_lambda_.7} parent=1 // loop_header_branch
      %17 = sbr.rel (%p15) target = $region8
    $region5: #{_lambda_.7} parent=1 // loop_body
      %s19 = ssub.s32 %s14, 1
      %s20 = ssub.s32 %s14, 2
      %s21 = sadd.s32 %s14, 1
      %s23 = sadd.s32 %s22, 1
      %p26 = scmp.eq.s32.totalorder %s14, 1
      %p27 = scmp.ne.s32.totalorder %s22, %s24
      %p28 = scmp.eq.s32.totalorder %s14, 0
      %p29 = por %p27, %p28
      %p30 = scmp.ne.s32.totalorder %s22, %s24
      %p31 = scmp.eq.s32.totalorder %s19, 1
      %p32 = por %p30, %p31
      %p33 = scmp.ne.s32.totalorder %s24, %s25
      %p34 = scmp.eq.s32.totalorder %s19, 0
      %p35 = por %p33, %p34
      %p36 = scmp.ne.s32.totalorder %s24, %s25
      %p37 = scmp.eq.s32.totalorder %s20, 1
      %p38 = por %p36, %p37
      %p40 = scmp.ne.s32.totalorder %s25, %s39
      %p41 = scmp.eq.s32.totalorder %s20, 0
      %p42 = por %p40, %p41
      %s44 = sadd.s32 %s43, 1
      %p47 = scmp.eq.s32.totalorder %s14, 1
      %p48 = scmp.ne.s32.totalorder %s43, %s45
      %p49 = scmp.eq.s32.totalorder %s14, 0
      %p50 = por %p48, %p49
      %p51 = scmp.ne.s32.totalorder %s43, %s45
      %p52 = scmp.eq.s32.totalorder %s19, 1
      %p53 = por %p51, %p52
      %p54 = scmp.ne.s32.totalorder %s45, %s46
      %p55 = scmp.eq.s32.totalorder %s19, 0
      %p56 = por %p54, %p55
      %p57 = scmp.ne.s32.totalorder %s45, %s46
      %p58 = scmp.eq.s32.totalorder %s20, 1
      %p59 = por %p57, %p58
      %p61 = scmp.ne.s32.totalorder %s46, %s60
      %p62 = scmp.eq.s32.totalorder %s20, 0
      %p63 = por %p61, %p62
      %s65 = sadd.s32 %s64, 1
      %p68 = scmp.eq.s32.totalorder %s14, 1
      %p69 = scmp.ne.s32.totalorder %s64, %s66
      %p70 = scmp.eq.s32.totalorder %s14, 0
      %p71 = por %p69, %p70
      %p72 = scmp.ne.s32.totalorder %s64, %s66
      %p73 = scmp.eq.s32.totalorder %s19, 1
      %p74 = por %p72, %p73
      %p75 = scmp.ne.s32.totalorder %s66, %s67
      %p76 = scmp.eq.s32.totalorder %s19, 0
      %p77 = por %p75, %p76
      %p78 = scmp.ne.s32.totalorder %s66, %s67
      %p79 = scmp.eq.s32.totalorder %s20, 1
      %p80 = por %p78, %p79
      %p82 = scmp.ne.s32.totalorder %s67, %s81
      %p83 = scmp.eq.s32.totalorder %s20, 0
      %p84 = por %p82, %p83
      %s85 = ssub.s32 %s14, %s21
      %p86 = scmp.eq.s32.totalorder %s85, 0
      %s88 = sadd.s32 %s87, 1
      %s89 = scalar_select %p86, %s87, %s88
      %p92 = pneg %p86
      %p93 = scmp.eq.s32.totalorder %s14, 1
      %p94 = por %p92, %p93
      %p95 = scmp.ne.s32.totalorder %s87, %s90
      %p96 = scmp.eq.s32.totalorder %s14, 0
      %p97 = por %p95, %p96
      %p98 = scmp.ne.s32.totalorder %s87, %s90
      %p99 = scmp.eq.s32.totalorder %s19, 1
      %p100 = por %p98, %p99
      %p101 = scmp.ne.s32.totalorder %s90, %s91
      %p102 = scmp.eq.s32.totalorder %s19, 0
      %p103 = por %p101, %p102
      %p104 = scmp.ne.s32.totalorder %s90, %s91
      %p105 = scmp.eq.s32.totalorder %s20, 1
      %p106 = por %p104, %p105
      %p108 = scmp.ne.s32.totalorder %s91, %s107
      %p109 = scmp.eq.s32.totalorder %s20, 0
      %p110 = por %p108, %p109
      %s111 = ssub.s32 %s14, %s21
      %p112 = scmp.eq.s32.totalorder %s111, 0
      %s114 = sadd.s32 %s113, 1
      %s115 = scalar_select %p112, %s113, %s114
      %p118 = pneg %p112
      %p119 = scmp.eq.s32.totalorder %s14, 1
      %p120 = por %p118, %p119
      %p121 = scmp.ne.s32.totalorder %s113, %s116
      %p122 = scmp.eq.s32.totalorder %s14, 0
      %p123 = por %p121, %p122
      %p124 = scmp.ne.s32.totalorder %s113, %s116
      %p125 = scmp.eq.s32.totalorder %s19, 1
      %p126 = por %p124, %p125
      %p127 = scmp.ne.s32.totalorder %s116, %s117
      %p128 = scmp.eq.s32.totalorder %s19, 0
      %p129 = por %p127, %p128
      %p130 = scmp.ne.s32.totalorder %s116, %s117
      %p131 = scmp.eq.s32.totalorder %s20, 1
      %p132 = por %p130, %p131
      %p134 = scmp.ne.s32.totalorder %s117, %s133
      %p135 = scmp.eq.s32.totalorder %s20, 0
      %p136 = por %p134, %p135
      %s137 = ssub.s32 %s14, %s21
      %p138 = scmp.eq.s32.totalorder %s137, 0
      %s140 = sadd.s32 %s139, 1
      %s141 = scalar_select %p138, %s139, %s140
      %p144 = pneg %p138
      %p145 = scmp.eq.s32.totalorder %s14, 1
      %p146 = por %p144, %p145
      %p147 = scmp.ne.s32.totalorder %s139, %s142
      %p148 = scmp.eq.s32.totalorder %s14, 0
      %p149 = por %p147, %p148
      %p150 = scmp.ne.s32.totalorder %s139, %s142
      %p151 = scmp.eq.s32.totalorder %s19, 1
      %p152 = por %p150, %p151
      %p153 = scmp.ne.s32.totalorder %s142, %s143
      %p154 = scmp.eq.s32.totalorder %s19, 0
      %p155 = por %p153, %p154
      %p156 = scmp.ne.s32.totalorder %s142, %s143
      %p157 = scmp.eq.s32.totalorder %s20, 1
      %p158 = por %p156, %p157
      %p160 = scmp.ne.s32.totalorder %s143, %s159
      %p161 = scmp.eq.s32.totalorder %s20, 0
      %p162 = por %p160, %p161
      %p163 = scmp.le.s32.totalorder 1, %s14
      %p164 = scmp.lt.s32.totalorder %s14, 3
      %p165 = pnand %p163, %p164
      %p166 = pneg %p165
      // Predicated region
      $region9: #{_lambda_.7} parent=5 // pred_check
        _
      $region10: #{_lambda_.7} parent=5 // pred_check_branch
        %168 = sbr.rel (%p165) target = $region12
      $region11: #{_lambda_.7} parent=5 // pred_region
        %s169 = ssub.s32 %s14, 1
        // Predicated region
        $region13: #{_lambda_.7} parent=11 // pred_check
          %p170 = pneg %p35
        $region14: #{_lambda_.7} parent=11 // pred_check_branch
          %172 = sbr.rel (%p170) target = $region16
        $region15: #{_lambda_.7} parent=11 // pred_region
          _
        $region16: #{_lambda_.7} parent=11 // pred_fallthru
          _
        // Predicated region
        $region17: #{_lambda_.7} parent=11 // pred_check
          %p173 = pneg %p56
        $region18: #{_lambda_.7} parent=11 // pred_check_branch
          %175 = sbr.rel (%p173) target = $region20
        $region19: #{_lambda_.7} parent=11 // pred_region
          _
        $region20: #{_lambda_.7} parent=11 // pred_fallthru
          _
        // Predicated region
        $region21: #{_lambda_.7} parent=11 // pred_check
          %p176 = pneg %p77
        $region22: #{_lambda_.7} parent=11 // pred_check_branch
          %178 = sbr.rel (%p176) target = $region24
        $region23: #{_lambda_.7} parent=11 // pred_region
          _
        $region24: #{_lambda_.7} parent=11 // pred_fallthru
          _
      $region12: #{_lambda_.7} parent=5 // pred_fallthru
        _
      %p179 = scmp.lt.s32.totalorder %s14, 2
      // Predicated region
      $region25: #{_lambda_.7} parent=5 // pred_check
        %p180 = pneg %p179
      $region26: #{_lambda_.7} parent=5 // pred_check_branch
        %182 = sbr.rel (%p180) target = $region28
      $region27: #{_lambda_.7} parent=5 // pred_region
        // Predicated region
        $region29: #{_lambda_.7} parent=27 // pred_check
          %p183 = pneg %p97
        $region30: #{_lambda_.7} parent=27 // pred_check_branch
          %185 = sbr.rel (%p183) target = $region32
        $region31: #{_lambda_.7} parent=27 // pred_region
          %s186 = sand.u32 %s87, 1
          %s187 = sand.u32 %s87, 1
          %s188 = smul.addr %s187, 256
          %s189 = scalar_lea.vmem [#allocation2], %s188
          %s190 = smul.u32 4, %s14
          %s191 = smul.addr %s190, 4
          %s192 = scalar_lea.vmem %s3, %s191
          // Predicated region
          $region33: #{_lambda_.7} parent=31 // pred_check
            _
          $region34: #{_lambda_.7} parent=31 // pred_check_branch
            %194 = sbr.rel (0) target = $region36
          $region35: #{_lambda_.7} parent=31 // pred_region
            // Predicated region
            $region37: #{_lambda_.7} parent=35 // pred_check
              _
            $region38: #{_lambda_.7} parent=35 // pred_check_branch
              %196 = sbr.rel (0) target = $region40
            $region39: #{_lambda_.7} parent=35 // pred_region
              loop: start=0, step=1, limit=1
              $region41: #{_lambda_.7} parent=39 // loop_pre_header
                _
              $region42: #{_lambda_.7} parent=39 // loop_header
                %s198 = sphi 0, %s202
                %p199 = scmp.ge.s32.totalorder %s198, 1
                %s203 = sphi %s192, %s192
                %s204 = sphi %s189, %s189
              $region43: #{_lambda_.7} parent=39 // loop_header_branch
                %201 = sbr.rel (%p199) target = $region47
              $region44: #{_lambda_.7} parent=39 // loop_body
                %v205 = vld [vmem:[%s203] sm:$0xff]
                %206 = vst [vmem:[%s204] sm:$0xff] %v205
                %v207 = vld [vmem:[%s203 + $0x8] sm:$0xff]
                %208 = vst [vmem:[%s204 + $0x8] sm:$0xff] %v207
                %v209 = vld [vmem:[%s203 + $0x20] sm:$0xff]
                %210 = vst [vmem:[%s204 + $0x10] sm:$0xff] %v209
                %v211 = vld [vmem:[%s203 + $0x28] sm:$0xff]
                %212 = vst [vmem:[%s204 + $0x18] sm:$0xff] %v211
                %v213 = vld [vmem:[%s203 + $0x40] sm:$0xff]
                %214 = vst [vmem:[%s204 + $0x20] sm:$0xff] %v213
                %v215 = vld [vmem:[%s203 + $0x48] sm:$0xff]
                %216 = vst [vmem:[%s204 + $0x28] sm:$0xff] %v215
                %v217 = vld [vmem:[%s203 + $0x60] sm:$0xff]
                %218 = vst [vmem:[%s204 + $0x30] sm:$0xff] %v217
                %v219 = vld [vmem:[%s203 + $0x68] sm:$0xff]
                %220 = vst [vmem:[%s204 + $0x38] sm:$0xff] %v219
                %v221 = vld [vmem:[%s203 + $0x80] sm:$0xff]
                %222 = vst [vmem:[%s204 + $0x40] sm:$0xff] %v221
                %v223 = vld [vmem:[%s203 + $0x88] sm:$0xff]
                %224 = vst [vmem:[%s204 + $0x48] sm:$0xff] %v223
                %v225 = vld [vmem:[%s203 + $0xa0] sm:$0xff]
                %226 = vst [vmem:[%s204 + $0x50] sm:$0xff] %v225
                %v227 = vld [vmem:[%s203 + $0xa8] sm:$0xff]
                %228 = vst [vmem:[%s204 + $0x58] sm:$0xff] %v227
                %v229 = vld [vmem:[%s203 + $0xc0] sm:$0xff]
                %230 = vst [vmem:[%s204 + $0x60] sm:$0xff] %v229
                %v231 = vld [vmem:[%s203 + $0xc8] sm:$0xff]
                %232 = vst [vmem:[%s204 + $0x68] sm:$0xff] %v231
                %v233 = vld [vmem:[%s203 + $0xe0] sm:$0xff]
                %234 = vst [vmem:[%s204 + $0x70] sm:$0xff] %v233
                %v235 = vld [vmem:[%s203 + $0xe8] sm:$0xff]
                %236 = vst [vmem:[%s204 + $0x78] sm:$0xff] %v235
                %v237 = vld [vmem:[%s203 + $0x100] sm:$0xff]
                %238 = vst [vmem:[%s204 + $0x80] sm:$0xff] %v237
                %v239 = vld [vmem:[%s203 + $0x108] sm:$0xff]
                %240 = vst [vmem:[%s204 + $0x88] sm:$0xff] %v239
                %v241 = vld [vmem:[%s203 + $0x120] sm:$0xff]
                %242 = vst [vmem:[%s204 + $0x90] sm:$0xff] %v241
                %v243 = vld [vmem:[%s203 + $0x128] sm:$0xff]
                %244 = vst [vmem:[%s204 + $0x98] sm:$0xff] %v243
                %v245 = vld [vmem:[%s203 + $0x140] sm:$0xff]
                %246 = vst [vmem:[%s204 + $0xa0] sm:$0xff] %v245
                %v247 = vld [vmem:[%s203 + $0x148] sm:$0xff]
                %248 = vst [vmem:[%s204 + $0xa8] sm:$0xff] %v247
                %v249 = vld [vmem:[%s203 + $0x160] sm:$0xff]
                %250 = vst [vmem:[%s204 + $0xb0] sm:$0xff] %v249
                %v251 = vld [vmem:[%s203 + $0x168] sm:$0xff]
                %252 = vst [vmem:[%s204 + $0xb8] sm:$0xff] %v251
                %v253 = vld [vmem:[%s203 + $0x180] sm:$0xff]
                %254 = vst [vmem:[%s204 + $0xc0] sm:$0xff] %v253
                %v255 = vld [vmem:[%s203 + $0x188] sm:$0xff]
                %256 = vst [vmem:[%s204 + $0xc8] sm:$0xff] %v255
                %v257 = vld [vmem:[%s203 + $0x1a0] sm:$0xff]
                %258 = vst [vmem:[%s204 + $0xd0] sm:$0xff] %v257
                %v259 = vld [vmem:[%s203 + $0x1a8] sm:$0xff]
                %260 = vst [vmem:[%s204 + $0xd8] sm:$0xff] %v259
                %v261 = vld [vmem:[%s203 + $0x1c0] sm:$0xff]
                %262 = vst [vmem:[%s204 + $0xe0] sm:$0xff] %v261
                %v263 = vld [vmem:[%s203 + $0x1c8] sm:$0xff]
                %264 = vst [vmem:[%s204 + $0xe8] sm:$0xff] %v263
                %v265 = vld [vmem:[%s203 + $0x1e0] sm:$0xff]
                %266 = vst [vmem:[%s204 + $0xf0] sm:$0xff] %v265
                %v267 = vld [vmem:[%s203 + $0x1e8] sm:$0xff]
                %268 = vst [vmem:[%s204 + $0xf8] sm:$0xff] %v267
              $region45: #{_lambda_.7} parent=39 // loop_footer
                %s202 = sadd.s32 1, %s198
              $region46: #{_lambda_.7} parent=39 // loop_footer_branch
                %197 = sbr.rel target = $region42
              $region47: #{_lambda_.7} parent=39 // loop_exit
                _
            $region40: #{_lambda_.7} parent=35 // pred_fallthru
              _
            // Predicated region
            $region48: #{_lambda_.7} parent=35 // pred_check
              _
            $region49: #{_lambda_.7} parent=35 // pred_check_branch
              %270 = sbr.rel target = $region51
            $region50: #{_lambda_.7} parent=35 // pred_region
              _
            $region51: #{_lambda_.7} parent=35 // pred_fallthru
              _
          $region36: #{_lambda_.7} parent=31 // pred_fallthru
            _
          %271 = vnop
        $region32: #{_lambda_.7} parent=27 // pred_fallthru
          _
        // Predicated region
        $region52: #{_lambda_.7} parent=27 // pred_check
          %p272 = pneg %p123
        $region53: #{_lambda_.7} parent=27 // pred_check_branch
          %274 = sbr.rel (%p272) target = $region55
        $region54: #{_lambda_.7} parent=27 // pred_region
          %s275 = smul.u32 4, %s14
          %p276 = scmp.lt.s32.totalorder %s275, 7
          %s277 = scalar_select %p276, %s275, 7
          %s278 = scalar_lea.vmem %s4, %s277
          %s279 = smul.u32 4, %s14
        $region55: #{_lambda_.7} parent=27 // pred_fallthru
          _
      $region28: #{_lambda_.7} parent=5 // pred_fallthru
        _
      %p280 = scmp.le.s32.totalorder 1, %s14
      %p281 = scmp.lt.s32.totalorder %s14, 3
      %p282 = pnand %p280, %p281
      %p283 = pneg %p282
      // Predicated region
      $region56: #{_lambda_.7} parent=5 // pred_check
        _
      $region57: #{_lambda_.7} parent=5 // pred_check_branch
        %285 = sbr.rel (%p282) target = $region59
      $region58: #{_lambda_.7} parent=5 // pred_region
        %s286 = ssub.s32 %s14, 1
        %s287 = sand.u32 %s90, 1
        %s288 = sand.u32 %s90, 1
        %s289 = smul.addr %s288, 256
        %s290 = scalar_lea.vmem [#allocation2], %s289
        // Predicated region
        $region60: #{_lambda_.7} parent=58 // pred_check
          %p291 = pneg %p103
        $region61: #{_lambda_.7} parent=58 // pred_check_branch
          %293 = sbr.rel (%p291) target = $region63
        $region62: #{_lambda_.7} parent=58 // pred_region
          _
        $region63: #{_lambda_.7} parent=58 // pred_fallthru
          _
        %p294 = pneg %p35
        %p295 = pneg %p32
        %p296 = pneg %p56
        %p297 = pneg %p53
        %p298 = pneg %p77
        %p299 = pneg %p74
        %s300 = sand.u32 %s90, 1
        %s301 = sand.u32 %s90, 1
        %s302 = smul.addr %s301, 256
        %s303 = scalar_lea.vmem [#allocation2], %s302
        %p304 = pneg %p103
        %p305 = pneg %p100
        %s306 = smul.u32 4, %s19
        %p307 = scmp.lt.s32.totalorder %s306, 7
        %s308 = scalar_select %p307, %s306, 7
        %s309 = scalar_lea.vmem %s4, %s308
        %p310 = pneg %p129
        %p311 = pneg %p126
        %p312 = pneg %p155
        %p313 = pneg %p152
        %s314 = sand.u32 %s142, 1
        %s315 = scalar_lea.sflag [#allocation4], %s314
        %s316 = sand.u32 %s142, 1
        %s317 = smul.addr %s316, 8
        %s318 = scalar_lea.vmem [#allocation3], %s317
        %s319 = smul.u32 4, %s19
        %s320 = smul.u32 4, %s19
        %p321 = scmp.lt.s32.totalorder %s320, 7
        %s322 = scalar_select %p321, %s320, 7
        %s323 = scalar_lea.vmem %s4, %s322
        %s324 = smul.u32 4, %s19
        %s325 = smul.u32 4, %s19
        %v327 = vld [vmem:[%s0] sm:$0x1]
        %v328 = vunpack.c.l.bf16 %v327
        %v329 = vld [vmem:[%s1] sm:$0x1]
        %v330 = vld [vmem:[%s2] sm:$0x1]
        %vm331 = vcmask 1041408
        %v332 = vsel %vm331, %v328, 0.0
        %333 = vadd.xlane.f32.xlu0 %v332
        %v334 = vpop.xlane.xlu0 %333
        %v335 = vrcp.pop 128.0
        %v336 = vmul.f32 %v334, %v335
        %v337 = vsub.f32 %v328, %v336
        %v338 = vmul.f32 %v337, %v337
        %v339 = vsel %vm331, %v338, 0.0
        %340 = vadd.xlane.f32.xlu0 %v339
        %v341 = vpop.xlane.xlu0 %340
        %v342 = vmul.f32 %v341, %v335
        %v343 = vadd.f32 %v342, 1e-06
        %v344 = vrsqrt.pop %v343
        %v345 = vmul.f32 %v337, %v344
        %v347 = vlaneseq
        %v348 = vshrl.u32 %v347, 7
        %v349 = vsub.s32 0, %v348
        %v350 = vrot.slane %v329, %v349
        %v352 = vmul.f32 %v345, %v350
        %v354 = vlaneseq
        %v355 = vshrl.u32 %v354, 7
        %v356 = vsub.s32 0, %v355
        %v357 = vrot.slane %v330, %v356
        %v359 = vadd.f32 %v352, %v357
        %v360 = vpack.c.bf16 %v359, %v359
        %v361 = vld [vmem:[%s290] sm:$0xff]
        %v362 = vld [vmem:[%s290 + $0x8] sm:$0xff]
        %v363 = vld [vmem:[%s290 + $0x10] sm:$0xff]
        %v364 = vld [vmem:[%s290 + $0x18] sm:$0xff]
        %v365 = vld [vmem:[%s290 + $0x20] sm:$0xff]
        %v366 = vld [vmem:[%s290 + $0x28] sm:$0xff]
        %v367 = vld [vmem:[%s290 + $0x30] sm:$0xff]
        %v368 = vld [vmem:[%s290 + $0x38] sm:$0xff]
        %v369 = vld [vmem:[%s290 + $0x40] sm:$0xff]
        %v370 = vld [vmem:[%s290 + $0x48] sm:$0xff]
        %v371 = vld [vmem:[%s290 + $0x50] sm:$0xff]
        %v372 = vld [vmem:[%s290 + $0x58] sm:$0xff]
        %v373 = vld [vmem:[%s290 + $0x60] sm:$0xff]
        %v374 = vld [vmem:[%s290 + $0x68] sm:$0xff]
        %v375 = vld [vmem:[%s290 + $0x70] sm:$0xff]
        %v376 = vld [vmem:[%s290 + $0x78] sm:$0xff]
        %v377 = vld [vmem:[%s290 + $0x80] sm:$0xff]
        %v378 = vld [vmem:[%s290 + $0x88] sm:$0xff]
        %v379 = vld [vmem:[%s290 + $0x90] sm:$0xff]
        %v380 = vld [vmem:[%s290 + $0x98] sm:$0xff]
        %v381 = vld [vmem:[%s290 + $0xa0] sm:$0xff]
        %v382 = vld [vmem:[%s290 + $0xa8] sm:$0xff]
        %v383 = vld [vmem:[%s290 + $0xb0] sm:$0xff]
        %v384 = vld [vmem:[%s290 + $0xb8] sm:$0xff]
        %v385 = vld [vmem:[%s290 + $0xc0] sm:$0xff]
        %v386 = vld [vmem:[%s290 + $0xc8] sm:$0xff]
        %v387 = vld [vmem:[%s290 + $0xd0] sm:$0xff]
        %v388 = vld [vmem:[%s290 + $0xd8] sm:$0xff]
        %v389 = vld [vmem:[%s290 + $0xe0] sm:$0xff]
        %v390 = vld [vmem:[%s290 + $0xe8] sm:$0xff]
        %v391 = vld [vmem:[%s290 + $0xf0] sm:$0xff]
        %v392 = vld [vmem:[%s290 + $0xf8] sm:$0xff]
        %v393 = vld [vmem:[%s323] sm:$0xf]
        %v395 = vlaneseq
        %v396 = vshrl.u32 %v395, 7
        %v397 = vsub.s32 0, %v396
        %v398 = vrot.slane %v393, %v397
        %v399 = vlaneseq
        %v400 = vshrl.u32 %v399, 7
        %v401 = vsub.s32 1, %v400
        %v402 = vrot.slane %v393, %v401
        %v403 = vlaneseq
        %v404 = vshrl.u32 %v403, 7
        %v405 = vsub.s32 2, %v404
        %v406 = vrot.slane %v393, %v405
        %v407 = vlaneseq
        %v408 = vshrl.u32 %v407, 7
        %v409 = vsub.s32 3, %v408
        %v410 = vrot.slane %v393, %v409
        %v447 = vunpack.c.l.b16 %v361
        %v448 = vunpack.c.h.b16 %v361
        %v449 = vunpack.c.l.b16 %v362
        %v450 = vunpack.c.h.b16 %v362
        %v451 = vunpack.c.l.b16 %v363
        %v452 = vunpack.c.h.b16 %v363
        %v453 = vunpack.c.l.b16 %v364
        %v454 = vunpack.c.h.b16 %v364
        %v455 = vunpack.c.l.b16 %v365
        %v456 = vunpack.c.h.b16 %v365
        %v457 = vunpack.c.l.b16 %v366
        %v458 = vunpack.c.h.b16 %v366
        %v459 = vunpack.c.l.b16 %v367
        %v460 = vunpack.c.h.b16 %v367
        %v461 = vunpack.c.l.b16 %v368
        %v462 = vunpack.c.h.b16 %v368
        %v463 = vunpack.c.l.b16 %v369
        %v464 = vunpack.c.h.b16 %v369
        %v465 = vunpack.c.l.b16 %v370
        %v466 = vunpack.c.h.b16 %v370
        %v467 = vunpack.c.l.b16 %v371
        %v468 = vunpack.c.h.b16 %v371
        %v469 = vunpack.c.l.b16 %v372
        %v470 = vunpack.c.h.b16 %v372
        %v471 = vunpack.c.l.b16 %v373
        %v472 = vunpack.c.h.b16 %v373
        %v473 = vunpack.c.l.b16 %v374
        %v474 = vunpack.c.h.b16 %v374
        %v475 = vunpack.c.l.b16 %v375
        %v476 = vunpack.c.h.b16 %v375
        %v477 = vunpack.c.l.b16 %v376
        %v478 = vunpack.c.h.b16 %v376
        %v479 = vunpack.c.l.b16 %v377
        %v480 = vunpack.c.h.b16 %v377
        %v481 = vunpack.c.l.b16 %v378
        %v482 = vunpack.c.h.b16 %v378
        %v483 = vunpack.c.l.b16 %v379
        %v484 = vunpack.c.h.b16 %v379
        %v485 = vunpack.c.l.b16 %v380
        %v486 = vunpack.c.h.b16 %v380
        %v487 = vunpack.c.l.b16 %v381
        %v488 = vunpack.c.h.b16 %v381
        %v489 = vunpack.c.l.b16 %v382
        %v490 = vunpack.c.h.b16 %v382
        %v491 = vunpack.c.l.b16 %v383
        %v492 = vunpack.c.h.b16 %v383
        %v493 = vunpack.c.l.b16 %v384
        %v494 = vunpack.c.h.b16 %v384
        %v495 = vunpack.c.l.b16 %v385
        %v496 = vunpack.c.h.b16 %v385
        %v497 = vunpack.c.l.b16 %v386
        %v498 = vunpack.c.h.b16 %v386
        %v499 = vunpack.c.l.b16 %v387
        %v500 = vunpack.c.h.b16 %v387
        %v501 = vunpack.c.l.b16 %v388
        %v502 = vunpack.c.h.b16 %v388
        %v503 = vunpack.c.l.b16 %v389
        %v504 = vunpack.c.h.b16 %v389
        %v505 = vunpack.c.l.b16 %v390
        %v506 = vunpack.c.h.b16 %v390
        %v507 = vunpack.c.l.b16 %v391
        %v508 = vunpack.c.h.b16 %v391
        %v509 = vunpack.c.l.b16 %v392
        %v510 = vunpack.c.h.b16 %v392
        %v511 = vpack.c.b16 %v451, %v447
        %v512 = vpack.c.b16 %v452, %v448
        %v513 = vpack.c.b16 %v453, %v449
        %v514 = vpack.c.b16 %v454, %v450
        %v515 = vpack.c.b16 %v459, %v455
        %v516 = vpack.c.b16 %v460, %v456
        %v517 = vpack.c.b16 %v461, %v457
        %v518 = vpack.c.b16 %v462, %v458
        %v519 = vpack.c.b16 %v467, %v463
        %v520 = vpack.c.b16 %v468, %v464
        %v521 = vpack.c.b16 %v469, %v465
        %v522 = vpack.c.b16 %v470, %v466
        %v523 = vpack.c.b16 %v475, %v471
        %v524 = vpack.c.b16 %v476, %v472
        %v525 = vpack.c.b16 %v477, %v473
        %v526 = vpack.c.b16 %v478, %v474
        %v527 = vpack.c.b16 %v483, %v479
        %v528 = vpack.c.b16 %v484, %v480
        %v529 = vpack.c.b16 %v485, %v481
        %v530 = vpack.c.b16 %v486, %v482
        %v531 = vpack.c.b16 %v491, %v487
        %v532 = vpack.c.b16 %v492, %v488
        %v533 = vpack.c.b16 %v493, %v489
        %v534 = vpack.c.b16 %v494, %v490
        %v535 = vpack.c.b16 %v499, %v495
        %v536 = vpack.c.b16 %v500, %v496
        %v537 = vpack.c.b16 %v501, %v497
        %v538 = vpack.c.b16 %v502, %v498
        %v539 = vpack.c.b16 %v507, %v503
        %v540 = vpack.c.b16 %v508, %v504
        %v541 = vpack.c.b16 %v509, %v505
        %v542 = vpack.c.b16 %v510, %v506
        %575 = vmatprep.subr.bf16.mxu0 %v540
        %576 = vmatpush1.bf16.msra.mxu0 %v539
        %577 = vmatprep.subr.bf16.mxu0 %v536
        %578 = vmatpush1.bf16.msra.mxu0 %v535
        %579 = vmatprep.subr.bf16.mxu0 %v532
        %580 = vmatpush1.bf16.msra.mxu0 %v531
        %581 = vmatprep.subr.bf16.mxu0 %v528
        %582 = vmatpush1.bf16.msra.mxu0 %v527
        %583 = vmatprep.subr.bf16.mxu0 %v524
        %584 = vmatpush1.bf16.msra.mxu0 %v523
        %585 = vmatprep.subr.bf16.mxu0 %v520
        %586 = vmatpush1.bf16.msra.mxu0 %v519
        %587 = vmatprep.subr.bf16.mxu0 %v516
        %588 = vmatpush1.bf16.msra.mxu0 %v515
        %589 = vmatprep.subr.bf16.mxu0 %v512
        %590 = vmatpush1.bf16.msra.mxu0 %v511
        %591 = vmatprep.subr.bf16.mxu0 0
        %592 = vmatpush2.bf16.msra.mxu0 0
        %593 = vmatprep.subr.bf16.mxu0 0
        %594 = vmatpush2.bf16.msra.mxu0 0
        %595 = vmatprep.subr.bf16.mxu0 0
        %596 = vmatpush2.bf16.msra.mxu0 0
        %597 = vmatprep.subr.bf16.mxu0 0
        %598 = vmatpush2.bf16.msra.mxu0 0
        %599 = vmatprep.subr.bf16.mxu0 0
        %600 = vmatpush2.bf16.msra.mxu0 0
        %601 = vmatprep.subr.bf16.mxu0 0
        %602 = vmatpush2.bf16.msra.mxu0 0
        %603 = vmatprep.subr.bf16.mxu0 0
        %604 = vmatpush2.bf16.msra.mxu0 0
        %605 = vmatprep.subr.bf16.mxu0 0
        %606 = vmatpush2.bf16.msra.mxu0 0
        %607 = vmatprep.mubr.bf16.mxu0 0
        %608 = vmatmul.mubr.bf16.gmra.mxu0 %v360
        %v609 = vpop.f32.mrf.mxu0
        %v610 = vadd.f32 %v398, %v609
        %v611 = vpop.f32.mrf.mxu0
        %v612 = vadd.f32 %v402, %v611
        %v613 = vpop.f32.mrf.mxu0
        %v614 = vpop.f32.mrf.mxu0
        %615 = vdwg.mxu0
        %616 = vmatprep.subr.bf16.mxu0 %v542
        %617 = vmatpush1.bf16.msra.mxu0 %v541
        %618 = vmatprep.subr.bf16.mxu0 %v538
        %619 = vmatpush1.bf16.msra.mxu0 %v537
        %620 = vmatprep.subr.bf16.mxu0 %v534
        %621 = vmatpush1.bf16.msra.mxu0 %v533
        %622 = vmatprep.subr.bf16.mxu0 %v530
        %623 = vmatpush1.bf16.msra.mxu0 %v529
        %624 = vmatprep.subr.bf16.mxu0 %v526
        %625 = vmatpush1.bf16.msra.mxu0 %v525
        %626 = vmatprep.subr.bf16.mxu0 %v522
        %627 = vmatpush1.bf16.msra.mxu0 %v521
        %628 = vmatprep.subr.bf16.mxu0 %v518
        %629 = vmatpush1.bf16.msra.mxu0 %v517
        %630 = vmatprep.subr.bf16.mxu0 %v514
        %631 = vmatpush1.bf16.msra.mxu0 %v513
        %632 = vmatprep.subr.bf16.mxu0 0
        %633 = vmatpush2.bf16.msra.mxu0 0
        %634 = vmatprep.subr.bf16.mxu0 0
        %635 = vmatpush2.bf16.msra.mxu0 0
        %636 = vmatprep.subr.bf16.mxu0 0
        %637 = vmatpush2.bf16.msra.mxu0 0
        %638 = vmatprep.subr.bf16.mxu0 0
        %639 = vmatpush2.bf16.msra.mxu0 0
        %640 = vmatprep.subr.bf16.mxu0 0
        %641 = vmatpush2.bf16.msra.mxu0 0
        %642 = vmatprep.subr.bf16.mxu0 0
        %643 = vmatpush2.bf16.msra.mxu0 0
        %644 = vmatprep.subr.bf16.mxu0 0
        %645 = vmatpush2.bf16.msra.mxu0 0
        %646 = vmatprep.subr.bf16.mxu0 0
        %647 = vmatpush2.bf16.msra.mxu0 0
        %648 = vmatprep.mubr.bf16.mxu0 0
        %649 = vmatmul.mubr.bf16.gmra.mxu0 %v360
        %v650 = vpop.f32.mrf.mxu0
        %v651 = vadd.f32 %v406, %v650
        %v652 = vpop.f32.mrf.mxu0
        %v653 = vadd.f32 %v410, %v652
        %v654 = vpop.f32.mrf.mxu0
        %v655 = vpop.f32.mrf.mxu0
        %656 = vdwg.mxu0
        %v661 = vcombine.low %v610, %v612
        %v662 = vcombine.low %v651, %v653
        %v664 = vunpack.c.l.s4 1983009808
        %v665 = vunpack.c.0.s8 %v664
        %v666 = vlaneseq
        %v667 = vshrl.u32 %v666, 7
        %v668 = vsub.s32 %v665, %v667
        %v669 = vrot.slane %v661, %v668
        %v671 = vunpack.c.l.s4 1983009808
        %v672 = vunpack.c.0.s8 %v671
        %v673 = vlaneseq
        %v674 = vshrl.u32 %v673, 7
        %v675 = vsub.s32 %v672, %v674
        %v676 = vrot.slane %v662, %v675
        %v677 = vcombine.low %v669, %v676
        %679 = vst [vmem:[%s318] sm:$0xff] %v677
        %s680 = sand.u32 %s142, 1
        %s681 = scalar_lea.sflag [#allocation4], %s680
        %s682 = sand.u32 %s142, 1
        %s683 = smul.addr %s682, 8
        %s684 = scalar_lea.vmem [#allocation3], %s683
        // Predicated region
        $region64: #{_lambda_.7} parent=58 // pred_check
          %p685 = pneg %p152
        $region65: #{_lambda_.7} parent=58 // pred_check_branch
          %687 = sbr.rel (%p685) target = $region67
        $region66: #{_lambda_.7} parent=58 // pred_region
          %s688 = smul.u32 4, %s19
          %s690 = ssub.s32 128, 128
          %691 = vsyncadd %s681, %s690
          %s692 = smul.addr %s688, 32
          %s693 = scalar_lea.hbm %s5, %s692
          %s695 = sshll.u32 %s684, 4
          %s696 = int_to_ptr.vmem [resolvable:$true] %s695
          %698 = dma.vmem_to_hbm [thread:$0]  %s696, 128, %s693, %s681
        $region67: #{_lambda_.7} parent=58 // pred_fallthru
          _
      $region59: #{_lambda_.7} parent=5 // pred_fallthru
        _
      %p699 = scmp.le.s32.totalorder 2, %s14
      // Predicated region
      $region68: #{_lambda_.7} parent=5 // pred_check
        %p700 = pneg %p699
      $region69: #{_lambda_.7} parent=5 // pred_check_branch
        %702 = sbr.rel (%p700) target = $region71
      $region70: #{_lambda_.7} parent=5 // pred_region
        %s703 = ssub.s32 %s14, 2
        // Predicated region
        $region72: #{_lambda_.7} parent=70 // pred_check
          %p704 = pneg %p158
        $region73: #{_lambda_.7} parent=70 // pred_check_branch
          %706 = sbr.rel (%p704) target = $region75
        $region74: #{_lambda_.7} parent=70 // pred_region
          %s707 = sand.u32 %s143, 1
          %s708 = scalar_lea.sflag [#allocation4], %s707
          %s709 = sand.u32 %s143, 1
          %s710 = smul.addr %s709, 8
          %s711 = scalar_lea.vmem [#allocation3], %s710
          %712 = dma.done %s708, 128
        $region75: #{_lambda_.7} parent=70 // pred_fallthru
          _
      $region71: #{_lambda_.7} parent=5 // pred_fallthru
        _
    $region6: #{_lambda_.7} parent=1 // loop_footer
      %s18 = sadd.s32 1, %s14
    $region7: #{_lambda_.7} parent=1 // loop_footer_branch
      %13 = sbr.rel target = $region3
    $region8: #{_lambda_.7} parent=1 // loop_exit
      _
    %713 = vsyncpa [#allocation4], 1
    %s714 = scalar_lea.sflag [#allocation4], 1
    %715 = vsyncpa %s714, 1

// kernel: _lambda_.5
$region0: #{_lambda_.5}
  #allocation0 [shape = 'u32[]', space=smem, size = 0x4, offset = 0x4, fixed_abs, tag = 'smem constant byte address 0x4 - core index']
  #allocation1 [shape = 'u32[144,128]{1,0:T(1,128)}', space=vmem, size = 0x12000, scoped, tag = 'internal scratch']
  %s0 = inlined_call_operand.vmem [shape: bf16[2,17,128], index: 0, kind: input, shape index: {}]
  %s1 = inlined_call_operand.vmem [shape: f32[1,128], index: 1, kind: input, shape index: {}, may-alias: {1,7}]
  %s2 = inlined_call_operand.vmem [shape: f32[1,128], index: 2, kind: input, shape index: {}, may-alias: {2,6,8,12}]
  %s3 = inlined_call_operand.vmem [shape: bf16[128,384], index: 3, kind: input, shape index: {}]
  %s4 = inlined_call_operand.vmem [shape: f32[1,384], index: 4, kind: input, shape index: {}]
  %s5 = inlined_call_operand.vmem [shape: bf16[128,128], index: 5, kind: input, shape index: {}]
  %s6 = inlined_call_operand.vmem [shape: f32[1,128], index: 6, kind: input, shape index: {}, may-alias: {2,6,8,12}]
  %s7 = inlined_call_operand.vmem [shape: f32[1,128], index: 7, kind: input, shape index: {}, may-alias: {1,7}]
  %s8 = inlined_call_operand.vmem [shape: f32[1,128], index: 8, kind: input, shape index: {}, may-alias: {2,6,8,12}]
  %s9 = inlined_call_operand.vmem [shape: bf16[128,512], index: 9, kind: input, shape index: {}]
  %s10 = inlined_call_operand.vmem [shape: f32[1,512], index: 10, kind: input, shape index: {}]
  %s11 = inlined_call_operand.vmem [shape: bf16[512,128], index: 11, kind: input, shape index: {}]
  %s12 = inlined_call_operand.vmem [shape: f32[1,128], index: 12, kind: input, shape index: {}, may-alias: {2,6,8,12}]
  %s13 = inlined_call_operand.vmem [shape: bf16[2,17,128], index: 13, kind: output, shape index: {}]
  %s14 = sld [smem:[#allocation0]]
  $region85: #{_lambda_.5} parent=0
    _
  %s16 = ssub.s32 1, %s14
  %s17 = scalar_select 0, %s16, %s14
  loop: start=0, step=1, limit=4
  $region2: #{_lambda_.5} parent=0 // loop_pre_header
    _
  $region3: #{_lambda_.5} parent=0 // loop_header
    %s19 = sphi 0, %s23
    %p20 = scmp.ge.s32.totalorder %s19, 4
    %s29 = sphi 0, %s31
    %s32 = sphi 0, %s29
    %s33 = sphi 0, %s32
    %s49 = sphi 0, %s33
    %s53 = sphi 0, %s53
    %s55 = sphi 0, %s53
    %s56 = sphi 0, %s55
    %s70 = sphi 0, %s56
    %s74 = sphi 0, %s74
    %s76 = sphi 0, %s74
    %s77 = sphi 0, %s76
    %s91 = sphi 0, %s77
    %s95 = sphi 0, %s95
    %s97 = sphi 0, %s95
    %s98 = sphi 0, %s97
    %s112 = sphi 0, %s98
    %s116 = sphi 0, %s116
    %s118 = sphi 0, %s116
    %s119 = sphi 0, %s118
    %s133 = sphi 0, %s119
    %s137 = sphi 0, %s137
    %s139 = sphi 0, %s137
    %s140 = sphi 0, %s139
    %s154 = sphi 0, %s140
    %s158 = sphi 0, %s158
    %s160 = sphi 0, %s158
    %s161 = sphi 0, %s160
    %s175 = sphi 0, %s161
    %s179 = sphi 0, %s179
    %s181 = sphi 0, %s179
    %s182 = sphi 0, %s181
    %s196 = sphi 0, %s182
    %s200 = sphi 0, %s200
    %s202 = sphi 0, %s200
    %s203 = sphi 0, %s202
    %s217 = sphi 0, %s203
    %s221 = sphi 0, %s221
    %s223 = sphi 0, %s221
    %s224 = sphi 0, %s223
    %s238 = sphi 0, %s224
    %s242 = sphi 0, %s242
    %s244 = sphi 0, %s242
    %s245 = sphi 0, %s244
    %s259 = sphi 0, %s245
    %s263 = sphi 0, %s263
    %s265 = sphi 0, %s263
    %s266 = sphi 0, %s265
    %s280 = sphi 0, %s266
    %s284 = sphi 0, %s284
    %s286 = sphi 0, %s284
    %s287 = sphi 0, %s286
    %s301 = sphi 0, %s287
    %s307 = sphi 0, %s309
    %s310 = sphi 0, %s307
    %s311 = sphi 0, %s310
    %s327 = sphi 0, %s311
  $region4: #{_lambda_.5} parent=0 // loop_header_branch
    %22 = sbr.rel (%p20) target = $region8
  $region5: #{_lambda_.5} parent=0 // loop_body
    %s24 = ssub.s32 %s19, 1
    %s25 = ssub.s32 %s19, 2
    %s26 = sadd.s32 %s19, 1
    %s27 = ssub.s32 %s19, %s26
    %p28 = scmp.eq.s32.totalorder %s27, 0
    %s30 = sadd.s32 %s29, 1
    %s31 = scalar_select %p28, %s29, %s30
    %p34 = pneg %p28
    %p35 = scmp.eq.s32.totalorder %s19, 1
    %p36 = por %p34, %p35
    %p37 = scmp.ne.s32.totalorder %s29, %s32
    %p38 = scmp.eq.s32.totalorder %s19, 0
    %p39 = por %p37, %p38
    %p40 = scmp.ne.s32.totalorder %s29, %s32
    %p41 = scmp.eq.s32.totalorder %s24, 1
    %p42 = por %p40, %p41
    %p43 = scmp.ne.s32.totalorder %s32, %s33
    %p44 = scmp.eq.s32.totalorder %s24, 0
    %p45 = por %p43, %p44
    %p46 = scmp.ne.s32.totalorder %s32, %s33
    %p47 = scmp.eq.s32.totalorder %s25, 1
    %p48 = por %p46, %p47
    %p50 = scmp.ne.s32.totalorder %s33, %s49
    %p51 = scmp.eq.s32.totalorder %s25, 0
    %p52 = por %p50, %p51
    %s54 = sadd.s32 %s53, 1
    %p57 = scmp.eq.s32.totalorder %s19, 1
    %p58 = scmp.ne.s32.totalorder %s53, %s55
    %p59 = scmp.eq.s32.totalorder %s19, 0
    %p60 = por %p58, %p59
    %p61 = scmp.ne.s32.totalorder %s53, %s55
    %p62 = scmp.eq.s32.totalorder %s24, 1
    %p63 = por %p61, %p62
    %p64 = scmp.ne.s32.totalorder %s55, %s56
    %p65 = scmp.eq.s32.totalorder %s24, 0
    %p66 = por %p64, %p65
    %p67 = scmp.ne.s32.totalorder %s55, %s56
    %p68 = scmp.eq.s32.totalorder %s25, 1
    %p69 = por %p67, %p68
    %p71 = scmp.ne.s32.totalorder %s56, %s70
    %p72 = scmp.eq.s32.totalorder %s25, 0
    %p73 = por %p71, %p72
    %s75 = sadd.s32 %s74, 1
    %p78 = scmp.eq.s32.totalorder %s19, 1
    %p79 = scmp.ne.s32.totalorder %s74, %s76
    %p80 = scmp.eq.s32.totalorder %s19, 0
    %p81 = por %p79, %p80
    %p82 = scmp.ne.s32.totalorder %s74, %s76
    %p83 = scmp.eq.s32.totalorder %s24, 1
    %p84 = por %p82, %p83
    %p85 = scmp.ne.s32.totalorder %s76, %s77
    %p86 = scmp.eq.s32.totalorder %s24, 0
    %p87 = por %p85, %p86
    %p88 = scmp.ne.s32.totalorder %s76, %s77
    %p89 = scmp.eq.s32.totalorder %s25, 1
    %p90 = por %p88, %p89
    %p92 = scmp.ne.s32.totalorder %s77, %s91
    %p93 = scmp.eq.s32.totalorder %s25, 0
    %p94 = por %p92, %p93
    %s96 = sadd.s32 %s95, 1
    %p99 = scmp.eq.s32.totalorder %s19, 1
    %p100 = scmp.ne.s32.totalorder %s95, %s97
    %p101 = scmp.eq.s32.totalorder %s19, 0
    %p102 = por %p100, %p101
    %p103 = scmp.ne.s32.totalorder %s95, %s97
    %p104 = scmp.eq.s32.totalorder %s24, 1
    %p105 = por %p103, %p104
    %p106 = scmp.ne.s32.totalorder %s97, %s98
    %p107 = scmp.eq.s32.totalorder %s24, 0
    %p108 = por %p106, %p107
    %p109 = scmp.ne.s32.totalorder %s97, %s98
    %p110 = scmp.eq.s32.totalorder %s25, 1
    %p111 = por %p109, %p110
    %p113 = scmp.ne.s32.totalorder %s98, %s112
    %p114 = scmp.eq.s32.totalorder %s25, 0
    %p115 = por %p113, %p114
    %s117 = sadd.s32 %s116, 1
    %p120 = scmp.eq.s32.totalorder %s19, 1
    %p121 = scmp.ne.s32.totalorder %s116, %s118
    %p122 = scmp.eq.s32.totalorder %s19, 0
    %p123 = por %p121, %p122
    %p124 = scmp.ne.s32.totalorder %s116, %s118
    %p125 = scmp.eq.s32.totalorder %s24, 1
    %p126 = por %p124, %p125
    %p127 = scmp.ne.s32.totalorder %s118, %s119
    %p128 = scmp.eq.s32.totalorder %s24, 0
    %p129 = por %p127, %p128
    %p130 = scmp.ne.s32.totalorder %s118, %s119
    %p131 = scmp.eq.s32.totalorder %s25, 1
    %p132 = por %p130, %p131
    %p134 = scmp.ne.s32.totalorder %s119, %s133
    %p135 = scmp.eq.s32.totalorder %s25, 0
    %p136 = por %p134, %p135
    %s138 = sadd.s32 %s137, 1
    %p141 = scmp.eq.s32.totalorder %s19, 1
    %p142 = scmp.ne.s32.totalorder %s137, %s139
    %p143 = scmp.eq.s32.totalorder %s19, 0
    %p144 = por %p142, %p143
    %p145 = scmp.ne.s32.totalorder %s137, %s139
    %p146 = scmp.eq.s32.totalorder %s24, 1
    %p147 = por %p145, %p146
    %p148 = scmp.ne.s32.totalorder %s139, %s140
    %p149 = scmp.eq.s32.totalorder %s24, 0
    %p150 = por %p148, %p149
    %p151 = scmp.ne.s32.totalorder %s139, %s140
    %p152 = scmp.eq.s32.totalorder %s25, 1
    %p153 = por %p151, %p152
    %p155 = scmp.ne.s32.totalorder %s140, %s154
    %p156 = scmp.eq.s32.totalorder %s25, 0
    %p157 = por %p155, %p156
    %s159 = sadd.s32 %s158, 1
    %p162 = scmp.eq.s32.totalorder %s19, 1
    %p163 = scmp.ne.s32.totalorder %s158, %s160
    %p164 = scmp.eq.s32.totalorder %s19, 0
    %p165 = por %p163, %p164
    %p166 = scmp.ne.s32.totalorder %s158, %s160
    %p167 = scmp.eq.s32.totalorder %s24, 1
    %p168 = por %p166, %p167
    %p169 = scmp.ne.s32.totalorder %s160, %s161
    %p170 = scmp.eq.s32.totalorder %s24, 0
    %p171 = por %p169, %p170
    %p172 = scmp.ne.s32.totalorder %s160, %s161
    %p173 = scmp.eq.s32.totalorder %s25, 1
    %p174 = por %p172, %p173
    %p176 = scmp.ne.s32.totalorder %s161, %s175
    %p177 = scmp.eq.s32.totalorder %s25, 0
    %p178 = por %p176, %p177
    %s180 = sadd.s32 %s179, 1
    %p183 = scmp.eq.s32.totalorder %s19, 1
    %p184 = scmp.ne.s32.totalorder %s179, %s181
    %p185 = scmp.eq.s32.totalorder %s19, 0
    %p186 = por %p184, %p185
    %p187 = scmp.ne.s32.totalorder %s179, %s181
    %p188 = scmp.eq.s32.totalorder %s24, 1
    %p189 = por %p187, %p188
    %p190 = scmp.ne.s32.totalorder %s181, %s182
    %p191 = scmp.eq.s32.totalorder %s24, 0
    %p192 = por %p190, %p191
    %p193 = scmp.ne.s32.totalorder %s181, %s182
    %p194 = scmp.eq.s32.totalorder %s25, 1
    %p195 = por %p193, %p194
    %p197 = scmp.ne.s32.totalorder %s182, %s196
    %p198 = scmp.eq.s32.totalorder %s25, 0
    %p199 = por %p197, %p198
    %s201 = sadd.s32 %s200, 1
    %p204 = scmp.eq.s32.totalorder %s19, 1
    %p205 = scmp.ne.s32.totalorder %s200, %s202
    %p206 = scmp.eq.s32.totalorder %s19, 0
    %p207 = por %p205, %p206
    %p208 = scmp.ne.s32.totalorder %s200, %s202
    %p209 = scmp.eq.s32.totalorder %s24, 1
    %p210 = por %p208, %p209
    %p211 = scmp.ne.s32.totalorder %s202, %s203
    %p212 = scmp.eq.s32.totalorder %s24, 0
    %p213 = por %p211, %p212
    %p214 = scmp.ne.s32.totalorder %s202, %s203
    %p215 = scmp.eq.s32.totalorder %s25, 1
    %p216 = por %p214, %p215
    %p218 = scmp.ne.s32.totalorder %s203, %s217
    %p219 = scmp.eq.s32.totalorder %s25, 0
    %p220 = por %p218, %p219
    %s222 = sadd.s32 %s221, 1
    %p225 = scmp.eq.s32.totalorder %s19, 1
    %p226 = scmp.ne.s32.totalorder %s221, %s223
    %p227 = scmp.eq.s32.totalorder %s19, 0
    %p228 = por %p226, %p227
    %p229 = scmp.ne.s32.totalorder %s221, %s223
    %p230 = scmp.eq.s32.totalorder %s24, 1
    %p231 = por %p229, %p230
    %p232 = scmp.ne.s32.totalorder %s223, %s224
    %p233 = scmp.eq.s32.totalorder %s24, 0
    %p234 = por %p232, %p233
    %p235 = scmp.ne.s32.totalorder %s223, %s224
    %p236 = scmp.eq.s32.totalorder %s25, 1
    %p237 = por %p235, %p236
    %p239 = scmp.ne.s32.totalorder %s224, %s238
    %p240 = scmp.eq.s32.totalorder %s25, 0
    %p241 = por %p239, %p240
    %s243 = sadd.s32 %s242, 1
    %p246 = scmp.eq.s32.totalorder %s19, 1
    %p247 = scmp.ne.s32.totalorder %s242, %s244
    %p248 = scmp.eq.s32.totalorder %s19, 0
    %p249 = por %p247, %p248
    %p250 = scmp.ne.s32.totalorder %s242, %s244
    %p251 = scmp.eq.s32.totalorder %s24, 1
    %p252 = por %p250, %p251
    %p253 = scmp.ne.s32.totalorder %s244, %s245
    %p254 = scmp.eq.s32.totalorder %s24, 0
    %p255 = por %p253, %p254
    %p256 = scmp.ne.s32.totalorder %s244, %s245
    %p257 = scmp.eq.s32.totalorder %s25, 1
    %p258 = por %p256, %p257
    %p260 = scmp.ne.s32.totalorder %s245, %s259
    %p261 = scmp.eq.s32.totalorder %s25, 0
    %p262 = por %p260, %p261
    %s264 = sadd.s32 %s263, 1
    %p267 = scmp.eq.s32.totalorder %s19, 1
    %p268 = scmp.ne.s32.totalorder %s263, %s265
    %p269 = scmp.eq.s32.totalorder %s19, 0
    %p270 = por %p268, %p269
    %p271 = scmp.ne.s32.totalorder %s263, %s265
    %p272 = scmp.eq.s32.totalorder %s24, 1
    %p273 = por %p271, %p272
    %p274 = scmp.ne.s32.totalorder %s265, %s266
    %p275 = scmp.eq.s32.totalorder %s24, 0
    %p276 = por %p274, %p275
    %p277 = scmp.ne.s32.totalorder %s265, %s266
    %p278 = scmp.eq.s32.totalorder %s25, 1
    %p279 = por %p277, %p278
    %p281 = scmp.ne.s32.totalorder %s266, %s280
    %p282 = scmp.eq.s32.totalorder %s25, 0
    %p283 = por %p281, %p282
    %s285 = sadd.s32 %s284, 1
    %p288 = scmp.eq.s32.totalorder %s19, 1
    %p289 = scmp.ne.s32.totalorder %s284, %s286
    %p290 = scmp.eq.s32.totalorder %s19, 0
    %p291 = por %p289, %p290
    %p292 = scmp.ne.s32.totalorder %s284, %s286
    %p293 = scmp.eq.s32.totalorder %s24, 1
    %p294 = por %p292, %p293
    %p295 = scmp.ne.s32.totalorder %s286, %s287
    %p296 = scmp.eq.s32.totalorder %s24, 0
    %p297 = por %p295, %p296
    %p298 = scmp.ne.s32.totalorder %s286, %s287
    %p299 = scmp.eq.s32.totalorder %s25, 1
    %p300 = por %p298, %p299
    %p302 = scmp.ne.s32.totalorder %s287, %s301
    %p303 = scmp.eq.s32.totalorder %s25, 0
    %p304 = por %p302, %p303
    %s305 = ssub.s32 %s19, %s26
    %p306 = scmp.eq.s32.totalorder %s305, 0
    %s308 = sadd.s32 %s307, 1
    %s309 = scalar_select %p306, %s307, %s308
    %p312 = pneg %p306
    %p313 = scmp.eq.s32.totalorder %s19, 1
    %p314 = por %p312, %p313
    %p315 = scmp.ne.s32.totalorder %s307, %s310
    %p316 = scmp.eq.s32.totalorder %s19, 0
    %p317 = por %p315, %p316
    %p318 = scmp.ne.s32.totalorder %s307, %s310
    %p319 = scmp.eq.s32.totalorder %s24, 1
    %p320 = por %p318, %p319
    %p321 = scmp.ne.s32.totalorder %s310, %s311
    %p322 = scmp.eq.s32.totalorder %s24, 0
    %p323 = por %p321, %p322
    %p324 = scmp.ne.s32.totalorder %s310, %s311
    %p325 = scmp.eq.s32.totalorder %s25, 1
    %p326 = por %p324, %p325
    %p328 = scmp.ne.s32.totalorder %s311, %s327
    %p329 = scmp.eq.s32.totalorder %s25, 0
    %p330 = por %p328, %p329
    %p331 = scmp.le.s32.totalorder 1, %s19
    %p332 = scmp.lt.s32.totalorder %s19, 3
    %p333 = pnand %p331, %p332
    %p334 = pneg %p333
    // Predicated region
    $region9: #{_lambda_.5} parent=5 // pred_check
      _
    $region10: #{_lambda_.5} parent=5 // pred_check_branch
      %336 = sbr.rel (%p333) target = $region12
    $region11: #{_lambda_.5} parent=5 // pred_region
      %s337 = ssub.s32 %s19, 1
      // Predicated region
      $region13: #{_lambda_.5} parent=11 // pred_check
        %p338 = pneg %p66
      $region14: #{_lambda_.5} parent=11 // pred_check_branch
        %340 = sbr.rel (%p338) target = $region16
      $region15: #{_lambda_.5} parent=11 // pred_region
        _
      $region16: #{_lambda_.5} parent=11 // pred_fallthru
        _
      // Predicated region
      $region17: #{_lambda_.5} parent=11 // pred_check
        %p341 = pneg %p87
      $region18: #{_lambda_.5} parent=11 // pred_check_branch
        %343 = sbr.rel (%p341) target = $region20
      $region19: #{_lambda_.5} parent=11 // pred_region
        _
      $region20: #{_lambda_.5} parent=11 // pred_fallthru
        _
      // Predicated region
      $region21: #{_lambda_.5} parent=11 // pred_check
        %p344 = pneg %p108
      $region22: #{_lambda_.5} parent=11 // pred_check_branch
        %346 = sbr.rel (%p344) target = $region24
      $region23: #{_lambda_.5} parent=11 // pred_region
        _
      $region24: #{_lambda_.5} parent=11 // pred_fallthru
        _
      // Predicated region
      $region25: #{_lambda_.5} parent=11 // pred_check
        %p347 = pneg %p129
      $region26: #{_lambda_.5} parent=11 // pred_check_branch
        %349 = sbr.rel (%p347) target = $region28
      $region27: #{_lambda_.5} parent=11 // pred_region
        _
      $region28: #{_lambda_.5} parent=11 // pred_fallthru
        _
      // Predicated region
      $region29: #{_lambda_.5} parent=11 // pred_check
        %p350 = pneg %p150
      $region30: #{_lambda_.5} parent=11 // pred_check_branch
        %352 = sbr.rel (%p350) target = $region32
      $region31: #{_lambda_.5} parent=11 // pred_region
        _
      $region32: #{_lambda_.5} parent=11 // pred_fallthru
        _
      // Predicated region
      $region33: #{_lambda_.5} parent=11 // pred_check
        %p353 = pneg %p171
      $region34: #{_lambda_.5} parent=11 // pred_check_branch
        %355 = sbr.rel (%p353) target = $region36
      $region35: #{_lambda_.5} parent=11 // pred_region
        _
      $region36: #{_lambda_.5} parent=11 // pred_fallthru
        _
      // Predicated region
      $region37: #{_lambda_.5} parent=11 // pred_check
        %p356 = pneg %p192
      $region38: #{_lambda_.5} parent=11 // pred_check_branch
        %358 = sbr.rel (%p356) target = $region40
      $region39: #{_lambda_.5} parent=11 // pred_region
        _
      $region40: #{_lambda_.5} parent=11 // pred_fallthru
        _
      // Predicated region
      $region41: #{_lambda_.5} parent=11 // pred_check
        %p359 = pneg %p213
      $region42: #{_lambda_.5} parent=11 // pred_check_branch
        %361 = sbr.rel (%p359) target = $region44
      $region43: #{_lambda_.5} parent=11 // pred_region
        _
      $region44: #{_lambda_.5} parent=11 // pred_fallthru
        _
      // Predicated region
      $region45: #{_lambda_.5} parent=11 // pred_check
        %p362 = pneg %p234
      $region46: #{_lambda_.5} parent=11 // pred_check_branch
        %364 = sbr.rel (%p362) target = $region48
      $region47: #{_lambda_.5} parent=11 // pred_region
        _
      $region48: #{_lambda_.5} parent=11 // pred_fallthru
        _
      // Predicated region
      $region49: #{_lambda_.5} parent=11 // pred_check
        %p365 = pneg %p255
      $region50: #{_lambda_.5} parent=11 // pred_check_branch
        %367 = sbr.rel (%p365) target = $region52
      $region51: #{_lambda_.5} parent=11 // pred_region
        _
      $region52: #{_lambda_.5} parent=11 // pred_fallthru
        _
      // Predicated region
      $region53: #{_lambda_.5} parent=11 // pred_check
        %p368 = pneg %p276
      $region54: #{_lambda_.5} parent=11 // pred_check_branch
        %370 = sbr.rel (%p368) target = $region56
      $region55: #{_lambda_.5} parent=11 // pred_region
        _
      $region56: #{_lambda_.5} parent=11 // pred_fallthru
        _
      // Predicated region
      $region57: #{_lambda_.5} parent=11 // pred_check
        %p371 = pneg %p297
      $region58: #{_lambda_.5} parent=11 // pred_check_branch
        %373 = sbr.rel (%p371) target = $region60
      $region59: #{_lambda_.5} parent=11 // pred_region
        _
      $region60: #{_lambda_.5} parent=11 // pred_fallthru
        _
    $region12: #{_lambda_.5} parent=5 // pred_fallthru
      _
    %p374 = scmp.lt.s32.totalorder %s19, 2
    // Predicated region
    $region61: #{_lambda_.5} parent=5 // pred_check
      %p375 = pneg %p374
    $region62: #{_lambda_.5} parent=5 // pred_check_branch
      %377 = sbr.rel (%p375) target = $region64
    $region63: #{_lambda_.5} parent=5 // pred_region
      // Predicated region
      $region65: #{_lambda_.5} parent=63 // pred_check
        %p378 = pneg %p39
      $region66: #{_lambda_.5} parent=63 // pred_check_branch
        %380 = sbr.rel (%p378) target = $region68
      $region67: #{_lambda_.5} parent=63 // pred_region
        %p381 = scmp.lt.s32.totalorder %s19, 1
        %s382 = scalar_select %p381, %s19, 1
        %s383 = smul.addr %s382, 3
        %s384 = smul.addr %s383, 4
        %s385 = scalar_lea.vmem %s0, %s384
      $region68: #{_lambda_.5} parent=63 // pred_fallthru
        _
    $region64: #{_lambda_.5} parent=5 // pred_fallthru
      _
    %p386 = scmp.le.s32.totalorder 1, %s19
    %p387 = scmp.lt.s32.totalorder %s19, 3
    %p388 = pnand %p386, %p387
    %p389 = pneg %p388
    // Predicated region
    $region69: #{_lambda_.5} parent=5 // pred_check
      _
    $region70: #{_lambda_.5} parent=5 // pred_check_branch
      %391 = sbr.rel (%p388) target = $region72
    $region71: #{_lambda_.5} parent=5 // pred_region
      %s392 = ssub.s32 %s19, 1
      %p393 = scmp.lt.s32.totalorder %s24, 1
      %s394 = scalar_select %p393, %s24, 1
      %s395 = smul.addr %s394, 3
      %s396 = smul.addr %s395, 4
      %s397 = scalar_lea.vmem %s0, %s396
      %p398 = pneg %p45
      %p399 = pneg %p42
      %p400 = pneg %p66
      %p401 = pneg %p63
      %p402 = pneg %p87
      %p403 = pneg %p84
      %p404 = pneg %p108
      %p405 = pneg %p105
      %p406 = pneg %p129
      %p407 = pneg %p126
      %p408 = pneg %p150
      %p409 = pneg %p147
      %p410 = pneg %p171
      %p411 = pneg %p168
      %p412 = pneg %p192
      %p413 = pneg %p189
      %p414 = pneg %p213
      %p415 = pneg %p210
      %p416 = pneg %p234
      %p417 = pneg %p231
      %p418 = pneg %p255
      %p419 = pneg %p252
      %p420 = pneg %p276
      %p421 = pneg %p273
      %p422 = pneg %p297
      %p423 = pneg %p294
      %p424 = pneg %p323
      %p425 = pneg %p320
      %p426 = scmp.lt.s32.totalorder %s24, 1
      %s427 = scalar_select %p426, %s24, 1
      %s428 = smul.addr %s427, 3
      %s429 = smul.addr %s428, 4
      %s430 = scalar_lea.vmem %s13, %s429
      %p431 = scmp.lt.s32.totalorder %s24, 1
      %s432 = scalar_select %p431, %s24, 1
      %s433 = smul.addr %s432, 3
      %s434 = smul.addr %s433, 4
      %s435 = scalar_lea.vmem %s0, %s434
      %p436 = scmp.lt.s32.totalorder %s24, 1
      %s437 = scalar_select %p436, %s24, 1
      %s438 = smul.addr %s437, 3
      %s439 = smul.addr %s438, 4
      %s440 = scalar_lea.vmem %s13, %s439
      %v442 = vld [vmem:[%s435] sm:$0xf]
      %v443 = vld [vmem:[%s435 + $0x4] sm:$0xf]
      %v444 = vld [vmem:[%s435 + $0x8] sm:$0x1]
      %v445 = vunpack.c.l.bf16 %v442
      %v446 = vunpack.c.l.bf16 %v443
      %v447 = vunpack.c.l.bf16 %v444
      %v448 = vld [vmem:[%s1] sm:$0x1]
      %v449 = vld [vmem:[%s2] sm:$0x1]
      %450 = vadd.xlane.f32.xlu0 %v445
      %v451 = vpop.xlane.xlu0 %450
      %452 = vadd.xlane.f32.xlu0 %v446
      %v453 = vpop.xlane.xlu0 %452
      %vm454 = vcmask 1040384
      %v455 = vsel %vm454, %v447, 0.0
      %456 = vadd.xlane.f32.xlu0 %v455
      %v457 = vpop.xlane.xlu0 %456
      %v458 = vrcp.pop 128.0
      %v459 = vmul.f32 %v451, %v458
      %v460 = vmul.f32 %v453, %v458
      %v461 = vmul.f32 %v457, %v458
      %v462 = vsub.f32 %v445, %v459
      %v463 = vsub.f32 %v446, %v460
      %v464 = vsub.f32 %v447, %v461
      %v465 = vmul.f32 %v462, %v462
      %v466 = vmul.f32 %v463, %v463
      %v467 = vmul.f32 %v464, %v464
      %468 = vadd.xlane.f32.xlu0 %v465
      %v469 = vpop.xlane.xlu0 %468
      %470 = vadd.xlane.f32.xlu0 %v466
      %v471 = vpop.xlane.xlu0 %470
      %v472 = vsel %vm454, %v467, 0.0
      %473 = vadd.xlane.f32.xlu0 %v472
      %v474 = vpop.xlane.xlu0 %473
      %v475 = vmul.f32 %v469, %v458
      %v476 = vmul.f32 %v471, %v458
      %v477 = vmul.f32 %v474, %v458
      %v478 = vadd.f32 %v475, 1e-06
      %v479 = vadd.f32 %v476, 1e-06
      %v480 = vadd.f32 %v477, 1e-06
      %v481 = vrsqrt.pop %v478
      %v482 = vrsqrt.pop %v479
      %v483 = vrsqrt.pop %v480
      %v484 = vmul.f32 %v462, %v481
      %v485 = vmul.f32 %v463, %v482
      %v486 = vmul.f32 %v464, %v483
      %v488 = vlaneseq
      %v489 = vshrl.u32 %v488, 7
      %v490 = vsub.s32 0, %v489
      %v491 = vrot.slane %v448, %v490
      %v493 = vmul.f32 %v484, %v491
      %v494 = vmul.f32 %v485, %v491
      %v495 = vmul.f32 %v486, %v491
      %v497 = vlaneseq
      %v498 = vshrl.u32 %v497, 7
      %v499 = vsub.s32 0, %v498
      %v500 = vrot.slane %v449, %v499
      %v502 = vadd.f32 %v493, %v500
      %v503 = vadd.f32 %v494, %v500
      %v504 = vadd.f32 %v495, %v500
      %v505 = vpack.c.bf16 %v503, %v502
      %v506 = vpack.c.bf16 %v504, %v504
      %v507 = vld [vmem:[%s3] sm:$0xff]
      %v508 = vld [vmem:[%s3 + $0x8] sm:$0xf]
      %v509 = vld [vmem:[%s3 + $0xc] sm:$0xff]
      %v510 = vld [vmem:[%s3 + $0x14] sm:$0xf]
      %v511 = vld [vmem:[%s3 + $0x18] sm:$0xff]
      %v512 = vld [vmem:[%s3 + $0x20] sm:$0xf]
      %v513 = vld [vmem:[%s3 + $0x24] sm:$0xff]
      %v514 = vld [vmem:[%s3 + $0x2c] sm:$0xf]
      %v515 = vld [vmem:[%s3 + $0x30] sm:$0xff]
      %v516 = vld [vmem:[%s3 + $0x38] sm:$0xf]
      %v517 = vld [vmem:[%s3 + $0x3c] sm:$0xff]
      %v518 = vld [vmem:[%s3 + $0x44] sm:$0xf]
      %v519 = vld [vmem:[%s3 + $0x48] sm:$0xff]
      %v520 = vld [vmem:[%s3 + $0x50] sm:$0xf]
      %v521 = vld [vmem:[%s3 + $0x54] sm:$0xff]
      %v522 = vld [vmem:[%s3 + $0x5c] sm:$0xf]
      %v523 = vld [vmem:[%s3 + $0x60] sm:$0xff]
      %v524 = vld [vmem:[%s3 + $0x68] sm:$0xf]
      %v525 = vld [vmem:[%s3 + $0x6c] sm:$0xff]
      %v526 = vld [vmem:[%s3 + $0x74] sm:$0xf]
      %v527 = vld [vmem:[%s3 + $0x78] sm:$0xff]
      %v528 = vld [vmem:[%s3 + $0x80] sm:$0xf]
      %v529 = vld [vmem:[%s3 + $0x84] sm:$0xff]
      %v530 = vld [vmem:[%s3 + $0x8c] sm:$0xf]
      %v531 = vld [vmem:[%s3 + $0x90] sm:$0xff]
      %v532 = vld [vmem:[%s3 + $0x98] sm:$0xf]
      %v533 = vld [vmem:[%s3 + $0x9c] sm:$0xff]
      %v534 = vld [vmem:[%s3 + $0xa4] sm:$0xf]
      %v535 = vld [vmem:[%s3 + $0xa8] sm:$0xff]
      %v536 = vld [vmem:[%s3 + $0xb0] sm:$0xf]
      %v537 = vld [vmem:[%s3 + $0xb4] sm:$0xff]
      %v538 = vld [vmem:[%s3 + $0xbc] sm:$0xf]
      %v539 = vld [vmem:[%s4] sm:$0x7]
      %v541 = vlaneseq
      %v542 = vshrl.u32 %v541, 7
      %v543 = vsub.s32 0, %v542
      %v544 = vrot.slane %v539, %v543
      %v545 = vlaneseq
      %v546 = vshrl.u32 %v545, 7
      %v547 = vsub.s32 1, %v546
      %v548 = vrot.slane %v539, %v547
      %v549 = vlaneseq
      %v550 = vshrl.u32 %v549, 7
      %v551 = vsub.s32 2, %v550
      %v552 = vrot.slane %v539, %v551
      %v588 = vunpack.c.l.b16 %v507
      %v589 = vunpack.c.h.b16 %v507
      %v590 = vunpack.c.l.b16 %v508
      %v591 = vunpack.c.l.b16 %v509
      %v592 = vunpack.c.h.b16 %v509
      %v593 = vunpack.c.l.b16 %v510
      %v594 = vunpack.c.l.b16 %v511
      %v595 = vunpack.c.h.b16 %v511
      %v596 = vunpack.c.l.b16 %v512
      %v597 = vunpack.c.l.b16 %v513
      %v598 = vunpack.c.h.b16 %v513
      %v599 = vunpack.c.l.b16 %v514
      %v600 = vunpack.c.l.b16 %v515
      %v601 = vunpack.c.h.b16 %v515
      %v602 = vunpack.c.l.b16 %v516
      %v603 = vunpack.c.l.b16 %v517
      %v604 = vunpack.c.h.b16 %v517
      %v605 = vunpack.c.l.b16 %v518
      %v606 = vunpack.c.l.b16 %v519
      %v607 = vunpack.c.h.b16 %v519
      %v608 = vunpack.c.l.b16 %v520
      %v609 = vunpack.c.l.b16 %v521
      %v610 = vunpack.c.h.b16 %v521
      %v611 = vunpack.c.l.b16 %v522
      %v612 = vunpack.c.l.b16 %v523
      %v613 = vunpack.c.h.b16 %v523
      %v614 = vunpack.c.l.b16 %v524
      %v615 = vunpack.c.l.b16 %v525
      %v616 = vunpack.c.h.b16 %v525
      %v617 = vunpack.c.l.b16 %v526
      %v618 = vunpack.c.l.b16 %v527
      %v619 = vunpack.c.h.b16 %v527
      %v620 = vunpack.c.l.b16 %v528
      %v621 = vunpack.c.l.b16 %v529
      %v622 = vunpack.c.h.b16 %v529
      %v623 = vunpack.c.l.b16 %v530
      %v624 = vunpack.c.l.b16 %v531
      %v625 = vunpack.c.h.b16 %v531
      %v626 = vunpack.c.l.b16 %v532
      %v627 = vunpack.c.l.b16 %v533
      %v628 = vunpack.c.h.b16 %v533
      %v629 = vunpack.c.l.b16 %v534
      %v630 = vunpack.c.l.b16 %v535
      %v631 = vunpack.c.h.b16 %v535
      %v632 = vunpack.c.l.b16 %v536
      %v633 = vunpack.c.l.b16 %v537
      %v634 = vunpack.c.h.b16 %v537
      %v635 = vunpack.c.l.b16 %v538
      %v636 = vpack.c.b16 %v591, %v588
      %v637 = vpack.c.b16 %v592, %v589
      %v638 = vpack.c.b16 %v593, %v590
      %v639 = vpack.c.b16 %v597, %v594
      %v640 = vpack.c.b16 %v598, %v595
      %v641 = vpack.c.b16 %v599, %v596
      %v642 = vpack.c.b16 %v603, %v600
      %v643 = vpack.c.b16 %v604, %v601
      %v644 = vpack.c.b16 %v605, %v602
      %v645 = vpack.c.b16 %v609, %v606
      %v646 = vpack.c.b16 %v610, %v607
      %v647 = vpack.c.b16 %v611, %v608
      %v648 = vpack.c.b16 %v615, %v612
      %v649 = vpack.c.b16 %v616, %v613
      %v650 = vpack.c.b16 %v617, %v614
      %v651 = vpack.c.b16 %v621, %v618
      %v652 = vpack.c.b16 %v622, %v619
      %v653 = vpack.c.b16 %v623, %v620
      %v654 = vpack.c.b16 %v627, %v624
      %v655 = vpack.c.b16 %v628, %v625
      %v656 = vpack.c.b16 %v629, %v626
      %v657 = vpack.c.b16 %v633, %v630
      %v658 = vpack.c.b16 %v634, %v631
      %v659 = vpack.c.b16 %v635, %v632
      %684 = vmatprep.subr.bf16.mxu0 %v658
      %685 = vmatpush1.bf16.msra.mxu0 %v657
      %686 = vmatprep.subr.bf16.mxu0 %v655
      %687 = vmatpush1.bf16.msra.mxu0 %v654
      %688 = vmatprep.subr.bf16.mxu0 %v652
      %689 = vmatpush1.bf16.msra.mxu0 %v651
      %690 = vmatprep.subr.bf16.mxu0 %v649
      %691 = vmatpush1.bf16.msra.mxu0 %v648
      %692 = vmatprep.subr.bf16.mxu0 %v646
      %693 = vmatpush1.bf16.msra.mxu0 %v645
      %694 = vmatprep.subr.bf16.mxu0 %v643
      %695 = vmatpush1.bf16.msra.mxu0 %v642
      %696 = vmatprep.subr.bf16.mxu0 %v640
      %697 = vmatpush1.bf16.msra.mxu0 %v639
      %698 = vmatprep.subr.bf16.mxu0 %v637
      %699 = vmatpush1.bf16.msra.mxu0 %v636
      %700 = vmatprep.subr.bf16.mxu0 0
      %701 = vmatpush2.bf16.msra.mxu0 0
      %702 = vmatprep.subr.bf16.mxu0 0
      %703 = vmatpush2.bf16.msra.mxu0 0
      %704 = vmatprep.subr.bf16.mxu0 0
      %705 = vmatpush2.bf16.msra.mxu0 0
      %706 = vmatprep.subr.bf16.mxu0 0
      %707 = vmatpush2.bf16.msra.mxu0 0
      %708 = vmatprep.subr.bf16.mxu0 0
      %709 = vmatpush2.bf16.msra.mxu0 0
      %710 = vmatprep.subr.bf16.mxu0 0
      %711 = vmatpush2.bf16.msra.mxu0 0
      %712 = vmatprep.subr.bf16.mxu0 0
      %713 = vmatpush2.bf16.msra.mxu0 0
      %714 = vmatprep.subr.bf16.mxu0 0
      %715 = vmatpush2.bf16.msra.mxu0 0
      %716 = vmatprep.mubr.bf16.mxu0 0
      %717 = vmatmul.mubr.bf16.gmra.mxu0 %v505
      %v718 = vpop.f32.mrf.mxu0
      %v719 = vadd.f32 %v544, %v718
      %v720 = vpop.f32.mrf.mxu0
      %v721 = vadd.f32 %v548, %v720
      %v722 = vpop.f32.mrf.mxu0
      %v723 = vadd.f32 %v544, %v722
      %v724 = vpop.f32.mrf.mxu0
      %v725 = vadd.f32 %v548, %v724
      %726 = vmatprep.mubr.bf16.mxu0 0
      %727 = vmatmul.mubr.bf16.gmra.mxu0 %v506
      %v728 = vpop.f32.mrf.mxu0
      %v729 = vadd.f32 %v544, %v728
      %v730 = vpop.f32.mrf.mxu0
      %v731 = vadd.f32 %v548, %v730
      %v732 = vpop.f32.mrf.mxu0
      %v733 = vpop.f32.mrf.mxu0
      %734 = vdwg.mxu0
      %735 = vmatprep.subr.bf16.mxu0 0
      %736 = vmatpush1.bf16.msra.mxu0 %v659
      %737 = vmatprep.subr.bf16.mxu0 0
      %738 = vmatpush1.bf16.msra.mxu0 %v656
      %739 = vmatprep.subr.bf16.mxu0 0
      %740 = vmatpush1.bf16.msra.mxu0 %v653
      %741 = vmatprep.subr.bf16.mxu0 0
      %742 = vmatpush1.bf16.msra.mxu0 %v650
      %743 = vmatprep.subr.bf16.mxu0 0
      %744 = vmatpush1.bf16.msra.mxu0 %v647
      %745 = vmatprep.subr.bf16.mxu0 0
      %746 = vmatpush1.bf16.msra.mxu0 %v644
      %747 = vmatprep.subr.bf16.mxu0 0
      %748 = vmatpush1.bf16.msra.mxu0 %v641
      %749 = vmatprep.subr.bf16.mxu0 0
      %750 = vmatpush1.bf16.msra.mxu0 %v638
      %751 = vmatprep.subr.bf16.mxu0 0
      %752 = vmatpush2.bf16.msra.mxu0 0
      %753 = vmatprep.subr.bf16.mxu0 0
      %754 = vmatpush2.bf16.msra.mxu0 0
      %755 = vmatprep.subr.bf16.mxu0 0
      %756 = vmatpush2.bf16.msra.mxu0 0
      %757 = vmatprep.subr.bf16.mxu0 0
      %758 = vmatpush2.bf16.msra.mxu0 0
      %759 = vmatprep.subr.bf16.mxu0 0
      %760 = vmatpush2.bf16.msra.mxu0 0
      %761 = vmatprep.subr.bf16.mxu0 0
      %762 = vmatpush2.bf16.msra.mxu0 0
      %763 = vmatprep.subr.bf16.mxu0 0
      %764 = vmatpush2.bf16.msra.mxu0 0
      %765 = vmatprep.subr.bf16.mxu0 0
      %766 = vmatpush2.bf16.msra.mxu0 0
      %767 = vmatprep.mubr.bf16.mxu0 0
      %768 = vmatmul.mubr.bf16.gmra.mxu0 %v505
      %v769 = vpop.f32.mrf.mxu0
      %v770 = vadd.f32 %v552, %v769
      %v771 = vpop.f32.mrf.mxu0
      %v772 = vpop.f32.mrf.mxu0
      %v773 = vadd.f32 %v552, %v772
      %v774 = vpop.f32.mrf.mxu0
      %775 = vmatprep.mubr.bf16.mxu0 0
      %776 = vmatmul.mubr.bf16.gmra.mxu0 %v506
      %v777 = vpop.f32.mrf.mxu0
      %v778 = vadd.f32 %v552, %v777
      %v779 = vpop.f32.mrf.mxu0
      %v780 = vpop.f32.mrf.mxu0
      %v781 = vpop.f32.mrf.mxu0
      %782 = vdwg.mxu0
      %vm783 = vcmask 261120
      %v785 = vsel %vm783, %v719, 0
      %v788 = vsel %vm783, %v723, 0
      %v791 = vsel %vm783, %v729, 0
      %v794 = vsel %vm783, %v721, 0
      %v797 = vsel %vm783, %v725, 0
      %v800 = vsel %vm783, %v731, 0
      %802 = vmatprep.subr.mxu0 0.0
      %803 = vmatpush1.xpose.msra.mxu0 0.0
      %804 = vmatprep.subr.mxu0 0.0
      %805 = vmatpush1.xpose.msra.mxu0 0.0
      %806 = vmatprep.subr.mxu0 0.0
      %807 = vmatpush1.xpose.msra.mxu0 0.0
      %808 = vmatprep.subr.mxu0 0.0
      %809 = vmatpush1.xpose.msra.mxu0 0.0
      %810 = vmatprep.subr.mxu0 0.0
      %811 = vmatpush1.xpose.msra.mxu0 0.0
      %812 = vmatprep.subr.mxu0 0.0
      %813 = vmatpush1.xpose.msra.mxu0 0.0
      %814 = vmatprep.subr.mxu0 0.0
      %815 = vmatpush1.xpose.msra.mxu0 0.0
      %816 = vmatprep.subr.mxu0 0.0
      %817 = vmatpush1.xpose.msra.mxu0 0.0
      %818 = vmatprep.subr.mxu0 0.0
      %819 = vmatpush1.xpose.msra.mxu0 0.0
      %820 = vmatprep.subr.mxu0 0.0
      %821 = vmatpush1.xpose.msra.mxu0 0.0
      %822 = vmatprep.subr.mxu0 0.0
      %823 = vmatpush1.xpose.msra.mxu0 0.0
      %824 = vmatprep.subr.mxu0 0.0
      %825 = vmatpush1.xpose.msra.mxu0 0.0
      %826 = vmatprep.subr.mxu0 0.0
      %827 = vmatpush1.xpose.msra.mxu0 0.0
      %828 = vmatprep.subr.mxu0 0.0
      %829 = vmatpush1.xpose.msra.mxu0 %v800
      %830 = vmatprep.subr.mxu0 0.0
      %831 = vmatpush1.xpose.msra.mxu0 %v797
      %832 = vmatprep.subr.mxu0 0.0
      %833 = vmatpush1.xpose.msra.mxu0 %v794
      %834 = vmatprep.subr.mxu0 0.0
      %835 = vmatpush2.xpose.msra.mxu0 0.0
      %836 = vmatprep.subr.mxu0 0.0
      %837 = vmatpush2.xpose.msra.mxu0 0.0
      %838 = vmatprep.subr.mxu0 0.0
      %839 = vmatpush2.xpose.msra.mxu0 0.0
      %840 = vmatprep.subr.mxu0 0.0
      %841 = vmatpush2.xpose.msra.mxu0 0.0
      %842 = vmatprep.subr.mxu0 0.0
      %843 = vmatpush2.xpose.msra.mxu0 0.0
      %844 = vmatprep.subr.mxu0 0.0
      %845 = vmatpush2.xpose.msra.mxu0 0.0
      %846 = vmatprep.subr.mxu0 0.0
      %847 = vmatpush2.xpose.msra.mxu0 0.0
      %848 = vmatprep.subr.mxu0 0.0
      %849 = vmatpush2.xpose.msra.mxu0 0.0
      %850 = vmatprep.subr.mxu0 0.0
      %851 = vmatpush2.xpose.msra.mxu0 0.0
      %852 = vmatprep.subr.mxu0 0.0
      %853 = vmatpush2.xpose.msra.mxu0 0.0
      %854 = vmatprep.subr.mxu0 0.0
      %855 = vmatpush2.xpose.msra.mxu0 0.0
      %856 = vmatprep.subr.mxu0 0.0
      %857 = vmatpush2.xpose.msra.mxu0 0.0
      %858 = vmatprep.subr.mxu0 0.0
      %859 = vmatpush2.xpose.msra.mxu0 0.0
      %860 = vmatprep.subr.mxu0 0.0
      %861 = vmatpush2.xpose.msra.mxu0 0.0
      %862 = vmatprep.subr.mxu0 0.0
      %863 = vmatpush2.xpose.msra.mxu0 0.0
      %864 = vmatprep.subr.mxu0 0.0
      %865 = vmatpush2.xpose.msra.mxu0 0.0
      %866 = vmatprep.mubr.f32.mxu0 0.0
      %867 = vmatmul.mubr.f32.gmra.mxu0 %v785
      %v868 = vpop.f32.mrf.mxu0
      %v869 = vadd.f32 0.0, %v868
      %v870 = vpop.f32.mrf.mxu0
      %871 = vmatprep.mubr.f32.mxu0 0.0
      %872 = vmatmul.mubr.f32.gmra.mxu0 %v788
      %v873 = vpop.f32.mrf.mxu0
      %v874 = vadd.f32 0.0, %v873
      %v875 = vpop.f32.mrf.mxu0
      %876 = vmatprep.mubr.f32.mxu0 0.0
      %877 = vmatmul.mubr.f32.gmra.mxu0 %v791
      %v878 = vpop.f32.mrf.mxu0
      %v879 = vadd.f32 0.0, %v878
      %v880 = vpop.f32.mrf.mxu0
      %881 = vdwg.mxu0
      %v882 = vmul.f32 %v869, 0.17677669
      %v883 = vmul.f32 %v874, 0.17677669
      %v884 = vmul.f32 %v879, 0.17677669
      %vm885 = vcmask 138240
      %v886 = vsel %vm885, %v882, -inf
      %887 = vmax.xlane.f32.xlu0 %v886
      %v888 = vpop.xlane.xlu0 %887
      %v889 = vsel %vm885, %v883, -inf
      %890 = vmax.xlane.f32.xlu0 %v889
      %v891 = vpop.xlane.xlu0 %890
      %vm892 = vcmask 131072
      %v893 = vsel %vm892, %v884, -inf
      %894 = vmax.xlane.f32.xlu0 %v893
      %v895 = vpop.xlane.xlu0 %894
      %v896 = vsub.f32 %v882, %v888
      %v897 = vsub.f32 %v883, %v891
      %v898 = vsub.f32 %v884, %v895
      %v899 = vmul.f32 %v896, 1.442695
      %v900 = vpow.pop %v899
      %v901 = vmul.f32 %v897, 1.442695
      %v902 = vpow.pop %v901
      %v903 = vmul.f32 %v898, 1.442695
      %v904 = vpow.pop %v903
      %v905 = vsel %vm885, %v900, 0.0
      %906 = vadd.xlane.f32.xlu0 %v905
      %v907 = vpop.xlane.xlu0 %906
      %v908 = vsel %vm885, %v902, 0.0
      %909 = vadd.xlane.f32.xlu0 %v908
      %v910 = vpop.xlane.xlu0 %909
      %v911 = vsel %vm892, %v904, 0.0
      %912 = vadd.xlane.f32.xlu0 %v911
      %v913 = vpop.xlane.xlu0 %912
      %v914 = vrcp.pop %v907
      %v915 = vrcp.pop %v910
      %v916 = vrcp.pop %v913
      %v917 = vmul.f32 %v900, %v914
      %v918 = vmul.f32 %v902, %v915
      %v919 = vmul.f32 %v904, %v916
      %v921 = vsel %vm885, %v917, 0
      %v924 = vsel %vm885, %v918, 0
      %v927 = vsel %vm885, %v919, 0
      %v930 = vsel %vm454, %v778, 0
      %932 = vmatprep.subr.mxu0 0.0
      %933 = vmatpush1.msra.mxu0 0.0
      %934 = vmatprep.subr.mxu0 0.0
      %935 = vmatpush1.msra.mxu0 0.0
      %936 = vmatprep.subr.mxu0 0.0
      %937 = vmatpush1.msra.mxu0 0.0
      %938 = vmatprep.subr.mxu0 0.0
      %939 = vmatpush1.msra.mxu0 0.0
      %940 = vmatprep.subr.mxu0 0.0
      %941 = vmatpush1.msra.mxu0 0.0
      %942 = vmatprep.subr.mxu0 0.0
      %943 = vmatpush1.msra.mxu0 0.0
      %944 = vmatprep.subr.mxu0 0.0
      %945 = vmatpush1.msra.mxu0 0.0
      %946 = vmatprep.subr.mxu0 0.0
      %947 = vmatpush1.msra.mxu0 0.0
      %948 = vmatprep.subr.mxu0 0.0
      %949 = vmatpush1.msra.mxu0 0.0
      %950 = vmatprep.subr.mxu0 0.0
      %951 = vmatpush1.msra.mxu0 0.0
      %952 = vmatprep.subr.mxu0 0.0
      %953 = vmatpush1.msra.mxu0 0.0
      %954 = vmatprep.subr.mxu0 0.0
      %955 = vmatpush1.msra.mxu0 0.0
      %956 = vmatprep.subr.mxu0 0.0
      %957 = vmatpush1.msra.mxu0 0.0
      %958 = vmatprep.subr.mxu0 0.0
      %959 = vmatpush1.msra.mxu0 %v930
      %960 = vmatprep.subr.mxu0 0.0
      %961 = vmatpush1.msra.mxu0 %v773
      %962 = vmatprep.subr.mxu0 0.0
      %963 = vmatpush1.msra.mxu0 %v770
      %964 = vmatprep.subr.mxu0 0.0
      %965 = vmatpush2.msra.mxu0 0.0
      %966 = vmatprep.subr.mxu0 0.0
      %967 = vmatpush2.msra.mxu0 0.0
      %968 = vmatprep.subr.mxu0 0.0
      %969 = vmatpush2.msra.mxu0 0.0
      %970 = vmatprep.subr.mxu0 0.0
      %971 = vmatpush2.msra.mxu0 0.0
      %972 = vmatprep.subr.mxu0 0.0
      %973 = vmatpush2.msra.mxu0 0.0
      %974 = vmatprep.subr.mxu0 0.0
      %975 = vmatpush2.msra.mxu0 0.0
      %976 = vmatprep.subr.mxu0 0.0
      %977 = vmatpush2.msra.mxu0 0.0
      %978 = vmatprep.subr.mxu0 0.0
      %979 = vmatpush2.msra.mxu0 0.0
      %980 = vmatprep.subr.mxu0 0.0
      %981 = vmatpush2.msra.mxu0 0.0
      %982 = vmatprep.subr.mxu0 0.0
      %983 = vmatpush2.msra.mxu0 0.0
      %984 = vmatprep.subr.mxu0 0.0
      %985 = vmatpush2.msra.mxu0 0.0
      %986 = vmatprep.subr.mxu0 0.0
      %987 = vmatpush2.msra.mxu0 0.0
      %988 = vmatprep.subr.mxu0 0.0
      %989 = vmatpush2.msra.mxu0 0.0
      %990 = vmatprep.subr.mxu0 0.0
      %991 = vmatpush2.msra.mxu0 0.0
      %992 = vmatprep.subr.mxu0 0.0
      %993 = vmatpush2.msra.mxu0 0.0
      %994 = vmatprep.subr.mxu0 0.0
      %995 = vmatpush2.msra.mxu0 0.0
      %996 = vmatprep.mubr.f32.mxu0 0.0
      %997 = vmatmul.mubr.f32.gmra.mxu0 %v921
      %v998 = vpop.f32.mrf.mxu0
      %v999 = vadd.f32 0.0, %v998
      %v1000 = vpop.f32.mrf.mxu0
      %1001 = vmatprep.mubr.f32.mxu0 0.0
      %1002 = vmatmul.mubr.f32.gmra.mxu0 %v924
      %v1003 = vpop.f32.mrf.mxu0
      %v1004 = vadd.f32 0.0, %v1003
      %v1005 = vpop.f32.mrf.mxu0
      %1006 = vmatprep.mubr.f32.mxu0 0.0
      %1007 = vmatmul.mubr.f32.gmra.mxu0 %v927
      %v1008 = vpop.f32.mrf.mxu0
      %v1009 = vadd.f32 0.0, %v1008
      %v1010 = vpop.f32.mrf.mxu0
      %1011 = vdwg.mxu0
      %1012 = vrot.lane.b32.xlu0 %v719, 96
      %v1013 = vpop.permute.xlu0 %1012
      %1014 = vrot.lane.b32.xlu0 %v723, 96
      %v1015 = vpop.permute.xlu0 %1014
      %1016 = vrot.lane.b32.xlu0 %v729, 96
      %v1017 = vpop.permute.xlu0 %1016
      %1018 = vrot.lane.b32.xlu0 %v721, 96
      %v1019 = vpop.permute.xlu0 %1018
      %1020 = vrot.lane.b32.xlu0 %v725, 96
      %v1021 = vpop.permute.xlu0 %1020
      %1022 = vrot.lane.b32.xlu0 %v731, 96
      %v1023 = vpop.permute.xlu0 %1022
      %v1024 = vsel %vm783, %v1013, 0
      %v1026 = vsel %vm783, %v1015, 0
      %v1028 = vsel %vm783, %v1017, 0
      %v1030 = vsel %vm783, %v1019, 0
      %v1032 = vsel %vm783, %v1021, 0
      %v1034 = vsel %vm783, %v1023, 0
      %1036 = vmatprep.subr.mxu0 0.0
      %1037 = vmatpush1.xpose.msra.mxu0 0.0
      %1038 = vmatprep.subr.mxu0 0.0
      %1039 = vmatpush1.xpose.msra.mxu0 0.0
      %1040 = vmatprep.subr.mxu0 0.0
      %1041 = vmatpush1.xpose.msra.mxu0 0.0
      %1042 = vmatprep.subr.mxu0 0.0
      %1043 = vmatpush1.xpose.msra.mxu0 0.0
      %1044 = vmatprep.subr.mxu0 0.0
      %1045 = vmatpush1.xpose.msra.mxu0 0.0
      %1046 = vmatprep.subr.mxu0 0.0
      %1047 = vmatpush1.xpose.msra.mxu0 0.0
      %1048 = vmatprep.subr.mxu0 0.0
      %1049 = vmatpush1.xpose.msra.mxu0 0.0
      %1050 = vmatprep.subr.mxu0 0.0
      %1051 = vmatpush1.xpose.msra.mxu0 0.0
      %1052 = vmatprep.subr.mxu0 0.0
      %1053 = vmatpush1.xpose.msra.mxu0 0.0
      %1054 = vmatprep.subr.mxu0 0.0
      %1055 = vmatpush1.xpose.msra.mxu0 0.0
      %1056 = vmatprep.subr.mxu0 0.0
      %1057 = vmatpush1.xpose.msra.mxu0 0.0
      %1058 = vmatprep.subr.mxu0 0.0
      %1059 = vmatpush1.xpose.msra.mxu0 0.0
      %1060 = vmatprep.subr.mxu0 0.0
      %1061 = vmatpush1.xpose.msra.mxu0 0.0
      %1062 = vmatprep.subr.mxu0 0.0
      %1063 = vmatpush1.xpose.msra.mxu0 %v1034
      %1064 = vmatprep.subr.mxu0 0.0
      %1065 = vmatpush1.xpose.msra.mxu0 %v1032
      %1066 = vmatprep.subr.mxu0 0.0
      %1067 = vmatpush1.xpose.msra.mxu0 %v1030
      %1068 = vmatprep.subr.mxu0 0.0
      %1069 = vmatpush2.xpose.msra.mxu0 0.0
      %1070 = vmatprep.subr.mxu0 0.0
      %1071 = vmatpush2.xpose.msra.mxu0 0.0
      %1072 = vmatprep.subr.mxu0 0.0
      %1073 = vmatpush2.xpose.msra.mxu0 0.0
      %1074 = vmatprep.subr.mxu0 0.0
      %1075 = vmatpush2.xpose.msra.mxu0 0.0
      %1076 = vmatprep.subr.mxu0 0.0
      %1077 = vmatpush2.xpose.msra.mxu0 0.0
      %1078 = vmatprep.subr.mxu0 0.0
      %1079 = vmatpush2.xpose.msra.mxu0 0.0
      %1080 = vmatprep.subr.mxu0 0.0
      %1081 = vmatpush2.xpose.msra.mxu0 0.0
      %1082 = vmatprep.subr.mxu0 0.0
      %1083 = vmatpush2.xpose.msra.mxu0 0.0
      %1084 = vmatprep.subr.mxu0 0.0
      %1085 = vmatpush2.xpose.msra.mxu0 0.0
      %1086 = vmatprep.subr.mxu0 0.0
      %1087 = vmatpush2.xpose.msra.mxu0 0.0
      %1088 = vmatprep.subr.mxu0 0.0
      %1089 = vmatpush2.xpose.msra.mxu0 0.0
      %1090 = vmatprep.subr.mxu0 0.0
      %1091 = vmatpush2.xpose.msra.mxu0 0.0
      %1092 = vmatprep.subr.mxu0 0.0
      %1093 = vmatpush2.xpose.msra.mxu0 0.0
      %1094 = vmatprep.subr.mxu0 0.0
      %1095 = vmatpush2.xpose.msra.mxu0 0.0
      %1096 = vmatprep.subr.mxu0 0.0
      %1097 = vmatpush2.xpose.msra.mxu0 0.0
      %1098 = vmatprep.subr.mxu0 0.0
      %1099 = vmatpush2.xpose.msra.mxu0 0.0
      %1100 = vmatprep.mubr.f32.mxu0 0.0
      %1101 = vmatmul.mubr.f32.gmra.mxu0 %v1024
      %v1102 = vpop.f32.mrf.mxu0
      %v1103 = vadd.f32 0.0, %v1102
      %v1104 = vpop.f32.mrf.mxu0
      %1105 = vmatprep.mubr.f32.mxu0 0.0
      %1106 = vmatmul.mubr.f32.gmra.mxu0 %v1026
      %v1107 = vpop.f32.mrf.mxu0
      %v1108 = vadd.f32 0.0, %v1107
      %v1109 = vpop.f32.mrf.mxu0
      %1110 = vmatprep.mubr.f32.mxu0 0.0
      %1111 = vmatmul.mubr.f32.gmra.mxu0 %v1028
      %v1112 = vpop.f32.mrf.mxu0
      %v1113 = vadd.f32 0.0, %v1112
      %v1114 = vpop.f32.mrf.mxu0
      %1115 = vdwg.mxu0
      %v1116 = vmul.f32 %v1103, 0.17677669
      %v1117 = vmul.f32 %v1108, 0.17677669
      %v1118 = vmul.f32 %v1113, 0.17677669
      %v1119 = vsel %vm885, %v1116, -inf
      %1120 = vmax.xlane.f32.xlu0 %v1119
      %v1121 = vpop.xlane.xlu0 %1120
      %v1122 = vsel %vm885, %v1117, -inf
      %1123 = vmax.xlane.f32.xlu0 %v1122
      %v1124 = vpop.xlane.xlu0 %1123
      %v1125 = vsel %vm892, %v1118, -inf
      %1126 = vmax.xlane.f32.xlu0 %v1125
      %v1127 = vpop.xlane.xlu0 %1126
      %v1128 = vsub.f32 %v1116, %v1121
      %v1129 = vsub.f32 %v1117, %v1124
      %v1130 = vsub.f32 %v1118, %v1127
      %v1131 = vmul.f32 %v1128, 1.442695
      %v1132 = vpow.pop %v1131
      %v1133 = vmul.f32 %v1129, 1.442695
      %v1134 = vpow.pop %v1133
      %v1135 = vmul.f32 %v1130, 1.442695
      %v1136 = vpow.pop %v1135
      %v1137 = vsel %vm885, %v1132, 0.0
      %1138 = vadd.xlane.f32.xlu0 %v1137
      %v1139 = vpop.xlane.xlu0 %1138
      %v1140 = vsel %vm885, %v1134, 0.0
      %1141 = vadd.xlane.f32.xlu0 %v1140
      %v1142 = vpop.xlane.xlu0 %1141
      %v1143 = vsel %vm892, %v1136, 0.0
      %1144 = vadd.xlane.f32.xlu0 %v1143
      %v1145 = vpop.xlane.xlu0 %1144
      %v1146 = vrcp.pop %v1139
      %v1147 = vrcp.pop %v1142
      %v1148 = vrcp.pop %v1145
      %v1149 = vmul.f32 %v1132, %v1146
      %v1150 = vmul.f32 %v1134, %v1147
      %v1151 = vmul.f32 %v1136, %v1148
      %1154 = vrot.lane.b32.xlu0 %v770, 96
      %v1155 = vpop.permute.xlu0 %1154
      %1156 = vrot.lane.b32.xlu0 %v773, 96
      %v1157 = vpop.permute.xlu0 %1156
      %1158 = vrot.lane.b32.xlu0 %v778, 96
      %v1159 = vpop.permute.xlu0 %1158
      %v1163 = vsel %vm885, %v1149, 0
      %v1166 = vsel %vm885, %v1150, 0
      %v1169 = vsel %vm885, %v1151, 0
      %v1171 = vsel %vm454, %v1159, 0
      %1173 = vmatprep.subr.mxu0 0.0
      %1174 = vmatpush1.msra.mxu0 0.0
      %1175 = vmatprep.subr.mxu0 0.0
      %1176 = vmatpush1.msra.mxu0 0.0
      %1177 = vmatprep.subr.mxu0 0.0
      %1178 = vmatpush1.msra.mxu0 0.0
      %1179 = vmatprep.subr.mxu0 0.0
      %1180 = vmatpush1.msra.mxu0 0.0
      %1181 = vmatprep.subr.mxu0 0.0
      %1182 = vmatpush1.msra.mxu0 0.0
      %1183 = vmatprep.subr.mxu0 0.0
      %1184 = vmatpush1.msra.mxu0 0.0
      %1185 = vmatprep.subr.mxu0 0.0
      %1186 = vmatpush1.msra.mxu0 0.0
      %1187 = vmatprep.subr.mxu0 0.0
      %1188 = vmatpush1.msra.mxu0 0.0
      %1189 = vmatprep.subr.mxu0 0.0
      %1190 = vmatpush1.msra.mxu0 0.0
      %1191 = vmatprep.subr.mxu0 0.0
      %1192 = vmatpush1.msra.mxu0 0.0
      %1193 = vmatprep.subr.mxu0 0.0
      %1194 = vmatpush1.msra.mxu0 0.0
      %1195 = vmatprep.subr.mxu0 0.0
      %1196 = vmatpush1.msra.mxu0 0.0
      %1197 = vmatprep.subr.mxu0 0.0
      %1198 = vmatpush1.msra.mxu0 0.0
      %1199 = vmatprep.subr.mxu0 0.0
      %1200 = vmatpush1.msra.mxu0 %v1171
      %1201 = vmatprep.subr.mxu0 0.0
      %1202 = vmatpush1.msra.mxu0 %v1157
      %1203 = vmatprep.subr.mxu0 0.0
      %1204 = vmatpush1.msra.mxu0 %v1155
      %1205 = vmatprep.subr.mxu0 0.0
      %1206 = vmatpush2.msra.mxu0 0.0
      %1207 = vmatprep.subr.mxu0 0.0
      %1208 = vmatpush2.msra.mxu0 0.0
      %1209 = vmatprep.subr.mxu0 0.0
      %1210 = vmatpush2.msra.mxu0 0.0
      %1211 = vmatprep.subr.mxu0 0.0
      %1212 = vmatpush2.msra.mxu0 0.0
      %1213 = vmatprep.subr.mxu0 0.0
      %1214 = vmatpush2.msra.mxu0 0.0
      %1215 = vmatprep.subr.mxu0 0.0
      %1216 = vmatpush2.msra.mxu0 0.0
      %1217 = vmatprep.subr.mxu0 0.0
      %1218 = vmatpush2.msra.mxu0 0.0
      %1219 = vmatprep.subr.mxu0 0.0
      %1220 = vmatpush2.msra.mxu0 0.0
      %1221 = vmatprep.subr.mxu0 0.0
      %1222 = vmatpush2.msra.mxu0 0.0
      %1223 = vmatprep.subr.mxu0 0.0
      %1224 = vmatpush2.msra.mxu0 0.0
      %1225 = vmatprep.subr.mxu0 0.0
      %1226 = vmatpush2.msra.mxu0 0.0
      %1227 = vmatprep.subr.mxu0 0.0
      %1228 = vmatpush2.msra.mxu0 0.0
      %1229 = vmatprep.subr.mxu0 0.0
      %1230 = vmatpush2.msra.mxu0 0.0
      %1231 = vmatprep.subr.mxu0 0.0
      %1232 = vmatpush2.msra.mxu0 0.0
      %1233 = vmatprep.subr.mxu0 0.0
      %1234 = vmatpush2.msra.mxu0 0.0
      %1235 = vmatprep.subr.mxu0 0.0
      %1236 = vmatpush2.msra.mxu0 0.0
      %1237 = vmatprep.mubr.f32.mxu0 0.0
      %1238 = vmatmul.mubr.f32.gmra.mxu0 %v1163
      %v1239 = vpop.f32.mrf.mxu0
      %v1240 = vadd.f32 0.0, %v1239
      %v1241 = vpop.f32.mrf.mxu0
      %1242 = vmatprep.mubr.f32.mxu0 0.0
      %1243 = vmatmul.mubr.f32.gmra.mxu0 %v1166
      %v1244 = vpop.f32.mrf.mxu0
      %v1245 = vadd.f32 0.0, %v1244
      %v1246 = vpop.f32.mrf.mxu0
      %1247 = vmatprep.mubr.f32.mxu0 0.0
      %1248 = vmatmul.mubr.f32.gmra.mxu0 %v1169
      %v1249 = vpop.f32.mrf.mxu0
      %v1250 = vadd.f32 0.0, %v1249
      %v1251 = vpop.f32.mrf.mxu0
      %1252 = vdwg.mxu0
      %1253 = vrot.lane.b32.xlu0 %v719, 64
      %v1254 = vpop.permute.xlu0 %1253
      %1255 = vrot.lane.b32.xlu0 %v723, 64
      %v1256 = vpop.permute.xlu0 %1255
      %1257 = vrot.lane.b32.xlu0 %v729, 64
      %v1258 = vpop.permute.xlu0 %1257
      %1259 = vrot.lane.b32.xlu0 %v721, 64
      %v1260 = vpop.permute.xlu0 %1259
      %1261 = vrot.lane.b32.xlu0 %v725, 64
      %v1262 = vpop.permute.xlu0 %1261
      %1263 = vrot.lane.b32.xlu0 %v731, 64
      %v1264 = vpop.permute.xlu0 %1263
      %v1265 = vsel %vm783, %v1254, 0
      %v1267 = vsel %vm783, %v1256, 0
      %v1269 = vsel %vm783, %v1258, 0
      %v1271 = vsel %vm783, %v1260, 0
      %v1273 = vsel %vm783, %v1262, 0
      %v1275 = vsel %vm783, %v1264, 0
      %1277 = vmatprep.subr.mxu0 0.0
      %1278 = vmatpush1.xpose.msra.mxu0 0.0
      %1279 = vmatprep.subr.mxu0 0.0
      %1280 = vmatpush1.xpose.msra.mxu0 0.0
      %1281 = vmatprep.subr.mxu0 0.0
      %1282 = vmatpush1.xpose.msra.mxu0 0.0
      %1283 = vmatprep.subr.mxu0 0.0
      %1284 = vmatpush1.xpose.msra.mxu0 0.0
      %1285 = vmatprep.subr.mxu0 0.0
      %1286 = vmatpush1.xpose.msra.mxu0 0.0
      %1287 = vmatprep.subr.mxu0 0.0
      %1288 = vmatpush1.xpose.msra.mxu0 0.0
      %1289 = vmatprep.subr.mxu0 0.0
      %1290 = vmatpush1.xpose.msra.mxu0 0.0
      %1291 = vmatprep.subr.mxu0 0.0
      %1292 = vmatpush1.xpose.msra.mxu0 0.0
      %1293 = vmatprep.subr.mxu0 0.0
      %1294 = vmatpush1.xpose.msra.mxu0 0.0
      %1295 = vmatprep.subr.mxu0 0.0
      %1296 = vmatpush1.xpose.msra.mxu0 0.0
      %1297 = vmatprep.subr.mxu0 0.0
      %1298 = vmatpush1.xpose.msra.mxu0 0.0
      %1299 = vmatprep.subr.mxu0 0.0
      %1300 = vmatpush1.xpose.msra.mxu0 0.0
      %1301 = vmatprep.subr.mxu0 0.0
      %1302 = vmatpush1.xpose.msra.mxu0 0.0
      %1303 = vmatprep.subr.mxu0 0.0
      %1304 = vmatpush1.xpose.msra.mxu0 %v1275
      %1305 = vmatprep.subr.mxu0 0.0
      %1306 = vmatpush1.xpose.msra.mxu0 %v1273
      %1307 = vmatprep.subr.mxu0 0.0
      %1308 = vmatpush1.xpose.msra.mxu0 %v1271
      %1309 = vmatprep.subr.mxu0 0.0
      %1310 = vmatpush2.xpose.msra.mxu0 0.0
      %1311 = vmatprep.subr.mxu0 0.0
      %1312 = vmatpush2.xpose.msra.mxu0 0.0
      %1313 = vmatprep.subr.mxu0 0.0
      %1314 = vmatpush2.xpose.msra.mxu0 0.0
      %1315 = vmatprep.subr.mxu0 0.0
      %1316 = vmatpush2.xpose.msra.mxu0 0.0
      %1317 = vmatprep.subr.mxu0 0.0
      %1318 = vmatpush2.xpose.msra.mxu0 0.0
      %1319 = vmatprep.subr.mxu0 0.0
      %1320 = vmatpush2.xpose.msra.mxu0 0.0
      %1321 = vmatprep.subr.mxu0 0.0
      %1322 = vmatpush2.xpose.msra.mxu0 0.0
      %1323 = vmatprep.subr.mxu0 0.0
      %1324 = vmatpush2.xpose.msra.mxu0 0.0
      %1325 = vmatprep.subr.mxu0 0.0
      %1326 = vmatpush2.xpose.msra.mxu0 0.0
      %1327 = vmatprep.subr.mxu0 0.0
      %1328 = vmatpush2.xpose.msra.mxu0 0.0
      %1329 = vmatprep.subr.mxu0 0.0
      %1330 = vmatpush2.xpose.msra.mxu0 0.0
      %1331 = vmatprep.subr.mxu0 0.0
      %1332 = vmatpush2.xpose.msra.mxu0 0.0
      %1333 = vmatprep.subr.mxu0 0.0
      %1334 = vmatpush2.xpose.msra.mxu0 0.0
      %1335 = vmatprep.subr.mxu0 0.0
      %1336 = vmatpush2.xpose.msra.mxu0 0.0
      %1337 = vmatprep.subr.mxu0 0.0
      %1338 = vmatpush2.xpose.msra.mxu0 0.0
      %1339 = vmatprep.subr.mxu0 0.0
      %1340 = vmatpush2.xpose.msra.mxu0 0.0
      %1341 = vmatprep.mubr.f32.mxu0 0.0
      %1342 = vmatmul.mubr.f32.gmra.mxu0 %v1265
      %v1343 = vpop.f32.mrf.mxu0
      %v1344 = vadd.f32 0.0, %v1343
      %v1345 = vpop.f32.mrf.mxu0
      %1346 = vmatprep.mubr.f32.mxu0 0.0
      %1347 = vmatmul.mubr.f32.gmra.mxu0 %v1267
      %v1348 = vpop.f32.mrf.mxu0
      %v1349 = vadd.f32 0.0, %v1348
      %v1350 = vpop.f32.mrf.mxu0
      %1351 = vmatprep.mubr.f32.mxu0 0.0
      %1352 = vmatmul.mubr.f32.gmra.mxu0 %v1269
      %v1353 = vpop.f32.mrf.mxu0
      %v1354 = vadd.f32 0.0, %v1353
      %v1355 = vpop.f32.mrf.mxu0
      %1356 = vdwg.mxu0
      %v1357 = vmul.f32 %v1344, 0.17677669
      %v1358 = vmul.f32 %v1349, 0.17677669
      %v1359 = vmul.f32 %v1354, 0.17677669
      %v1360 = vsel %vm885, %v1357, -inf
      %1361 = vmax.xlane.f32.xlu0 %v1360
      %v1362 = vpop.xlane.xlu0 %1361
      %v1363 = vsel %vm885, %v1358, -inf
      %1364 = vmax.xlane.f32.xlu0 %v1363
      %v1365 = vpop.xlane.xlu0 %1364
      %v1366 = vsel %vm892, %v1359, -inf
      %1367 = vmax.xlane.f32.xlu0 %v1366
      %v1368 = vpop.xlane.xlu0 %1367
      %v1369 = vsub.f32 %v1357, %v1362
      %v1370 = vsub.f32 %v1358, %v1365
      %v1371 = vsub.f32 %v1359, %v1368
      %v1372 = vmul.f32 %v1369, 1.442695
      %v1373 = vpow.pop %v1372
      %v1374 = vmul.f32 %v1370, 1.442695
      %v1375 = vpow.pop %v1374
      %v1376 = vmul.f32 %v1371, 1.442695
      %v1377 = vpow.pop %v1376
      %v1378 = vsel %vm885, %v1373, 0.0
      %1379 = vadd.xlane.f32.xlu0 %v1378
      %v1380 = vpop.xlane.xlu0 %1379
      %v1381 = vsel %vm885, %v1375, 0.0
      %1382 = vadd.xlane.f32.xlu0 %v1381
      %v1383 = vpop.xlane.xlu0 %1382
      %v1384 = vsel %vm892, %v1377, 0.0
      %1385 = vadd.xlane.f32.xlu0 %v1384
      %v1386 = vpop.xlane.xlu0 %1385
      %v1387 = vrcp.pop %v1380
      %v1388 = vrcp.pop %v1383
      %v1389 = vrcp.pop %v1386
      %v1390 = vmul.f32 %v1373, %v1387
      %v1391 = vmul.f32 %v1375, %v1388
      %v1392 = vmul.f32 %v1377, %v1389
      %1393 = vrot.lane.b32.xlu0 %v770, 64
      %v1394 = vpop.permute.xlu0 %1393
      %1395 = vrot.lane.b32.xlu0 %v773, 64
      %v1396 = vpop.permute.xlu0 %1395
      %1397 = vrot.lane.b32.xlu0 %v778, 64
      %v1398 = vpop.permute.xlu0 %1397
      %v1402 = vsel %vm885, %v1390, 0
      %v1405 = vsel %vm885, %v1391, 0
      %v1408 = vsel %vm885, %v1392, 0
      %v1410 = vsel %vm454, %v1398, 0
      %1412 = vmatprep.subr.mxu0 0.0
      %1413 = vmatpush1.msra.mxu0 0.0
      %1414 = vmatprep.subr.mxu0 0.0
      %1415 = vmatpush1.msra.mxu0 0.0
      %1416 = vmatprep.subr.mxu0 0.0
      %1417 = vmatpush1.msra.mxu0 0.0
      %1418 = vmatprep.subr.mxu0 0.0
      %1419 = vmatpush1.msra.mxu0 0.0
      %1420 = vmatprep.subr.mxu0 0.0
      %1421 = vmatpush1.msra.mxu0 0.0
      %1422 = vmatprep.subr.mxu0 0.0
      %1423 = vmatpush1.msra.mxu0 0.0
      %1424 = vmatprep.subr.mxu0 0.0
      %1425 = vmatpush1.msra.mxu0 0.0
      %1426 = vmatprep.subr.mxu0 0.0
      %1427 = vmatpush1.msra.mxu0 0.0
      %1428 = vmatprep.subr.mxu0 0.0
      %1429 = vmatpush1.msra.mxu0 0.0
      %1430 = vmatprep.subr.mxu0 0.0
      %1431 = vmatpush1.msra.mxu0 0.0
      %1432 = vmatprep.subr.mxu0 0.0
      %1433 = vmatpush1.msra.mxu0 0.0
      %1434 = vmatprep.subr.mxu0 0.0
      %1435 = vmatpush1.msra.mxu0 0.0
      %1436 = vmatprep.subr.mxu0 0.0
      %1437 = vmatpush1.msra.mxu0 0.0
      %1438 = vmatprep.subr.mxu0 0.0
      %1439 = vmatpush1.msra.mxu0 %v1410
      %1440 = vmatprep.subr.mxu0 0.0
      %1441 = vmatpush1.msra.mxu0 %v1396
      %1442 = vmatprep.subr.mxu0 0.0
      %1443 = vmatpush1.msra.mxu0 %v1394
      %1444 = vmatprep.subr.mxu0 0.0
      %1445 = vmatpush2.msra.mxu0 0.0
      %1446 = vmatprep.subr.mxu0 0.0
      %1447 = vmatpush2.msra.mxu0 0.0
      %1448 = vmatprep.subr.mxu0 0.0
      %1449 = vmatpush2.msra.mxu0 0.0
      %1450 = vmatprep.subr.mxu0 0.0
      %1451 = vmatpush2.msra.mxu0 0.0
      %1452 = vmatprep.subr.mxu0 0.0
      %1453 = vmatpush2.msra.mxu0 0.0
      %1454 = vmatprep.subr.mxu0 0.0
      %1455 = vmatpush2.msra.mxu0 0.0
      %1456 = vmatprep.subr.mxu0 0.0
      %1457 = vmatpush2.msra.mxu0 0.0
      %1458 = vmatprep.subr.mxu0 0.0
      %1459 = vmatpush2.msra.mxu0 0.0
      %1460 = vmatprep.subr.mxu0 0.0
      %1461 = vmatpush2.msra.mxu0 0.0
      %1462 = vmatprep.subr.mxu0 0.0
      %1463 = vmatpush2.msra.mxu0 0.0
      %1464 = vmatprep.subr.mxu0 0.0
      %1465 = vmatpush2.msra.mxu0 0.0
      %1466 = vmatprep.subr.mxu0 0.0
      %1467 = vmatpush2.msra.mxu0 0.0
      %1468 = vmatprep.subr.mxu0 0.0
      %1469 = vmatpush2.msra.mxu0 0.0
      %1470 = vmatprep.subr.mxu0 0.0
      %1471 = vmatpush2.msra.mxu0 0.0
      %1472 = vmatprep.subr.mxu0 0.0
      %1473 = vmatpush2.msra.mxu0 0.0
      %1474 = vmatprep.subr.mxu0 0.0
      %1475 = vmatpush2.msra.mxu0 0.0
      %1476 = vmatprep.mubr.f32.mxu0 0.0
      %1477 = vmatmul.mubr.f32.gmra.mxu0 %v1402
      %v1478 = vpop.f32.mrf.mxu0
      %v1479 = vadd.f32 0.0, %v1478
      %v1480 = vpop.f32.mrf.mxu0
      %1481 = vmatprep.mubr.f32.mxu0 0.0
      %1482 = vmatmul.mubr.f32.gmra.mxu0 %v1405
      %v1483 = vpop.f32.mrf.mxu0
      %v1484 = vadd.f32 0.0, %v1483
      %v1485 = vpop.f32.mrf.mxu0
      %1486 = vmatprep.mubr.f32.mxu0 0.0
      %1487 = vmatmul.mubr.f32.gmra.mxu0 %v1408
      %v1488 = vpop.f32.mrf.mxu0
      %v1489 = vadd.f32 0.0, %v1488
      %v1490 = vpop.f32.mrf.mxu0
      %1491 = vdwg.mxu0
      %1492 = vrot.lane.b32.xlu0 %v719, 32
      %v1493 = vpop.permute.xlu0 %1492
      %1494 = vrot.lane.b32.xlu0 %v723, 32
      %v1495 = vpop.permute.xlu0 %1494
      %1496 = vrot.lane.b32.xlu0 %v729, 32
      %v1497 = vpop.permute.xlu0 %1496
      %1498 = vrot.lane.b32.xlu0 %v721, 32
      %v1499 = vpop.permute.xlu0 %1498
      %1500 = vrot.lane.b32.xlu0 %v725, 32
      %v1501 = vpop.permute.xlu0 %1500
      %1502 = vrot.lane.b32.xlu0 %v731, 32
      %v1503 = vpop.permute.xlu0 %1502
      %v1504 = vsel %vm783, %v1493, 0
      %v1506 = vsel %vm783, %v1495, 0
      %v1508 = vsel %vm783, %v1497, 0
      %v1510 = vsel %vm783, %v1499, 0
      %v1512 = vsel %vm783, %v1501, 0
      %v1514 = vsel %vm783, %v1503, 0
      %1516 = vmatprep.subr.mxu0 0.0
      %1517 = vmatpush1.xpose.msra.mxu0 0.0
      %1518 = vmatprep.subr.mxu0 0.0
      %1519 = vmatpush1.xpose.msra.mxu0 0.0
      %1520 = vmatprep.subr.mxu0 0.0
      %1521 = vmatpush1.xpose.msra.mxu0 0.0
      %1522 = vmatprep.subr.mxu0 0.0
      %1523 = vmatpush1.xpose.msra.mxu0 0.0
      %1524 = vmatprep.subr.mxu0 0.0
      %1525 = vmatpush1.xpose.msra.mxu0 0.0
      %1526 = vmatprep.subr.mxu0 0.0
      %1527 = vmatpush1.xpose.msra.mxu0 0.0
      %1528 = vmatprep.subr.mxu0 0.0
      %1529 = vmatpush1.xpose.msra.mxu0 0.0
      %1530 = vmatprep.subr.mxu0 0.0
      %1531 = vmatpush1.xpose.msra.mxu0 0.0
      %1532 = vmatprep.subr.mxu0 0.0
      %1533 = vmatpush1.xpose.msra.mxu0 0.0
      %1534 = vmatprep.subr.mxu0 0.0
      %1535 = vmatpush1.xpose.msra.mxu0 0.0
      %1536 = vmatprep.subr.mxu0 0.0
      %1537 = vmatpush1.xpose.msra.mxu0 0.0
      %1538 = vmatprep.subr.mxu0 0.0
      %1539 = vmatpush1.xpose.msra.mxu0 0.0
      %1540 = vmatprep.subr.mxu0 0.0
      %1541 = vmatpush1.xpose.msra.mxu0 0.0
      %1542 = vmatprep.subr.mxu0 0.0
      %1543 = vmatpush1.xpose.msra.mxu0 %v1514
      %1544 = vmatprep.subr.mxu0 0.0
      %1545 = vmatpush1.xpose.msra.mxu0 %v1512
      %1546 = vmatprep.subr.mxu0 0.0
      %1547 = vmatpush1.xpose.msra.mxu0 %v1510
      %1548 = vmatprep.subr.mxu0 0.0
      %1549 = vmatpush2.xpose.msra.mxu0 0.0
      %1550 = vmatprep.subr.mxu0 0.0
      %1551 = vmatpush2.xpose.msra.mxu0 0.0
      %1552 = vmatprep.subr.mxu0 0.0
      %1553 = vmatpush2.xpose.msra.mxu0 0.0
      %1554 = vmatprep.subr.mxu0 0.0
      %1555 = vmatpush2.xpose.msra.mxu0 0.0
      %1556 = vmatprep.subr.mxu0 0.0
      %1557 = vmatpush2.xpose.msra.mxu0 0.0
      %1558 = vmatprep.subr.mxu0 0.0
      %1559 = vmatpush2.xpose.msra.mxu0 0.0
      %1560 = vmatprep.subr.mxu0 0.0
      %1561 = vmatpush2.xpose.msra.mxu0 0.0
      %1562 = vmatprep.subr.mxu0 0.0
      %1563 = vmatpush2.xpose.msra.mxu0 0.0
      %1564 = vmatprep.subr.mxu0 0.0
      %1565 = vmatpush2.xpose.msra.mxu0 0.0
      %1566 = vmatprep.subr.mxu0 0.0
      %1567 = vmatpush2.xpose.msra.mxu0 0.0
      %1568 = vmatprep.subr.mxu0 0.0
      %1569 = vmatpush2.xpose.msra.mxu0 0.0
      %1570 = vmatprep.subr.mxu0 0.0
      %1571 = vmatpush2.xpose.msra.mxu0 0.0
      %1572 = vmatprep.subr.mxu0 0.0
      %1573 = vmatpush2.xpose.msra.mxu0 0.0
      %1574 = vmatprep.subr.mxu0 0.0
      %1575 = vmatpush2.xpose.msra.mxu0 0.0
      %1576 = vmatprep.subr.mxu0 0.0
      %1577 = vmatpush2.xpose.msra.mxu0 0.0
      %1578 = vmatprep.subr.mxu0 0.0
      %1579 = vmatpush2.xpose.msra.mxu0 0.0
      %1580 = vmatprep.mubr.f32.mxu0 0.0
      %1581 = vmatmul.mubr.f32.gmra.mxu0 %v1504
      %v1582 = vpop.f32.mrf.mxu0
      %v1583 = vadd.f32 0.0, %v1582
      %v1584 = vpop.f32.mrf.mxu0
      %1585 = vmatprep.mubr.f32.mxu0 0.0
      %1586 = vmatmul.mubr.f32.gmra.mxu0 %v1506
      %v1587 = vpop.f32.mrf.mxu0
      %v1588 = vadd.f32 0.0, %v1587
      %v1589 = vpop.f32.mrf.mxu0
      %1590 = vmatprep.mubr.f32.mxu0 0.0
      %1591 = vmatmul.mubr.f32.gmra.mxu0 %v1508
      %v1592 = vpop.f32.mrf.mxu0
      %v1593 = vadd.f32 0.0, %v1592
      %v1594 = vpop.f32.mrf.mxu0
      %1595 = vdwg.mxu0
      %v1596 = vmul.f32 %v1583, 0.17677669
      %v1597 = vmul.f32 %v1588, 0.17677669
      %v1598 = vmul.f32 %v1593, 0.17677669
      %v1599 = vsel %vm885, %v1596, -inf
      %1600 = vmax.xlane.f32.xlu0 %v1599
      %v1601 = vpop.xlane.xlu0 %1600
      %v1602 = vsel %vm885, %v1597, -inf
      %1603 = vmax.xlane.f32.xlu0 %v1602
      %v1604 = vpop.xlane.xlu0 %1603
      %v1605 = vsel %vm892, %v1598, -inf
      %1606 = vmax.xlane.f32.xlu0 %v1605
      %v1607 = vpop.xlane.xlu0 %1606
      %v1608 = vsub.f32 %v1596, %v1601
      %v1609 = vsub.f32 %v1597, %v1604
      %v1610 = vsub.f32 %v1598, %v1607
      %v1611 = vmul.f32 %v1608, 1.442695
      %v1612 = vpow.pop %v1611
      %v1613 = vmul.f32 %v1609, 1.442695
      %v1614 = vpow.pop %v1613
      %v1615 = vmul.f32 %v1610, 1.442695
      %v1616 = vpow.pop %v1615
      %v1617 = vsel %vm885, %v1612, 0.0
      %1618 = vadd.xlane.f32.xlu0 %v1617
      %v1619 = vpop.xlane.xlu0 %1618
      %v1620 = vsel %vm885, %v1614, 0.0
      %1621 = vadd.xlane.f32.xlu0 %v1620
      %v1622 = vpop.xlane.xlu0 %1621
      %v1623 = vsel %vm892, %v1616, 0.0
      %1624 = vadd.xlane.f32.xlu0 %v1623
      %v1625 = vpop.xlane.xlu0 %1624
      %v1626 = vrcp.pop %v1619
      %v1627 = vrcp.pop %v1622
      %v1628 = vrcp.pop %v1625
      %v1629 = vmul.f32 %v1612, %v1626
      %v1630 = vmul.f32 %v1614, %v1627
      %v1631 = vmul.f32 %v1616, %v1628
      %1632 = vrot.lane.b32.xlu0 %v770, 32
      %v1633 = vpop.permute.xlu0 %1632
      %1634 = vrot.lane.b32.xlu0 %v773, 32
      %v1635 = vpop.permute.xlu0 %1634
      %1636 = vrot.lane.b32.xlu0 %v778, 32
      %v1637 = vpop.permute.xlu0 %1636
      %v1641 = vsel %vm885, %v1629, 0
      %v1644 = vsel %vm885, %v1630, 0
      %v1647 = vsel %vm885, %v1631, 0
      %v1649 = vsel %vm454, %v1637, 0
      %1651 = vmatprep.subr.mxu0 0.0
      %1652 = vmatpush1.msra.mxu0 0.0
      %1653 = vmatprep.subr.mxu0 0.0
      %1654 = vmatpush1.msra.mxu0 0.0
      %1655 = vmatprep.subr.mxu0 0.0
      %1656 = vmatpush1.msra.mxu0 0.0
      %1657 = vmatprep.subr.mxu0 0.0
      %1658 = vmatpush1.msra.mxu0 0.0
      %1659 = vmatprep.subr.mxu0 0.0
      %1660 = vmatpush1.msra.mxu0 0.0
      %1661 = vmatprep.subr.mxu0 0.0
      %1662 = vmatpush1.msra.mxu0 0.0
      %1663 = vmatprep.subr.mxu0 0.0
      %1664 = vmatpush1.msra.mxu0 0.0
      %1665 = vmatprep.subr.mxu0 0.0
      %1666 = vmatpush1.msra.mxu0 0.0
      %1667 = vmatprep.subr.mxu0 0.0
      %1668 = vmatpush1.msra.mxu0 0.0
      %1669 = vmatprep.subr.mxu0 0.0
      %1670 = vmatpush1.msra.mxu0 0.0
      %1671 = vmatprep.subr.mxu0 0.0
      %1672 = vmatpush1.msra.mxu0 0.0
      %1673 = vmatprep.subr.mxu0 0.0
      %1674 = vmatpush1.msra.mxu0 0.0
      %1675 = vmatprep.subr.mxu0 0.0
      %1676 = vmatpush1.msra.mxu0 0.0
      %1677 = vmatprep.subr.mxu0 0.0
      %1678 = vmatpush1.msra.mxu0 %v1649
      %1679 = vmatprep.subr.mxu0 0.0
      %1680 = vmatpush1.msra.mxu0 %v1635
      %1681 = vmatprep.subr.mxu0 0.0
      %1682 = vmatpush1.msra.mxu0 %v1633
      %1683 = vmatprep.subr.mxu0 0.0
      %1684 = vmatpush2.msra.mxu0 0.0
      %1685 = vmatprep.subr.mxu0 0.0
      %1686 = vmatpush2.msra.mxu0 0.0
      %1687 = vmatprep.subr.mxu0 0.0
      %1688 = vmatpush2.msra.mxu0 0.0
      %1689 = vmatprep.subr.mxu0 0.0
      %1690 = vmatpush2.msra.mxu0 0.0
      %1691 = vmatprep.subr.mxu0 0.0
      %1692 = vmatpush2.msra.mxu0 0.0
      %1693 = vmatprep.subr.mxu0 0.0
      %1694 = vmatpush2.msra.mxu0 0.0
      %1695 = vmatprep.subr.mxu0 0.0
      %1696 = vmatpush2.msra.mxu0 0.0
      %1697 = vmatprep.subr.mxu0 0.0
      %1698 = vmatpush2.msra.mxu0 0.0
      %1699 = vmatprep.subr.mxu0 0.0
      %1700 = vmatpush2.msra.mxu0 0.0
      %1701 = vmatprep.subr.mxu0 0.0
      %1702 = vmatpush2.msra.mxu0 0.0
      %1703 = vmatprep.subr.mxu0 0.0
      %1704 = vmatpush2.msra.mxu0 0.0
      %1705 = vmatprep.subr.mxu0 0.0
      %1706 = vmatpush2.msra.mxu0 0.0
      %1707 = vmatprep.subr.mxu0 0.0
      %1708 = vmatpush2.msra.mxu0 0.0
      %1709 = vmatprep.subr.mxu0 0.0
      %1710 = vmatpush2.msra.mxu0 0.0
      %1711 = vmatprep.subr.mxu0 0.0
      %1712 = vmatpush2.msra.mxu0 0.0
      %1713 = vmatprep.subr.mxu0 0.0
      %1714 = vmatpush2.msra.mxu0 0.0
      %1715 = vmatprep.mubr.f32.mxu0 0.0
      %1716 = vmatmul.mubr.f32.gmra.mxu0 %v1641
      %v1717 = vpop.f32.mrf.mxu0
      %v1718 = vadd.f32 0.0, %v1717
      %v1719 = vpop.f32.mrf.mxu0
      %1720 = vmatprep.mubr.f32.mxu0 0.0
      %1721 = vmatmul.mubr.f32.gmra.mxu0 %v1644
      %v1722 = vpop.f32.mrf.mxu0
      %v1723 = vadd.f32 0.0, %v1722
      %v1724 = vpop.f32.mrf.mxu0
      %1725 = vmatprep.mubr.f32.mxu0 0.0
      %1726 = vmatmul.mubr.f32.gmra.mxu0 %v1647
      %v1727 = vpop.f32.mrf.mxu0
      %v1728 = vadd.f32 0.0, %v1727
      %v1729 = vpop.f32.mrf.mxu0
      %1730 = vdwg.mxu0
      %1734 = vrot.lane.b32.xlu0 %v1240, 32
      %v1735 = vpop.permute.xlu0 %1734
      %1736 = vrot.lane.b32.xlu0 %v1245, 32
      %v1737 = vpop.permute.xlu0 %1736
      %1738 = vrot.lane.b32.xlu0 %v1250, 32
      %v1739 = vpop.permute.xlu0 %1738
      %1746 = vrot.lane.b32.xlu0 %v1479, 64
      %v1747 = vpop.permute.xlu0 %1746
      %1748 = vrot.lane.b32.xlu0 %v1484, 64
      %v1749 = vpop.permute.xlu0 %1748
      %1750 = vrot.lane.b32.xlu0 %v1489, 64
      %v1751 = vpop.permute.xlu0 %1750
      %1758 = vrot.lane.b32.xlu0 %v1718, 96
      %v1759 = vpop.permute.xlu0 %1758
      %1760 = vrot.lane.b32.xlu0 %v1723, 96
      %v1761 = vpop.permute.xlu0 %1760
      %1762 = vrot.lane.b32.xlu0 %v1728, 96
      %v1763 = vpop.permute.xlu0 %1762
      %v1767 = vsel %vm783, %v999, %v1735
      %v1768 = vsel %vm783, %v1004, %v1737
      %v1769 = vsel %vm783, %v1009, %v1739
      %vm1770 = vcmask 523264
      %v1771 = vsel %vm1770, %v1767, %v1747
      %v1772 = vsel %vm1770, %v1768, %v1749
      %v1773 = vsel %vm1770, %v1769, %v1751
      %vm1774 = vcmask 785408
      %v1775 = vsel %vm1774, %v1771, %v1759
      %v1776 = vsel %vm1774, %v1772, %v1761
      %v1777 = vsel %vm1774, %v1773, %v1763
      %v1778 = vpack.c.bf16 %v1776, %v1775
      %v1779 = vpack.c.bf16 %v1777, %v1777
      %v1780 = vld [vmem:[%s5] sm:$0xf]
      %v1781 = vld [vmem:[%s5 + $0x4] sm:$0xf]
      %v1782 = vld [vmem:[%s5 + $0x8] sm:$0xf]
      %v1783 = vld [vmem:[%s5 + $0xc] sm:$0xf]
      %v1784 = vld [vmem:[%s5 + $0x10] sm:$0xf]
      %v1785 = vld [vmem:[%s5 + $0x14] sm:$0xf]
      %v1786 = vld [vmem:[%s5 + $0x18] sm:$0xf]
      %v1787 = vld [vmem:[%s5 + $0x1c] sm:$0xf]
      %v1788 = vld [vmem:[%s5 + $0x20] sm:$0xf]
      %v1789 = vld [vmem:[%s5 + $0x24] sm:$0xf]
      %v1790 = vld [vmem:[%s5 + $0x28] sm:$0xf]
      %v1791 = vld [vmem:[%s5 + $0x2c] sm:$0xf]
      %v1792 = vld [vmem:[%s5 + $0x30] sm:$0xf]
      %v1793 = vld [vmem:[%s5 + $0x34] sm:$0xf]
      %v1794 = vld [vmem:[%s5 + $0x38] sm:$0xf]
      %v1795 = vld [vmem:[%s5 + $0x3c] sm:$0xf]
      %v1796 = vld [vmem:[%s6] sm:$0x1]
      %v1798 = vlaneseq
      %v1799 = vshrl.u32 %v1798, 7
      %v1800 = vsub.s32 0, %v1799
      %v1801 = vrot.slane %v1796, %v1800
      %v1819 = vunpack.c.l.b16 %v1780
      %v1820 = vunpack.c.l.b16 %v1781
      %v1821 = vunpack.c.l.b16 %v1782
      %v1822 = vunpack.c.l.b16 %v1783
      %v1823 = vunpack.c.l.b16 %v1784
      %v1824 = vunpack.c.l.b16 %v1785
      %v1825 = vunpack.c.l.b16 %v1786
      %v1826 = vunpack.c.l.b16 %v1787
      %v1827 = vunpack.c.l.b16 %v1788
      %v1828 = vunpack.c.l.b16 %v1789
      %v1829 = vunpack.c.l.b16 %v1790
      %v1830 = vunpack.c.l.b16 %v1791
      %v1831 = vunpack.c.l.b16 %v1792
      %v1832 = vunpack.c.l.b16 %v1793
      %v1833 = vunpack.c.l.b16 %v1794
      %v1834 = vunpack.c.l.b16 %v1795
      %v1835 = vpack.c.b16 %v1820, %v1819
      %v1836 = vpack.c.b16 %v1822, %v1821
      %v1837 = vpack.c.b16 %v1824, %v1823
      %v1838 = vpack.c.b16 %v1826, %v1825
      %v1839 = vpack.c.b16 %v1828, %v1827
      %v1840 = vpack.c.b16 %v1830, %v1829
      %v1841 = vpack.c.b16 %v1832, %v1831
      %v1842 = vpack.c.b16 %v1834, %v1833
      %1851 = vmatprep.subr.bf16.mxu0 0
      %1852 = vmatpush1.bf16.msra.mxu0 %v1842
      %1853 = vmatprep.subr.bf16.mxu0 0
      %1854 = vmatpush1.bf16.msra.mxu0 %v1841
      %1855 = vmatprep.subr.bf16.mxu0 0
      %1856 = vmatpush1.bf16.msra.mxu0 %v1840
      %1857 = vmatprep.subr.bf16.mxu0 0
      %1858 = vmatpush1.bf16.msra.mxu0 %v1839
      %1859 = vmatprep.subr.bf16.mxu0 0
      %1860 = vmatpush1.bf16.msra.mxu0 %v1838
      %1861 = vmatprep.subr.bf16.mxu0 0
      %1862 = vmatpush1.bf16.msra.mxu0 %v1837
      %1863 = vmatprep.subr.bf16.mxu0 0
      %1864 = vmatpush1.bf16.msra.mxu0 %v1836
      %1865 = vmatprep.subr.bf16.mxu0 0
      %1866 = vmatpush1.bf16.msra.mxu0 %v1835
      %1867 = vmatprep.subr.bf16.mxu0 0
      %1868 = vmatpush2.bf16.msra.mxu0 0
      %1869 = vmatprep.subr.bf16.mxu0 0
      %1870 = vmatpush2.bf16.msra.mxu0 0
      %1871 = vmatprep.subr.bf16.mxu0 0
      %1872 = vmatpush2.bf16.msra.mxu0 0
      %1873 = vmatprep.subr.bf16.mxu0 0
      %1874 = vmatpush2.bf16.msra.mxu0 0
      %1875 = vmatprep.subr.bf16.mxu0 0
      %1876 = vmatpush2.bf16.msra.mxu0 0
      %1877 = vmatprep.subr.bf16.mxu0 0
      %1878 = vmatpush2.bf16.msra.mxu0 0
      %1879 = vmatprep.subr.bf16.mxu0 0
      %1880 = vmatpush2.bf16.msra.mxu0 0
      %1881 = vmatprep.subr.bf16.mxu0 0
      %1882 = vmatpush2.bf16.msra.mxu0 0
      %1883 = vmatprep.mubr.bf16.mxu0 0
      %1884 = vmatmul.mubr.bf16.gmra.mxu0 %v1778
      %v1885 = vpop.f32.mrf.mxu0
      %v1886 = vadd.f32 %v1801, %v1885
      %v1887 = vpop.f32.mrf.mxu0
      %v1888 = vpop.f32.mrf.mxu0
      %v1889 = vadd.f32 %v1801, %v1888
      %v1890 = vpop.f32.mrf.mxu0
      %1891 = vmatprep.mubr.bf16.mxu0 0
      %1892 = vmatmul.mubr.bf16.gmra.mxu0 %v1779
      %v1893 = vpop.f32.mrf.mxu0
      %v1894 = vadd.f32 %v1801, %v1893
      %v1895 = vpop.f32.mrf.mxu0
      %v1896 = vpop.f32.mrf.mxu0
      %v1897 = vpop.f32.mrf.mxu0
      %1898 = vdwg.mxu0
      %v1899 = vadd.f32 %v445, %v1886
      %v1900 = vadd.f32 %v446, %v1889
      %v1901 = vadd.f32 %v447, %v1894
      %v1902 = vld [vmem:[%s7] sm:$0x1]
      %v1903 = vld [vmem:[%s8] sm:$0x1]
      %1904 = vadd.xlane.f32.xlu0 %v1899
      %v1905 = vpop.xlane.xlu0 %1904
      %1906 = vadd.xlane.f32.xlu0 %v1900
      %v1907 = vpop.xlane.xlu0 %1906
      %v1908 = vsel %vm454, %v1901, 0.0
      %1909 = vadd.xlane.f32.xlu0 %v1908
      %v1910 = vpop.xlane.xlu0 %1909
      %v1911 = vmul.f32 %v1905, %v458
      %v1912 = vmul.f32 %v1907, %v458
      %v1913 = vmul.f32 %v1910, %v458
      %v1914 = vsub.f32 %v1899, %v1911
      %v1915 = vsub.f32 %v1900, %v1912
      %v1916 = vsub.f32 %v1901, %v1913
      %v1917 = vmul.f32 %v1914, %v1914
      %v1918 = vmul.f32 %v1915, %v1915
      %v1919 = vmul.f32 %v1916, %v1916
      %1920 = vadd.xlane.f32.xlu0 %v1917
      %v1921 = vpop.xlane.xlu0 %1920
      %1922 = vadd.xlane.f32.xlu0 %v1918
      %v1923 = vpop.xlane.xlu0 %1922
      %v1924 = vsel %vm454, %v1919, 0.0
      %1925 = vadd.xlane.f32.xlu0 %v1924
      %v1926 = vpop.xlane.xlu0 %1925
      %v1927 = vmul.f32 %v1921, %v458
      %v1928 = vmul.f32 %v1923, %v458
      %v1929 = vmul.f32 %v1926, %v458
      %v1930 = vadd.f32 %v1927, 1e-06
      %v1931 = vadd.f32 %v1928, 1e-06
      %v1932 = vadd.f32 %v1929, 1e-06
      %v1933 = vrsqrt.pop %v1930
      %v1934 = vrsqrt.pop %v1931
      %v1935 = vrsqrt.pop %v1932
      %v1936 = vmul.f32 %v1914, %v1933
      %v1937 = vmul.f32 %v1915, %v1934
      %v1938 = vmul.f32 %v1916, %v1935
      %v1940 = vlaneseq
      %v1941 = vshrl.u32 %v1940, 7
      %v1942 = vsub.s32 0, %v1941
      %v1943 = vrot.slane %v1902, %v1942
      %v1945 = vmul.f32 %v1936, %v1943
      %v1946 = vmul.f32 %v1937, %v1943
      %v1947 = vmul.f32 %v1938, %v1943
      %v1949 = vlaneseq
      %v1950 = vshrl.u32 %v1949, 7
      %v1951 = vsub.s32 0, %v1950
      %v1952 = vrot.slane %v1903, %v1951
      %v1954 = vadd.f32 %v1945, %v1952
      %v1955 = vadd.f32 %v1946, %v1952
      %v1956 = vadd.f32 %v1947, %v1952
      %v1957 = vpack.c.bf16 %v1955, %v1954
      %v1958 = vpack.c.bf16 %v1956, %v1956
      %v1959 = vld [vmem:[%s9] sm:$0xff]
      %v1960 = vld [vmem:[%s9 + $0x8] sm:$0xff]
      %v1961 = vld [vmem:[%s9 + $0x10] sm:$0xff]
      %v1962 = vld [vmem:[%s9 + $0x18] sm:$0xff]
      %v1963 = vld [vmem:[%s9 + $0x20] sm:$0xff]
      %v1964 = vld [vmem:[%s9 + $0x28] sm:$0xff]
      %v1965 = vld [vmem:[%s9 + $0x30] sm:$0xff]
      %v1966 = vld [vmem:[%s9 + $0x38] sm:$0xff]
      %v1967 = vld [vmem:[%s9 + $0x40] sm:$0xff]
      %v1968 = vld [vmem:[%s9 + $0x48] sm:$0xff]
      %v1969 = vld [vmem:[%s9 + $0x50] sm:$0xff]
      %v1970 = vld [vmem:[%s9 + $0x58] sm:$0xff]
      %v1971 = vld [vmem:[%s9 + $0x60] sm:$0xff]
      %v1972 = vld [vmem:[%s9 + $0x68] sm:$0xff]
      %v1973 = vld [vmem:[%s9 + $0x70] sm:$0xff]
      %v1974 = vld [vmem:[%s9 + $0x78] sm:$0xff]
      %v1975 = vld [vmem:[%s9 + $0x80] sm:$0xff]
      %v1976 = vld [vmem:[%s9 + $0x88] sm:$0xff]
      %v1977 = vld [vmem:[%s9 + $0x90] sm:$0xff]
      %v1978 = vld [vmem:[%s9 + $0x98] sm:$0xff]
      %v1979 = vld [vmem:[%s9 + $0xa0] sm:$0xff]
      %v1980 = vld [vmem:[%s9 + $0xa8] sm:$0xff]
      %v1981 = vld [vmem:[%s9 + $0xb0] sm:$0xff]
      %v1982 = vld [vmem:[%s9 + $0xb8] sm:$0xff]
      %v1983 = vld [vmem:[%s9 + $0xc0] sm:$0xff]
      %v1984 = vld [vmem:[%s9 + $0xc8] sm:$0xff]
      %v1985 = vld [vmem:[%s9 + $0xd0] sm:$0xff]
      %v1986 = vld [vmem:[%s9 + $0xd8] sm:$0xff]
      %v1987 = vld [vmem:[%s9 + $0xe0] sm:$0xff]
      %v1988 = vld [vmem:[%s9 + $0xe8] sm:$0xff]
      %v1989 = vld [vmem:[%s9 + $0xf0] sm:$0xff]
      %v1990 = vld [vmem:[%s9 + $0xf8] sm:$0xff]
      %v1991 = vld [vmem:[%s10] sm:$0xf]
      %v1993 = vlaneseq
      %v1994 = vshrl.u32 %v1993, 7
      %v1995 = vsub.s32 0, %v1994
      %v1996 = vrot.slane %v1991, %v1995
      %v1997 = vlaneseq
      %v1998 = vshrl.u32 %v1997, 7
      %v1999 = vsub.s32 1, %v1998
      %v2000 = vrot.slane %v1991, %v1999
      %v2001 = vlaneseq
      %v2002 = vshrl.u32 %v2001, 7
      %v2003 = vsub.s32 2, %v2002
      %v2004 = vrot.slane %v1991, %v2003
      %v2005 = vlaneseq
      %v2006 = vshrl.u32 %v2005, 7
      %v2007 = vsub.s32 3, %v2006
      %v2008 = vrot.slane %v1991, %v2007
      %v2045 = vunpack.c.l.b16 %v1959
      %v2046 = vunpack.c.h.b16 %v1959
      %v2047 = vunpack.c.l.b16 %v1960
      %v2048 = vunpack.c.h.b16 %v1960
      %v2049 = vunpack.c.l.b16 %v1961
      %v2050 = vunpack.c.h.b16 %v1961
      %v2051 = vunpack.c.l.b16 %v1962
      %v2052 = vunpack.c.h.b16 %v1962
      %v2053 = vunpack.c.l.b16 %v1963
      %v2054 = vunpack.c.h.b16 %v1963
      %v2055 = vunpack.c.l.b16 %v1964
      %v2056 = vunpack.c.h.b16 %v1964
      %v2057 = vunpack.c.l.b16 %v1965
      %v2058 = vunpack.c.h.b16 %v1965
      %v2059 = vunpack.c.l.b16 %v1966
      %v2060 = vunpack.c.h.b16 %v1966
      %v2061 = vunpack.c.l.b16 %v1967
      %v2062 = vunpack.c.h.b16 %v1967
      %v2063 = vunpack.c.l.b16 %v1968
      %v2064 = vunpack.c.h.b16 %v1968
      %v2065 = vunpack.c.l.b16 %v1969
      %v2066 = vunpack.c.h.b16 %v1969
      %v2067 = vunpack.c.l.b16 %v1970
      %v2068 = vunpack.c.h.b16 %v1970
      %v2069 = vunpack.c.l.b16 %v1971
      %v2070 = vunpack.c.h.b16 %v1971
      %v2071 = vunpack.c.l.b16 %v1972
      %v2072 = vunpack.c.h.b16 %v1972
      %v2073 = vunpack.c.l.b16 %v1973
      %v2074 = vunpack.c.h.b16 %v1973
      %v2075 = vunpack.c.l.b16 %v1974
      %v2076 = vunpack.c.h.b16 %v1974
      %v2077 = vunpack.c.l.b16 %v1975
      %v2078 = vunpack.c.h.b16 %v1975
      %v2079 = vunpack.c.l.b16 %v1976
      %v2080 = vunpack.c.h.b16 %v1976
      %v2081 = vunpack.c.l.b16 %v1977
      %v2082 = vunpack.c.h.b16 %v1977
      %v2083 = vunpack.c.l.b16 %v1978
      %v2084 = vunpack.c.h.b16 %v1978
      %v2085 = vunpack.c.l.b16 %v1979
      %v2086 = vunpack.c.h.b16 %v1979
      %v2087 = vunpack.c.l.b16 %v1980
      %v2088 = vunpack.c.h.b16 %v1980
      %v2089 = vunpack.c.l.b16 %v1981
      %v2090 = vunpack.c.h.b16 %v1981
      %v2091 = vunpack.c.l.b16 %v1982
      %v2092 = vunpack.c.h.b16 %v1982
      %v2093 = vunpack.c.l.b16 %v1983
      %v2094 = vunpack.c.h.b16 %v1983
      %v2095 = vunpack.c.l.b16 %v1984
      %v2096 = vunpack.c.h.b16 %v1984
      %v2097 = vunpack.c.l.b16 %v1985
      %v2098 = vunpack.c.h.b16 %v1985
      %v2099 = vunpack.c.l.b16 %v1986
      %v2100 = vunpack.c.h.b16 %v1986
      %v2101 = vunpack.c.l.b16 %v1987
      %v2102 = vunpack.c.h.b16 %v1987
      %v2103 = vunpack.c.l.b16 %v1988
      %v2104 = vunpack.c.h.b16 %v1988
      %v2105 = vunpack.c.l.b16 %v1989
      %v2106 = vunpack.c.h.b16 %v1989
      %v2107 = vunpack.c.l.b16 %v1990
      %v2108 = vunpack.c.h.b16 %v1990
      %v2109 = vpack.c.b16 %v2049, %v2045
      %v2110 = vpack.c.b16 %v2050, %v2046
      %v2111 = vpack.c.b16 %v2051, %v2047
      %v2112 = vpack.c.b16 %v2052, %v2048
      %v2113 = vpack.c.b16 %v2057, %v2053
      %v2114 = vpack.c.b16 %v2058, %v2054
      %v2115 = vpack.c.b16 %v2059, %v2055
      %v2116 = vpack.c.b16 %v2060, %v2056
      %v2117 = vpack.c.b16 %v2065, %v2061
      %v2118 = vpack.c.b16 %v2066, %v2062
      %v2119 = vpack.c.b16 %v2067, %v2063
      %v2120 = vpack.c.b16 %v2068, %v2064
      %v2121 = vpack.c.b16 %v2073, %v2069
      %v2122 = vpack.c.b16 %v2074, %v2070
      %v2123 = vpack.c.b16 %v2075, %v2071
      %v2124 = vpack.c.b16 %v2076, %v2072
      %v2125 = vpack.c.b16 %v2081, %v2077
      %v2126 = vpack.c.b16 %v2082, %v2078
      %v2127 = vpack.c.b16 %v2083, %v2079
      %v2128 = vpack.c.b16 %v2084, %v2080
      %v2129 = vpack.c.b16 %v2089, %v2085
      %v2130 = vpack.c.b16 %v2090, %v2086
      %v2131 = vpack.c.b16 %v2091, %v2087
      %v2132 = vpack.c.b16 %v2092, %v2088
      %v2133 = vpack.c.b16 %v2097, %v2093
      %v2134 = vpack.c.b16 %v2098, %v2094
      %v2135 = vpack.c.b16 %v2099, %v2095
      %v2136 = vpack.c.b16 %v2100, %v2096
      %v2137 = vpack.c.b16 %v2105, %v2101
      %v2138 = vpack.c.b16 %v2106, %v2102
      %v2139 = vpack.c.b16 %v2107, %v2103
      %v2140 = vpack.c.b16 %v2108, %v2104
      %2173 = vmatprep.subr.bf16.mxu0 %v2138
      %2174 = vmatpush1.bf16.msra.mxu0 %v2137
      %2175 = vmatprep.subr.bf16.mxu0 %v2134
      %2176 = vmatpush1.bf16.msra.mxu0 %v2133
      %2177 = vmatprep.subr.bf16.mxu0 %v2130
      %2178 = vmatpush1.bf16.msra.mxu0 %v2129
      %2179 = vmatprep.subr.bf16.mxu0 %v2126
      %2180 = vmatpush1.bf16.msra.mxu0 %v2125
      %2181 = vmatprep.subr.bf16.mxu0 %v2122
      %2182 = vmatpush1.bf16.msra.mxu0 %v2121
      %2183 = vmatprep.subr.bf16.mxu0 %v2118
      %2184 = vmatpush1.bf16.msra.mxu0 %v2117
      %2185 = vmatprep.subr.bf16.mxu0 %v2114
      %2186 = vmatpush1.bf16.msra.mxu0 %v2113
      %2187 = vmatprep.subr.bf16.mxu0 %v2110
      %2188 = vmatpush1.bf16.msra.mxu0 %v2109
      %2189 = vmatprep.subr.bf16.mxu0 0
      %2190 = vmatpush2.bf16.msra.mxu0 0
      %2191 = vmatprep.subr.bf16.mxu0 0
      %2192 = vmatpush2.bf16.msra.mxu0 0
      %2193 = vmatprep.subr.bf16.mxu0 0
      %2194 = vmatpush2.bf16.msra.mxu0 0
      %2195 = vmatprep.subr.bf16.mxu0 0
      %2196 = vmatpush2.bf16.msra.mxu0 0
      %2197 = vmatprep.subr.bf16.mxu0 0
      %2198 = vmatpush2.bf16.msra.mxu0 0
      %2199 = vmatprep.subr.bf16.mxu0 0
      %2200 = vmatpush2.bf16.msra.mxu0 0
      %2201 = vmatprep.subr.bf16.mxu0 0
      %2202 = vmatpush2.bf16.msra.mxu0 0
      %2203 = vmatprep.subr.bf16.mxu0 0
      %2204 = vmatpush2.bf16.msra.mxu0 0
      %2205 = vmatprep.mubr.bf16.mxu0 0
      %2206 = vmatmul.mubr.bf16.gmra.mxu0 %v1957
      %v2207 = vpop.f32.mrf.mxu0
      %v2208 = vadd.f32 %v1996, %v2207
      %v2209 = vpop.f32.mrf.mxu0
      %v2210 = vadd.f32 %v2000, %v2209
      %v2211 = vpop.f32.mrf.mxu0
      %v2212 = vadd.f32 %v1996, %v2211
      %v2213 = vpop.f32.mrf.mxu0
      %v2214 = vadd.f32 %v2000, %v2213
      %2215 = vmatprep.mubr.bf16.mxu0 0
      %2216 = vmatmul.mubr.bf16.gmra.mxu0 %v1958
      %v2217 = vpop.f32.mrf.mxu0
      %v2218 = vadd.f32 %v1996, %v2217
      %v2219 = vpop.f32.mrf.mxu0
      %v2220 = vadd.f32 %v2000, %v2219
      %v2221 = vpop.f32.mrf.mxu0
      %v2222 = vpop.f32.mrf.mxu0
      %2223 = vdwg.mxu0
      %2224 = vmatprep.subr.bf16.mxu0 %v2140
      %2225 = vmatpush1.bf16.msra.mxu0 %v2139
      %2226 = vmatprep.subr.bf16.mxu0 %v2136
      %2227 = vmatpush1.bf16.msra.mxu0 %v2135
      %2228 = vmatprep.subr.bf16.mxu0 %v2132
      %2229 = vmatpush1.bf16.msra.mxu0 %v2131
      %2230 = vmatprep.subr.bf16.mxu0 %v2128
      %2231 = vmatpush1.bf16.msra.mxu0 %v2127
      %2232 = vmatprep.subr.bf16.mxu0 %v2124
      %2233 = vmatpush1.bf16.msra.mxu0 %v2123
      %2234 = vmatprep.subr.bf16.mxu0 %v2120
      %2235 = vmatpush1.bf16.msra.mxu0 %v2119
      %2236 = vmatprep.subr.bf16.mxu0 %v2116
      %2237 = vmatpush1.bf16.msra.mxu0 %v2115
      %2238 = vmatprep.subr.bf16.mxu0 %v2112
      %2239 = vmatpush1.bf16.msra.mxu0 %v2111
      %2240 = vmatprep.subr.bf16.mxu0 0
      %2241 = vmatpush2.bf16.msra.mxu0 0
      %2242 = vmatprep.subr.bf16.mxu0 0
      %2243 = vmatpush2.bf16.msra.mxu0 0
      %2244 = vmatprep.subr.bf16.mxu0 0
      %2245 = vmatpush2.bf16.msra.mxu0 0
      %2246 = vmatprep.subr.bf16.mxu0 0
      %2247 = vmatpush2.bf16.msra.mxu0 0
      %2248 = vmatprep.subr.bf16.mxu0 0
      %2249 = vmatpush2.bf16.msra.mxu0 0
      %2250 = vmatprep.subr.bf16.mxu0 0
      %2251 = vmatpush2.bf16.msra.mxu0 0
      %2252 = vmatprep.subr.bf16.mxu0 0
      %2253 = vmatpush2.bf16.msra.mxu0 0
      %2254 = vmatprep.subr.bf16.mxu0 0
      %2255 = vmatpush2.bf16.msra.mxu0 0
      %2256 = vmatprep.mubr.bf16.mxu0 0
      %2257 = vmatmul.mubr.bf16.gmra.mxu0 %v1957
      %v2258 = vpop.f32.mrf.mxu0
      %v2259 = vadd.f32 %v2004, %v2258
      %v2260 = vpop.f32.mrf.mxu0
      %v2261 = vadd.f32 %v2008, %v2260
      %v2262 = vpop.f32.mrf.mxu0
      %v2263 = vadd.f32 %v2004, %v2262
      %v2264 = vpop.f32.mrf.mxu0
      %v2265 = vadd.f32 %v2008, %v2264
      %2266 = vmatprep.mubr.bf16.mxu0 0
      %2267 = vmatmul.mubr.bf16.gmra.mxu0 %v1958
      %v2268 = vpop.f32.mrf.mxu0
      %v2269 = vadd.f32 %v2004, %v2268
      %v2270 = vpop.f32.mrf.mxu0
      %v2271 = vadd.f32 %v2008, %v2270
      %v2272 = vpop.f32.mrf.mxu0
      %v2273 = vpop.f32.mrf.mxu0
      %2274 = vdwg.mxu0
      %v2275 = vmul.f32 %v2208, %v2208
      %v2276 = vmul.f32 %v2210, %v2210
      %v2277 = vmul.f32 %v2259, %v2259
      %v2278 = vmul.f32 %v2261, %v2261
      %v2279 = vmul.f32 %v2212, %v2212
      %v2280 = vmul.f32 %v2214, %v2214
      %v2281 = vmul.f32 %v2263, %v2263
      %v2282 = vmul.f32 %v2265, %v2265
      %v2283 = vmul.f32 %v2218, %v2218
      %v2284 = vmul.f32 %v2220, %v2220
      %v2285 = vmul.f32 %v2269, %v2269
      %v2286 = vmul.f32 %v2271, %v2271
      %v2287 = vmul.f32 %v2208, %v2275
      %v2288 = vmul.f32 %v2210, %v2276
      %v2289 = vmul.f32 %v2259, %v2277
      %v2290 = vmul.f32 %v2261, %v2278
      %v2291 = vmul.f32 %v2212, %v2279
      %v2292 = vmul.f32 %v2214, %v2280
      %v2293 = vmul.f32 %v2263, %v2281
      %v2294 = vmul.f32 %v2265, %v2282
      %v2295 = vmul.f32 %v2218, %v2283
      %v2296 = vmul.f32 %v2220, %v2284
      %v2297 = vmul.f32 %v2269, %v2285
      %v2298 = vmul.f32 %v2271, %v2286
      %v2299 = vmul.f32 %v2287, 0.044715
      %v2300 = vmul.f32 %v2288, 0.044715
      %v2301 = vmul.f32 %v2289, 0.044715
      %v2302 = vmul.f32 %v2290, 0.044715
      %v2303 = vmul.f32 %v2291, 0.044715
      %v2304 = vmul.f32 %v2292, 0.044715
      %v2305 = vmul.f32 %v2293, 0.044715
      %v2306 = vmul.f32 %v2294, 0.044715
      %v2307 = vmul.f32 %v2295, 0.044715
      %v2308 = vmul.f32 %v2296, 0.044715
      %v2309 = vmul.f32 %v2297, 0.044715
      %v2310 = vmul.f32 %v2298, 0.044715
      %v2311 = vadd.f32 %v2208, %v2299
      %v2312 = vadd.f32 %v2210, %v2300
      %v2313 = vadd.f32 %v2259, %v2301
      %v2314 = vadd.f32 %v2261, %v2302
      %v2315 = vadd.f32 %v2212, %v2303
      %v2316 = vadd.f32 %v2214, %v2304
      %v2317 = vadd.f32 %v2263, %v2305
      %v2318 = vadd.f32 %v2265, %v2306
      %v2319 = vadd.f32 %v2218, %v2307
      %v2320 = vadd.f32 %v2220, %v2308
      %v2321 = vadd.f32 %v2269, %v2309
      %v2322 = vadd.f32 %v2271, %v2310
      %v2323 = vmul.f32 %v2311, 0.7978846
      %v2324 = vmul.f32 %v2312, 0.7978846
      %v2325 = vmul.f32 %v2313, 0.7978846
      %v2326 = vmul.f32 %v2314, 0.7978846
      %v2327 = vmul.f32 %v2315, 0.7978846
      %v2328 = vmul.f32 %v2316, 0.7978846
      %v2329 = vmul.f32 %v2317, 0.7978846
      %v2330 = vmul.f32 %v2318, 0.7978846
      %v2331 = vmul.f32 %v2319, 0.7978846
      %v2332 = vmul.f32 %v2320, 0.7978846
      %v2333 = vmul.f32 %v2321, 0.7978846
      %v2334 = vmul.f32 %v2322, 0.7978846
      %v2335 = vtanh.pop %v2323
      %v2336 = vtanh.pop %v2324
      %v2337 = vtanh.pop %v2325
      %v2338 = vtanh.pop %v2326
      %v2339 = vtanh.pop %v2327
      %v2340 = vtanh.pop %v2328
      %v2341 = vtanh.pop %v2329
      %v2342 = vtanh.pop %v2330
      %v2343 = vtanh.pop %v2331
      %v2344 = vtanh.pop %v2332
      %v2345 = vtanh.pop %v2333
      %v2346 = vtanh.pop %v2334
      %v2347 = vadd.f32 %v2335, 1.0
      %v2348 = vadd.f32 %v2336, 1.0
      %v2349 = vadd.f32 %v2337, 1.0
      %v2350 = vadd.f32 %v2338, 1.0
      %v2351 = vadd.f32 %v2339, 1.0
      %v2352 = vadd.f32 %v2340, 1.0
      %v2353 = vadd.f32 %v2341, 1.0
      %v2354 = vadd.f32 %v2342, 1.0
      %v2355 = vadd.f32 %v2343, 1.0
      %v2356 = vadd.f32 %v2344, 1.0
      %v2357 = vadd.f32 %v2345, 1.0
      %v2358 = vadd.f32 %v2346, 1.0
      %v2359 = vmul.f32 %v2347, 0.5
      %v2360 = vmul.f32 %v2348, 0.5
      %v2361 = vmul.f32 %v2349, 0.5
      %v2362 = vmul.f32 %v2350, 0.5
      %v2363 = vmul.f32 %v2351, 0.5
      %v2364 = vmul.f32 %v2352, 0.5
      %v2365 = vmul.f32 %v2353, 0.5
      %v2366 = vmul.f32 %v2354, 0.5
      %v2367 = vmul.f32 %v2355, 0.5
      %v2368 = vmul.f32 %v2356, 0.5
      %v2369 = vmul.f32 %v2357, 0.5
      %v2370 = vmul.f32 %v2358, 0.5
      %v2371 = vmul.f32 %v2208, %v2359
      %v2372 = vmul.f32 %v2210, %v2360
      %v2373 = vmul.f32 %v2259, %v2361
      %v2374 = vmul.f32 %v2261, %v2362
      %v2375 = vmul.f32 %v2212, %v2363
      %v2376 = vmul.f32 %v2214, %v2364
      %v2377 = vmul.f32 %v2263, %v2365
      %v2378 = vmul.f32 %v2265, %v2366
      %v2379 = vmul.f32 %v2218, %v2367
      %v2380 = vmul.f32 %v2220, %v2368
      %v2381 = vmul.f32 %v2269, %v2369
      %v2382 = vmul.f32 %v2271, %v2370
      %v2383 = vpack.c.bf16 %v2375, %v2371
      %v2384 = vpack.c.bf16 %v2376, %v2372
      %v2385 = vpack.c.bf16 %v2377, %v2373
      %v2386 = vpack.c.bf16 %v2378, %v2374
      %v2387 = vpack.c.bf16 %v2379, %v2379
      %v2388 = vpack.c.bf16 %v2380, %v2380
      %v2389 = vpack.c.bf16 %v2381, %v2381
      %v2390 = vpack.c.bf16 %v2382, %v2382
      %v2391 = vld [vmem:[%s11] sm:$0xf]
      %v2392 = vld [vmem:[%s11 + $0x4] sm:$0xf]
      %v2393 = vld [vmem:[%s11 + $0x8] sm:$0xf]
      %v2394 = vld [vmem:[%s11 + $0xc] sm:$0xf]
      %v2395 = vld [vmem:[%s11 + $0x10] sm:$0xf]
      %v2396 = vld [vmem:[%s11 + $0x14] sm:$0xf]
      %v2397 = vld [vmem:[%s11 + $0x18] sm:$0xf]
      %v2398 = vld [vmem:[%s11 + $0x1c] sm:$0xf]
      %v2399 = vld [vmem:[%s11 + $0x20] sm:$0xf]
      %v2400 = vld [vmem:[%s11 + $0x24] sm:$0xf]
      %v2401 = vld [vmem:[%s11 + $0x28] sm:$0xf]
      %v2402 = vld [vmem:[%s11 + $0x2c] sm:$0xf]
      %v2403 = vld [vmem:[%s11 + $0x30] sm:$0xf]
      %v2404 = vld [vmem:[%s11 + $0x34] sm:$0xf]
      %v2405 = vld [vmem:[%s11 + $0x38] sm:$0xf]
      %v2406 = vld [vmem:[%s11 + $0x3c] sm:$0xf]
      %v2407 = vld [vmem:[%s11 + $0x40] sm:$0xf]
      %v2408 = vld [vmem:[%s11 + $0x44] sm:$0xf]
      %v2409 = vld [vmem:[%s11 + $0x48] sm:$0xf]
      %v2410 = vld [vmem:[%s11 + $0x4c] sm:$0xf]
      %v2411 = vld [vmem:[%s11 + $0x50] sm:$0xf]
      %v2412 = vld [vmem:[%s11 + $0x54] sm:$0xf]
      %v2413 = vld [vmem:[%s11 + $0x58] sm:$0xf]
      %v2414 = vld [vmem:[%s11 + $0x5c] sm:$0xf]
      %v2415 = vld [vmem:[%s11 + $0x60] sm:$0xf]
      %v2416 = vld [vmem:[%s11 + $0x64] sm:$0xf]
      %v2417 = vld [vmem:[%s11 + $0x68] sm:$0xf]
      %v2418 = vld [vmem:[%s11 + $0x6c] sm:$0xf]
      %v2419 = vld [vmem:[%s11 + $0x70] sm:$0xf]
      %v2420 = vld [vmem:[%s11 + $0x74] sm:$0xf]
      %v2421 = vld [vmem:[%s11 + $0x78] sm:$0xf]
      %v2422 = vld [vmem:[%s11 + $0x7c] sm:$0xf]
      %v2423 = vld [vmem:[%s11 + $0x80] sm:$0xf]
      %v2424 = vld [vmem:[%s11 + $0x84] sm:$0xf]
      %v2425 = vld [vmem:[%s11 + $0x88] sm:$0xf]
      %v2426 = vld [vmem:[%s11 + $0x8c] sm:$0xf]
      %v2427 = vld [vmem:[%s11 + $0x90] sm:$0xf]
      %v2428 = vld [vmem:[%s11 + $0x94] sm:$0xf]
      %v2429 = vld [vmem:[%s11 + $0x98] sm:$0xf]
      %v2430 = vld [vmem:[%s11 + $0x9c] sm:$0xf]
      %v2431 = vld [vmem:[%s11 + $0xa0] sm:$0xf]
      %v2432 = vld [vmem:[%s11 + $0xa4] sm:$0xf]
      %v2433 = vld [vmem:[%s11 + $0xa8] sm:$0xf]
      %v2434 = vld [vmem:[%s11 + $0xac] sm:$0xf]
      %v2435 = vld [vmem:[%s11 + $0xb0] sm:$0xf]
      %v2436 = vld [vmem:[%s11 + $0xb4] sm:$0xf]
      %v2437 = vld [vmem:[%s11 + $0xb8] sm:$0xf]
      %v2438 = vld [vmem:[%s11 + $0xbc] sm:$0xf]
      %v2439 = vld [vmem:[%s11 + $0xc0] sm:$0xf]
      %v2440 = vld [vmem:[%s11 + $0xc4] sm:$0xf]
      %v2441 = vld [vmem:[%s11 + $0xc8] sm:$0xf]
      %v2442 = vld [vmem:[%s11 + $0xcc] sm:$0xf]
      %v2443 = vld [vmem:[%s11 + $0xd0] sm:$0xf]
      %v2444 = vld [vmem:[%s11 + $0xd4] sm:$0xf]
      %v2445 = vld [vmem:[%s11 + $0xd8] sm:$0xf]
      %v2446 = vld [vmem:[%s11 + $0xdc] sm:$0xf]
      %v2447 = vld [vmem:[%s11 + $0xe0] sm:$0xf]
      %v2448 = vld [vmem:[%s11 + $0xe4] sm:$0xf]
      %v2449 = vld [vmem:[%s11 + $0xe8] sm:$0xf]
      %v2450 = vld [vmem:[%s11 + $0xec] sm:$0xf]
      %v2451 = vld [vmem:[%s11 + $0xf0] sm:$0xf]
      %v2452 = vld [vmem:[%s11 + $0xf4] sm:$0xf]
      %v2453 = vld [vmem:[%s11 + $0xf8] sm:$0xf]
      %v2454 = vld [vmem:[%s11 + $0xfc] sm:$0xf]
      %v2455 = vld [vmem:[%s12] sm:$0x1]
      %v2457 = vlaneseq
      %v2458 = vshrl.u32 %v2457, 7
      %v2459 = vsub.s32 0, %v2458
      %v2460 = vrot.slane %v2455, %v2459
      %v2526 = vunpack.c.l.b16 %v2391
      %v2527 = vunpack.c.l.b16 %v2392
      %v2528 = vunpack.c.l.b16 %v2393
      %v2529 = vunpack.c.l.b16 %v2394
      %v2530 = vunpack.c.l.b16 %v2395
      %v2531 = vunpack.c.l.b16 %v2396
      %v2532 = vunpack.c.l.b16 %v2397
      %v2533 = vunpack.c.l.b16 %v2398
      %v2534 = vunpack.c.l.b16 %v2399
      %v2535 = vunpack.c.l.b16 %v2400
      %v2536 = vunpack.c.l.b16 %v2401
      %v2537 = vunpack.c.l.b16 %v2402
      %v2538 = vunpack.c.l.b16 %v2403
      %v2539 = vunpack.c.l.b16 %v2404
      %v2540 = vunpack.c.l.b16 %v2405
      %v2541 = vunpack.c.l.b16 %v2406
      %v2542 = vunpack.c.l.b16 %v2407
      %v2543 = vunpack.c.l.b16 %v2408
      %v2544 = vunpack.c.l.b16 %v2409
      %v2545 = vunpack.c.l.b16 %v2410
      %v2546 = vunpack.c.l.b16 %v2411
      %v2547 = vunpack.c.l.b16 %v2412
      %v2548 = vunpack.c.l.b16 %v2413
      %v2549 = vunpack.c.l.b16 %v2414
      %v2550 = vunpack.c.l.b16 %v2415
      %v2551 = vunpack.c.l.b16 %v2416
      %v2552 = vunpack.c.l.b16 %v2417
      %v2553 = vunpack.c.l.b16 %v2418
      %v2554 = vunpack.c.l.b16 %v2419
      %v2555 = vunpack.c.l.b16 %v2420
      %v2556 = vunpack.c.l.b16 %v2421
      %v2557 = vunpack.c.l.b16 %v2422
      %v2558 = vunpack.c.l.b16 %v2423
      %v2559 = vunpack.c.l.b16 %v2424
      %v2560 = vunpack.c.l.b16 %v2425
      %v2561 = vunpack.c.l.b16 %v2426
      %v2562 = vunpack.c.l.b16 %v2427
      %v2563 = vunpack.c.l.b16 %v2428
      %v2564 = vunpack.c.l.b16 %v2429
      %v2565 = vunpack.c.l.b16 %v2430
      %v2566 = vunpack.c.l.b16 %v2431
      %v2567 = vunpack.c.l.b16 %v2432
      %v2568 = vunpack.c.l.b16 %v2433
      %v2569 = vunpack.c.l.b16 %v2434
      %v2570 = vunpack.c.l.b16 %v2435
      %v2571 = vunpack.c.l.b16 %v2436
      %v2572 = vunpack.c.l.b16 %v2437
      %v2573 = vunpack.c.l.b16 %v2438
      %v2574 = vunpack.c.l.b16 %v2439
      %v2575 = vunpack.c.l.b16 %v2440
      %v2576 = vunpack.c.l.b16 %v2441
      %v2577 = vunpack.c.l.b16 %v2442
      %v2578 = vunpack.c.l.b16 %v2443
      %v2579 = vunpack.c.l.b16 %v2444
      %v2580 = vunpack.c.l.b16 %v2445
      %v2581 = vunpack.c.l.b16 %v2446
      %v2582 = vunpack.c.l.b16 %v2447
      %v2583 = vunpack.c.l.b16 %v2448
      %v2584 = vunpack.c.l.b16 %v2449
      %v2585 = vunpack.c.l.b16 %v2450
      %v2586 = vunpack.c.l.b16 %v2451
      %v2587 = vunpack.c.l.b16 %v2452
      %v2588 = vunpack.c.l.b16 %v2453
      %v2589 = vunpack.c.l.b16 %v2454
      %v2590 = vpack.c.b16 %v2527, %v2526
      %v2591 = vpack.c.b16 %v2529, %v2528
      %v2592 = vpack.c.b16 %v2531, %v2530
      %v2593 = vpack.c.b16 %v2533, %v2532
      %v2594 = vpack.c.b16 %v2535, %v2534
      %v2595 = vpack.c.b16 %v2537, %v2536
      %v2596 = vpack.c.b16 %v2539, %v2538
      %v2597 = vpack.c.b16 %v2541, %v2540
      %v2598 = vpack.c.b16 %v2543, %v2542
      %v2599 = vpack.c.b16 %v2545, %v2544
      %v2600 = vpack.c.b16 %v2547, %v2546
      %v2601 = vpack.c.b16 %v2549, %v2548
      %v2602 = vpack.c.b16 %v2551, %v2550
      %v2603 = vpack.c.b16 %v2553, %v2552
      %v2604 = vpack.c.b16 %v2555, %v2554
      %v2605 = vpack.c.b16 %v2557, %v2556
      %v2606 = vpack.c.b16 %v2559, %v2558
      %v2607 = vpack.c.b16 %v2561, %v2560
      %v2608 = vpack.c.b16 %v2563, %v2562
      %v2609 = vpack.c.b16 %v2565, %v2564
      %v2610 = vpack.c.b16 %v2567, %v2566
      %v2611 = vpack.c.b16 %v2569, %v2568
      %v2612 = vpack.c.b16 %v2571, %v2570
      %v2613 = vpack.c.b16 %v2573, %v2572
      %v2614 = vpack.c.b16 %v2575, %v2574
      %v2615 = vpack.c.b16 %v2577, %v2576
      %v2616 = vpack.c.b16 %v2579, %v2578
      %v2617 = vpack.c.b16 %v2581, %v2580
      %v2618 = vpack.c.b16 %v2583, %v2582
      %v2619 = vpack.c.b16 %v2585, %v2584
      %v2620 = vpack.c.b16 %v2587, %v2586
      %v2621 = vpack.c.b16 %v2589, %v2588
      %2654 = vmatprep.subr.bf16.mxu0 0
      %2655 = vmatpush1.bf16.msra.mxu0 %v2597
      %2656 = vmatprep.subr.bf16.mxu0 0
      %2657 = vmatpush1.bf16.msra.mxu0 %v2596
      %2658 = vmatprep.subr.bf16.mxu0 0
      %2659 = vmatpush1.bf16.msra.mxu0 %v2595
      %2660 = vmatprep.subr.bf16.mxu0 0
      %2661 = vmatpush1.bf16.msra.mxu0 %v2594
      %2662 = vmatprep.subr.bf16.mxu0 0
      %2663 = vmatpush1.bf16.msra.mxu0 %v2593
      %2664 = vmatprep.subr.bf16.mxu0 0
      %2665 = vmatpush1.bf16.msra.mxu0 %v2592
      %2666 = vmatprep.subr.bf16.mxu0 0
      %2667 = vmatpush1.bf16.msra.mxu0 %v2591
      %2668 = vmatprep.subr.bf16.mxu0 0
      %2669 = vmatpush1.bf16.msra.mxu0 %v2590
      %2670 = vmatprep.subr.bf16.mxu0 0
      %2671 = vmatpush2.bf16.msra.mxu0 %v2605
      %2672 = vmatprep.subr.bf16.mxu0 0
      %2673 = vmatpush2.bf16.msra.mxu0 %v2604
      %2674 = vmatprep.subr.bf16.mxu0 0
      %2675 = vmatpush2.bf16.msra.mxu0 %v2603
      %2676 = vmatprep.subr.bf16.mxu0 0
      %2677 = vmatpush2.bf16.msra.mxu0 %v2602
      %2678 = vmatprep.subr.bf16.mxu0 0
      %2679 = vmatpush2.bf16.msra.mxu0 %v2601
      %2680 = vmatprep.subr.bf16.mxu0 0
      %2681 = vmatpush2.bf16.msra.mxu0 %v2600
      %2682 = vmatprep.subr.bf16.mxu0 0
      %2683 = vmatpush2.bf16.msra.mxu0 %v2599
      %2684 = vmatprep.subr.bf16.mxu0 0
      %2685 = vmatpush2.bf16.msra.mxu0 %v2598
      %2686 = vmatprep.mubr.bf16.mxu0 %v2384
      %2687 = vmatmul.mubr.bf16.gmra.mxu0 %v2383
      %v2688 = vpop.f32.mrf.mxu0
      %v2689 = vadd.f32 %v2460, %v2688
      %v2690 = vpop.f32.mrf.mxu0
      %v2691 = vpop.f32.mrf.mxu0
      %v2692 = vadd.f32 %v2460, %v2691
      %v2693 = vpop.f32.mrf.mxu0
      %2694 = vmatprep.mubr.bf16.mxu0 %v2388
      %2695 = vmatmul.mubr.bf16.gmra.mxu0 %v2387
      %v2696 = vpop.f32.mrf.mxu0
      %v2697 = vadd.f32 %v2460, %v2696
      %v2698 = vpop.f32.mrf.mxu0
      %v2699 = vpop.f32.mrf.mxu0
      %v2700 = vpop.f32.mrf.mxu0
      %2701 = vdwg.mxu0
      %2702 = vmatprep.subr.bf16.mxu0 0
      %2703 = vmatpush1.bf16.msra.mxu0 %v2613
      %2704 = vmatprep.subr.bf16.mxu0 0
      %2705 = vmatpush1.bf16.msra.mxu0 %v2612
      %2706 = vmatprep.subr.bf16.mxu0 0
      %2707 = vmatpush1.bf16.msra.mxu0 %v2611
      %2708 = vmatprep.subr.bf16.mxu0 0
      %2709 = vmatpush1.bf16.msra.mxu0 %v2610
      %2710 = vmatprep.subr.bf16.mxu0 0
      %2711 = vmatpush1.bf16.msra.mxu0 %v2609
      %2712 = vmatprep.subr.bf16.mxu0 0
      %2713 = vmatpush1.bf16.msra.mxu0 %v2608
      %2714 = vmatprep.subr.bf16.mxu0 0
      %2715 = vmatpush1.bf16.msra.mxu0 %v2607
      %2716 = vmatprep.subr.bf16.mxu0 0
      %2717 = vmatpush1.bf16.msra.mxu0 %v2606
      %2718 = vmatprep.subr.bf16.mxu0 0
      %2719 = vmatpush2.bf16.msra.mxu0 %v2621
      %2720 = vmatprep.subr.bf16.mxu0 0
      %2721 = vmatpush2.bf16.msra.mxu0 %v2620
      %2722 = vmatprep.subr.bf16.mxu0 0
      %2723 = vmatpush2.bf16.msra.mxu0 %v2619
      %2724 = vmatprep.subr.bf16.mxu0 0
      %2725 = vmatpush2.bf16.msra.mxu0 %v2618
      %2726 = vmatprep.subr.bf16.mxu0 0
      %2727 = vmatpush2.bf16.msra.mxu0 %v2617
      %2728 = vmatprep.subr.bf16.mxu0 0
      %2729 = vmatpush2.bf16.msra.mxu0 %v2616
      %2730 = vmatprep.subr.bf16.mxu0 0
      %2731 = vmatpush2.bf16.msra.mxu0 %v2615
      %2732 = vmatprep.subr.bf16.mxu0 0
      %2733 = vmatpush2.bf16.msra.mxu0 %v2614
      %2734 = vmatprep.mubr.bf16.mxu0 %v2386
      %2735 = vmatmul.mubr.bf16.gmra.mxu0 %v2385
      %v2736 = vpop.f32.mrf.mxu0
      %v2737 = vadd.f32 %v2689, %v2736
      %v2738 = vpop.f32.mrf.mxu0
      %v2739 = vpop.f32.mrf.mxu0
      %v2740 = vadd.f32 %v2692, %v2739
      %v2741 = vpop.f32.mrf.mxu0
      %2742 = vmatprep.mubr.bf16.mxu0 %v2390
      %2743 = vmatmul.mubr.bf16.gmra.mxu0 %v2389
      %v2744 = vpop.f32.mrf.mxu0
      %v2745 = vadd.f32 %v2697, %v2744
      %v2746 = vpop.f32.mrf.mxu0
      %v2747 = vpop.f32.mrf.mxu0
      %v2748 = vpop.f32.mrf.mxu0
      %2749 = vdwg.mxu0
      %v2750 = vadd.f32 %v1899, %v2737
      %v2751 = vadd.f32 %v1900, %v2740
      %v2752 = vadd.f32 %v1901, %v2745
      %v2753 = vpack.c.bf16 %v2751, %v2750
      %v2754 = vpack.c.bf16 %v2752, %v2752
      %v2757 = vunpack.c.l.b16 %v2753
      %v2758 = vunpack.c.h.b16 %v2753
      %v2759 = vunpack.c.l.b16 %v2754
      %v2760 = vpack.c.b16 %v2757, %v2757
      %v2761 = vpack.c.b16 %v2758, %v2758
      %v2762 = vpack.c.b16 %v2759, %v2759
      %2766 = vst [vmem:[%s440] sm:$0xf] %v2760
      %2767 = vst [vmem:[%s440 + $0x4] sm:$0xf] %v2761
      %vm2768 = vcmask 1040384
      %vm2769 = vsmask.f32 256
      %vm2770 = vmand %vm2768, %vm2769
      %v2771 = vld [vmem:[%s440 + $0x8] sm:$0x1]
      %v2772 = vsel %vm2770, %v2762, %v2771
      %2773 = vst [vmem:[%s440 + $0x8] sm:$0x1] %v2772
      %p2774 = scmp.lt.s32.totalorder %s24, 1
      %s2775 = scalar_select %p2774, %s24, 1
      %s2776 = smul.addr %s2775, 3
      %s2777 = smul.addr %s2776, 4
      %s2778 = scalar_lea.vmem %s13, %s2777
      // Predicated region
      $region73: #{_lambda_.5} parent=71 // pred_check
        %p2779 = pneg %p320
      $region74: #{_lambda_.5} parent=71 // pred_check_branch
        %2781 = sbr.rel (%p2779) target = $region76
      $region75: #{_lambda_.5} parent=71 // pred_region
        _
      $region76: #{_lambda_.5} parent=71 // pred_fallthru
        _
    $region72: #{_lambda_.5} parent=5 // pred_fallthru
      _
    %p2782 = scmp.le.s32.totalorder 2, %s19
    // Predicated region
    $region77: #{_lambda_.5} parent=5 // pred_check
      %p2783 = pneg %p2782
    $region78: #{_lambda_.5} parent=5 // pred_check_branch
      %2785 = sbr.rel (%p2783) target = $region80
    $region79: #{_lambda_.5} parent=5 // pred_region
      %s2786 = ssub.s32 %s19, 2
      // Predicated region
      $region81: #{_lambda_.5} parent=79 // pred_check
        %p2787 = pneg %p326
      $region82: #{_lambda_.5} parent=79 // pred_check_branch
        %2789 = sbr.rel (%p2787) target = $region84
      $region83: #{_lambda_.5} parent=79 // pred_region
        %p2790 = scmp.lt.s32.totalorder %s25, 1
        %s2791 = scalar_select %p2790, %s25, 1
        %s2792 = smul.addr %s2791, 3
        %s2793 = smul.addr %s2792, 4
        %s2794 = scalar_lea.vmem %s13, %s2793
      $region84: #{_lambda_.5} parent=79 // pred_fallthru
        _
    $region80: #{_lambda_.5} parent=5 // pred_fallthru
      _
  $region6: #{_lambda_.5} parent=0 // loop_footer
    %s23 = sadd.s32 1, %s19
  $region7: #{_lambda_.5} parent=0 // loop_footer_branch
    %18 = sbr.rel target = $region3
  $region8: #{_lambda_.5} parent=0 // loop_exit
    _

</llo_original>
